<compile_context>
chip_gen: v7x
topology: tpu7x:2x2x1
jax: 0.10.0
libtpu: 0.0.40
codegen_flags: <defaults>
</compile_context>

<pallas_src>
import math
import numpy as np
import jax
import jax.numpy as jnp
from jax import lax
from jax.experimental import pallas as pl
from jax.experimental.pallas import tpu as pltpu

# ---------------- static model configuration ----------------------------------------
B = 2                 # batch
L = 8                 # sequence length
F = 16                # fea_size (embed dim)
K = 3                 # conv kernel_size ('same' padding)
NUM_HEADS = 4         # num_head
HD = F // NUM_HEADS   # head dim
H = 16                # LSTM hidden_size (bidirectional -> 2H features)
MLP_HIDDEN = 32       # Mlp_hidden_sizes = [32]
OUT = 4               # output_size
PAD_L = (K - 1) // 2
PAD_R = (K - 1) - PAD_L
EPS = 1e-5            # LayerNorm eps (PyTorch default)

BL = B * L            # stacked rows processed in one kernel call
G8 = 8 * H            # 128: both directions' gate width
NH_BL = NUM_HEADS * BL

for _v in (B, L, BL, HD, H):
    assert _v & (_v - 1) == 0, "shift-based index math assumes powers of two"
LOG2_L = L.bit_length() - 1
LOG2_B = B.bit_length() - 1
LOG2_BL = BL.bit_length() - 1
LOG2_HD = HD.bit_length() - 1
LOG2_H = H.bit_length() - 1

# ---- single packed-parameter array: (W_ROWS, 128) ------------------------------------
R_WIH = 0                       # rows   0: 16  LSTM w_ih, gate-interleaved lanes
R_WHH = R_WIH + F               # rows  16: 48  LSTM w_hh, block structured
R_W2 = R_WHH + 2 * H            # rows  48: 80  MLP W2 (lanes 0:OUT used)
R_WQKV = R_W2 + MLP_HIDDEN      # rows  80: 96  [Wq*scale | Wk | Wv]   (lanes 0:3F)
R_CONV = R_WQKV + F             # rows  96:144  conv taps t-1 / t / t+1 (lanes 0:F each)
R_WO = R_CONV + K * F           # rows 144:160  attention out_proj      (lanes 0:F)
R_W1 = R_WO + F                 # rows 160:192  MLP W1                  (lanes 0:MLP_HIDDEN)
R_BLSTM = R_W1 + 2 * H          # row 192  LSTM bias (bih+bhh), gate-interleaved
R_B2 = R_BLSTM + 1              # row 193  MLP b2 (lanes 0:OUT)
R_BQKV = R_B2 + 1               # row 194  qkv bias (q pre-scaled)
R_BCONV = R_BQKV + 1            # row 195  conv bias
R_BO = R_BCONV + 1              # row 196  out_proj bias
R_LNG = R_BO + 1                # row 197  LayerNorm gamma
R_LNB = R_LNG + 1               # row 198  LayerNorm beta
R_B1 = R_LNB + 1                # row 199  MLP b1
W_ROWS = R_B1 + 1               # 200 rows total (multiple of 8)


def _sigmoid(x):                # reference only
    return 1.0 / (1.0 + jnp.exp(-x))


def _dot(a, b):
    return jnp.dot(a, b, preferred_element_type=jnp.float32)


def _dot_t(a, b):  # contract last dims: (m,d) x (n,d) -> (m,n)
    return lax.dot_general(a, b, (((1,), (1,)), ((), ())),
                           preferred_element_type=jnp.float32)


# ---------------------------------- Pallas kernel ------------------------------------
def seqmodel_kernel(x_ref, w_ref, out_ref):
    x = x_ref[...]                                              # (BL, F): [b0 t0..t7, b1 t0..t7]

    # ---- Conv1d(F->F, K=3, 'same') + ReLU + residual ---------------------------------
    # x[t-1] / x[t+1] via constant shift matmuls; batch-boundary rows zeroed for free.
    r = lax.broadcasted_iota(jnp.int32, (BL, BL), 0)
    c = lax.broadcasted_iota(jnp.int32, (BL, BL), 1)
    t_r = r & (L - 1)
    shift_prev = ((c == r - 1) & (t_r != 0)).astype(jnp.float32)
    shift_next = ((c == r + 1) & (t_r != L - 1)).astype(jnp.float32)
    x_prev = _dot(shift_prev, x)
    x_next = _dot(shift_next, x)

    conv = (_dot(x_prev, w_ref[R_CONV + 0 * F:R_CONV + 1 * F, 0:F])
            + _dot(x, w_ref[R_CONV + 1 * F:R_CONV + 2 * F, 0:F])
            + _dot(x_next, w_ref[R_CONV + 2 * F:R_CONV + 3 * F, 0:F])
            + w_ref[R_BCONV:R_BCONV + 1, 0:F])
    x1 = x + jnp.maximum(conv, 0.0)                             # (BL, F)

    # ---- MultiheadAttention: fused QKV, all heads batched on the sublane axis --------
    qkv = (_dot(x1, w_ref[R_WQKV:R_WQKV + F, 0:3 * F])
           + w_ref[R_BQKV:R_BQKV + 1, 0:3 * F])                 # (BL, 3F); q pre-scaled
    q, kmat, v = qkv[:, 0:F], qkv[:, F:2 * F], qkv[:, 2 * F:3 * F]

    rr = lax.broadcasted_iota(jnp.int32, (NH_BL, BL), 0)
    cc = lax.broadcasted_iota(jnp.int32, (NH_BL, BL), 1)
    tok = rr & (BL - 1)                                         # token index of stacked row
    rep = (cc == tok).astype(jnp.float32)                       # (64,16) replicate tokens/head
    bias = jnp.where((tok >> LOG2_L) == (cc >> LOG2_L), 0.0, -1e30)  # block-diag batch mask

    hrow = lax.broadcasted_iota(jnp.int32, (NH_BL, F), 0) >> LOG2_BL
    hcol = lax.broadcasted_iota(jnp.int32, (NH_BL, F), 1) >> LOG2_HD
    head_mask = (hrow == hcol).astype(jnp.float32)              # (64,16) head lane mask

    r2 = lax.broadcasted_iota(jnp.int32, (BL, NH_BL), 0)
    c2 = lax.broadcasted_iota(jnp.int32, (BL, NH_BL), 1)
    sel = (r2 == (c2 & (BL - 1))).astype(jnp.float32)           # (16,64) fold heads back

    q_stack = _dot(rep, q) * head_mask                          # (64,16)
    sc = _dot_t(q_stack, kmat) + bias                           # (64,16) all-head scores
    sc = sc - jnp.max(sc, axis=-1, keepdims=True)               # ONE softmax for all heads
    p = jnp.exp(sc)
    # TODO(synk): pl.reciprocal(approx=True) rides the EUP but risks the 1e-4 reference check.
    p = p * pl.reciprocal(jnp.sum(p, axis=-1, keepdims=True), approx=False)
    ctx = _dot(sel, _dot(p, v) * head_mask)                     # (BL, F) = concat of heads

    attn = _dot(ctx, w_ref[R_WO:R_WO + F, 0:F]) + w_ref[R_BO:R_BO + 1, 0:F]

    # ---- x2 = x1 + LayerNorm(attn) ----------------------------------------------------
    mu = jnp.mean(attn, axis=-1, keepdims=True)
    var = jnp.mean(jnp.square(attn - mu), axis=-1, keepdims=True)
    ln = ((attn - mu) * lax.rsqrt(var + EPS) * w_ref[R_LNG:R_LNG + 1, 0:F]
          + w_ref[R_LNB:R_LNB + 1, 0:F])
    x2 = x1 + ln                                                # (BL, F)

    # ---- BiLSTM (both directions fused) + max-pool ------------------------------------
    w_ih = w_ref[R_WIH:R_WIH + F, :]                            # (F, 8H)  gate-interleaved
    w_hh = w_ref[R_WHH:R_WHH + 2 * H, :]                        # (2H, 8H) block structured
    b_l = w_ref[R_BLSTM:R_BLSTM + 1, :]                         # (1, 8H)

    gx = _dot(x2, w_ih) + b_l                                   # input projection, hoisted

    # Rearrange gx to time-major interleaved rows (row = t*B + b) with the bwd-gate lanes
    # taken from time L-1-t, BEFORE the serial loop (two constant permutation matmuls).
    lane = lax.broadcasted_iota(jnp.int32, (BL, G8), 1)
    is_fwd_lane = ((lane >> LOG2_H) & 1) == 0                   # fwd half of each 2H gate block
    rp = lax.broadcasted_iota(jnp.int32, (BL, BL), 0)
    cp = lax.broadcasted_iota(jnp.int32, (BL, BL), 1)
    b_of = rp & (B - 1)
    t_of = rp >> LOG2_B
    p_fwd = (cp == b_of * L + t_of).astype(jnp.float32)
    p_bwd = (cp == b_of * L + (L - 1 - t_of)).astype(jnp.float32)
    gx2 = (_dot(p_fwd, jnp.where(is_fwd_lane, gx, 0.0))
           + _dot(p_bwd, jnp.where(is_fwd_lane, 0.0, gx)))      # (BL, 8H), row t*B + b

    lane_b = lax.broadcasted_iota(jnp.int32, (B, G8), 1)
    is_g_lane = (lane_b >= 4 * H) & (lane_b < 6 * H)            # cell-input (tanh) gate lanes
    pre_scale = jnp.where(is_g_lane, 1.0, 0.5)                  # sigmoid(x)=0.5*(tanh(x/2)+1)

    h_t = jnp.zeros((B, 2 * H), jnp.float32)                    # [h_fwd | h_bwd]
    c_t = jnp.zeros((B, 2 * H), jnp.float32)
    m_t = jnp.zeros((B, 2 * H), jnp.float32)                    # 0-init folds the final ReLU

    for t in range(L):                                          # static unroll; serial chain
        g = gx2[t * B:(t + 1) * B, :]                           # (B, 8H) static slice
        if t > 0:                                               # h_t == 0 at t == 0
            g = g + _dot(h_t, w_hh)                             # one matmul for BOTH directions
        u = jnp.tanh(g * pre_scale)                             # ONE EUP push for all gates
        gates = jnp.where(is_g_lane, u, 0.5 * u + 0.5)          # [i | f | g | o], each (B,2H)
        c_t = gates[:, 2 * H:4 * H] * c_t + gates[:, 0:2 * H] * gates[:, 4 * H:6 * H]
        h_t = gates[:, 6 * H:8 * H] * jnp.tanh(c_t)
        m_t = jnp.maximum(m_t, h_t)                             # AdaptiveMaxPool1d(1)

    # ---- MLP: Linear(2H->32) -> ReLU -> Linear(32->OUT), lane-dense (B,128) store ----
    h1 = jnp.maximum(
        _dot(m_t, w_ref[R_W1:R_W1 + 2 * H, 0:MLP_HIDDEN])
        + w_ref[R_B1:R_B1 + 1, 0:MLP_HIDDEN], 0.0)              # (B, MLP_HIDDEN)
    out_ref[...] = (_dot(h1, w_ref[R_W2:R_W2 + MLP_HIDDEN, :])
                    + w_ref[R_B2:R_B2 + 1, :])                  # lane-dense (B, 128) store


# ---------------------------------- parameter packing (host, numpy, ONCE) ------------
def pack_params(params):
    (conv_w_t, conv_b, wq, wk, wv, bq, bk, bv, wo, bo, lng, lnb,
     wih_f, whh_f, bih_f, bhh_f, wih_r, whh_r, bih_r, bhh_r,
     w1, b1, w2, b2) = [np.asarray(p, np.float32) for p in params]

    W = np.zeros((W_ROWS, G8), np.float32)

    # LSTM, gate-interleaved lanes: [i_f|i_b | f_f|f_b | g_f|g_b | o_f|o_b]
    bl_f = (bih_f + bhh_f)[0]
    bl_r = (bih_r + bhh_r)[0]
    for g in range(4):
        lo_f, lo_b = (2 * g) * H, (2 * g + 1) * H
        W[R_WIH:R_WIH + F, lo_f:lo_f + H] = wih_f[:, g * H:(g + 1) * H]
        W[R_WIH:R_WIH + F, lo_b:lo_b + H] = wih_r[:, g * H:(g + 1) * H]
        W[R_WHH:R_WHH + H, lo_f:lo_f + H] = whh_f[:, g * H:(g + 1) * H]
        W[R_WHH + H:R_WHH + 2 * H, lo_b:lo_b + H] = whh_r[:, g * H:(g + 1) * H]
        W[R_BLSTM, lo_f:lo_f + H] = bl_f[g * H:(g + 1) * H]
        W[R_BLSTM, lo_b:lo_b + H] = bl_r[g * H:(g + 1) * H]

    # MLP layer 2, zero-padded to 128 lanes
    W[R_W2:R_W2 + MLP_HIDDEN, 0:OUT] = w2
    W[R_B2, 0:OUT] = b2[0]

    # fused QKV, attention scale folded into the Q part
    scale = 1.0 / math.sqrt(HD)
    W[R_WQKV:R_WQKV + F, 0:F] = wq * scale
    W[R_WQKV:R_WQKV + F, F:2 * F] = wk
    W[R_WQKV:R_WQKV + F, 2 * F:3 * F] = wv
    W[R_BQKV, 0:F] = bq[0] * scale
    W[R_BQKV, F:2 * F] = bk[0]
    W[R_BQKV, 2 * F:3 * F] = bv[0]

    # conv taps (t-1, t, t+1)
    for k in range(K):
        W[R_CONV + k * F:R_CONV + (k + 1) * F, 0:F] = conv_w_t[k]
    W[R_BCONV, 0:F] = conv_b[0]

    # attention out_proj, LayerNorm, MLP layer 1
    W[R_WO:R_WO + F, 0:F] = wo
    W[R_BO, 0:F] = bo[0]
    W[R_LNG, 0:F] = lng[0]
    W[R_LNB, 0:F] = lnb[0]
    W[R_W1:R_W1 + 2 * H, 0:MLP_HIDDEN] = w1
    W[R_B1, 0:MLP_HIDDEN] = b1[0]

    return jnp.asarray(W)                                       # single (200, 128) operand


# ---------------------------------- wrapper ------------------------------------------
def seqmodel_forward(x, w_packed):
    x2d = x.reshape(BL, F)                                      # stack batch on the sublane axis
    out = pl.pallas_call(
        seqmodel_kernel,
        out_shape=jax.ShapeDtypeStruct((B, G8), jnp.float32),
    )(x2d, w_packed)
    return out[:, :OUT]                                         # (B, OUT)


# ------------------------- deterministic parameter initialization --------------------
def init_params(key):
    ks = jax.random.split(key, 18)

    def rnd(k, shape, scale=0.15):
        return jax.random.uniform(k, shape, jnp.float32, -1.0, 1.0) * scale

    # Conv1d: torch weight (O, I, K), bias (O,)  ->  pass as (K, I, O) and (1, O)
    conv_w = rnd(ks[0], (F, F, K))
    conv_w_t = jnp.transpose(conv_w, (2, 1, 0))
    conv_b = rnd(ks[1], (1, F))
    # MultiheadAttention: in_proj_weight (3F, F), in_proj_bias (3F,), out_proj (F, F)+(F,)
    in_w = rnd(ks[2], (3 * F, F))
    in_b = rnd(ks[3], (1, 3 * F))
    wq, wk, wv = in_w[0:F].T, in_w[F:2 * F].T, in_w[2 * F:3 * F].T
    bq, bk, bv = in_b[:, 0:F], in_b[:, F:2 * F], in_b[:, 2 * F:3 * F]
    wo = rnd(ks[4], (F, F)).T
    bo = rnd(ks[5], (1, F))
    # LayerNorm (PyTorch default init)
    lng = jnp.ones((1, F), jnp.float32)
    lnb = jnp.zeros((1, F), jnp.float32)
    # BiLSTM layer 0: torch weight_ih (4H, F), weight_hh (4H, H), biases (4H,)
    wih_f = rnd(ks[6], (4 * H, F)).T
    whh_f = rnd(ks[7], (4 * H, H)).T
    bih_f = rnd(ks[8], (1, 4 * H))
    bhh_f = rnd(ks[9], (1, 4 * H))
    wih_r = rnd(ks[10], (4 * H, F)).T
    whh_r = rnd(ks[11], (4 * H, H)).T
    bih_r = rnd(ks[12], (1, 4 * H))
    bhh_r = rnd(ks[13], (1, 4 * H))
    # MLP: Linear(2H, MLP_HIDDEN) -> ReLU -> [Dropout] -> Linear(MLP_HIDDEN, OUT)
    w1 = rnd(ks[14], (MLP_HIDDEN, 2 * H)).T
    b1 = rnd(ks[15], (1, MLP_HIDDEN))
    w2 = rnd(ks[16], (OUT, MLP_HIDDEN)).T
    b2 = rnd(ks[17], (1, OUT))
    return (conv_w_t, conv_b, wq, wk, wv, bq, bk, bv, wo, bo, lng, lnb,
            wih_f, whh_f, bih_f, bhh_f, wih_r, whh_r, bih_r, bhh_r,
            w1, b1, w2, b2)


# ------------------------------ pure-JAX reference -----------------------------------
def ref_forward(x, params):
    (conv_w_t, conv_b, wq, wk, wv, bq, bk, bv, wo, bo, lng, lnb,
     wih_f, whh_f, bih_f, bhh_f, wih_r, whh_r, bih_r, bhh_r,
     w1, b1, w2, b2) = params
    xpad = jnp.pad(x, ((0, 0), (PAD_L, PAD_R), (0, 0)))
    outs = []
    for b in range(B):
        xp = xpad[b]
        xb = xp[PAD_L:PAD_L + L]
        conv = jnp.broadcast_to(conv_b, (L, F))
        for k in range(K):
            conv = conv + xp[k:k + L] @ conv_w_t[k]
        x1 = xb + jnp.maximum(conv, 0.0)
        q = x1 @ wq + bq
        kk = x1 @ wk + bk
        v = x1 @ wv + bv
        attn = jnp.broadcast_to(bo, (L, F))
        for h in range(NUM_HEADS):
            s, e = h * HD, (h + 1) * HD
            sc = (q[:, s:e] / math.sqrt(HD)) @ kk[:, s:e].T
            sc = sc - jnp.max(sc, axis=-1, keepdims=True)
            p = jnp.exp(sc)
            p = p / jnp.sum(p, axis=-1, keepdims=True)
            attn = attn + (p @ v[:, s:e]) @ wo[s:e]
        mu = attn.mean(-1, keepdims=True)
        var = ((attn - mu) ** 2).mean(-1, keepdims=True)
        x2 = x1 + (attn - mu) / jnp.sqrt(var + EPS) * lng + lnb

        def run(wih, whh, bias, rev):
            h_t = jnp.zeros((1, H))
            c_t = jnp.zeros((1, H))
            m = jnp.full((1, H), -jnp.inf)
            for t in (range(L - 1, -1, -1) if rev else range(L)):
                g = x2[t:t + 1] @ wih + h_t @ whh + bias
                i_g = _sigmoid(g[:, :H])
                f_g = _sigmoid(g[:, H:2 * H])
                g_g = jnp.tanh(g[:, 2 * H:3 * H])
                o_g = _sigmoid(g[:, 3 * H:])
                c_t = f_g * c_t + i_g * g_g
                h_t = o_g * jnp.tanh(c_t)
                m = jnp.maximum(m, h_t)
            return m

        mf = jnp.maximum(run(wih_f, whh_f, bih_f + bhh_f, False), 0.0)
        mb = jnp.maximum(run(wih_r, whh_r, bih_r + bhh_r, True), 0.0)
        pooled = jnp.concatenate([mf, mb], axis=-1)
        h1 = jnp.maximum(pooled @ w1 + b1, 0.0)
        outs.append(h1 @ w2 + b2)
    return jnp.concatenate(outs, axis=0)


if __name__ == "__main__":
    key = jax.random.PRNGKey(0)
    kx, kp = jax.random.split(key)
    x = jax.random.normal(kx, (B, L, F), jnp.float32)   # (batch, seq_len, fea_size)
    params = init_params(kp)

    w_packed = pack_params(params)                      # packed ONCE, host-side (not per call)

    out = seqmodel_forward(x, w_packed)
    jax.block_until_ready(out)

    ref = ref_forward(x, params)
    np.testing.assert_allclose(np.asarray(out), np.asarray(ref), rtol=1e-4, atol=1e-4)
    print("KERNEL_OK")
</pallas_src>

<mosaic_0001>
module attributes {stable_mosaic.version = 11 : i64} {
  func.func @seqmodel_kernel(%arg0: memref<16x16xf32, #tpu.memory_space<vmem>>, %arg1: memref<200x128xf32, #tpu.memory_space<vmem>>, %arg2: memref<2x128xf32, #tpu.memory_space<vmem>>) attributes {dimension_semantics = [], scalar_prefetch = 0 : i64, scratch_operands = 0 : i64, tpu.core_type = #tpu.core_type<tc>} {
    %c0 = arith.constant 0 : index
    %c0_0 = arith.constant 0 : index
    %0 = vector.load %arg0[%c0, %c0_0] : memref<16x16xf32, #tpu.memory_space<vmem>>, vector<16x16xf32>
    %1 = tpu.iota {dimensions = array<i32: 0>} : vector<16x16xi32>
    %2 = tpu.iota {dimensions = array<i32: 1>} : vector<16x16xi32>
    %c7_i32 = arith.constant 7 : i32
    %3 = vector.broadcast %c7_i32 : i32 to vector<16x16xi32>
    %4 = arith.andi %1, %3 : vector<16x16xi32>
    %c1_i32 = arith.constant 1 : i32
    %5 = vector.broadcast %c1_i32 : i32 to vector<16x16xi32>
    %6 = arith.subi %1, %5 : vector<16x16xi32>
    %7 = arith.cmpi eq, %2, %6 : vector<16x16xi32>
    %c0_i32 = arith.constant 0 : i32
    %8 = vector.broadcast %c0_i32 : i32 to vector<16x16xi32>
    %9 = arith.cmpi ne, %4, %8 : vector<16x16xi32>
    %10 = arith.andi %7, %9 : vector<16x16xi1>
    %11 = arith.extui %10 : vector<16x16xi1> to vector<16x16xi32>
    %12 = arith.sitofp %11 : vector<16x16xi32> to vector<16x16xf32>
    %c1_i32_1 = arith.constant 1 : i32
    %13 = vector.broadcast %c1_i32_1 : i32 to vector<16x16xi32>
    %14 = arith.addi %1, %13 : vector<16x16xi32>
    %15 = arith.cmpi eq, %2, %14 : vector<16x16xi32>
    %c7_i32_2 = arith.constant 7 : i32
    %16 = vector.broadcast %c7_i32_2 : i32 to vector<16x16xi32>
    %17 = arith.cmpi ne, %4, %16 : vector<16x16xi32>
    %18 = arith.andi %15, %17 : vector<16x16xi1>
    %19 = arith.extui %18 : vector<16x16xi1> to vector<16x16xi32>
    %20 = arith.sitofp %19 : vector<16x16xi32> to vector<16x16xf32>
    %cst = arith.constant dense<0.000000e+00> : vector<16x16xf32>
    %21 = tpu.matmul %12, %0, %cst {dimension_numbers = #tpu.dot_dimension_numbers<[1], [0], [0], [1], [0, 0, 1, 1], [], []>} : vector<16x16xf32>, vector<16x16xf32>, vector<16x16xf32> -> vector<16x16xf32>
    %cst_3 = arith.constant dense<0.000000e+00> : vector<16x16xf32>
    %22 = tpu.matmul %20, %0, %cst_3 {dimension_numbers = #tpu.dot_dimension_numbers<[1], [0], [0], [1], [0, 0, 1, 1], [], []>} : vector<16x16xf32>, vector<16x16xf32>, vector<16x16xf32> -> vector<16x16xf32>
    %c96 = arith.constant 96 : index
    %c0_4 = arith.constant 0 : index
    %23 = vector.load %arg1[%c96, %c0_4] : memref<200x128xf32, #tpu.memory_space<vmem>>, vector<16x16xf32>
    %cst_5 = arith.constant dense<0.000000e+00> : vector<16x16xf32>
    %24 = tpu.matmul %21, %23, %cst_5 {dimension_numbers = #tpu.dot_dimension_numbers<[1], [0], [0], [1], [0, 0, 1, 1], [], []>} : vector<16x16xf32>, vector<16x16xf32>, vector<16x16xf32> -> vector<16x16xf32>
    %c112 = arith.constant 112 : index
    %c0_6 = arith.constant 0 : index
    %25 = vector.load %arg1[%c112, %c0_6] : memref<200x128xf32, #tpu.memory_space<vmem>>, vector<16x16xf32>
    %cst_7 = arith.constant dense<0.000000e+00> : vector<16x16xf32>
    %26 = tpu.matmul %0, %25, %cst_7 {dimension_numbers = #tpu.dot_dimension_numbers<[1], [0], [0], [1], [0, 0, 1, 1], [], []>} : vector<16x16xf32>, vector<16x16xf32>, vector<16x16xf32> -> vector<16x16xf32>
    %27 = arith.addf %24, %26 : vector<16x16xf32>
    %c128 = arith.constant 128 : index
    %c0_8 = arith.constant 0 : index
    %28 = vector.load %arg1[%c128, %c0_8] : memref<200x128xf32, #tpu.memory_space<vmem>>, vector<16x16xf32>
    %cst_9 = arith.constant dense<0.000000e+00> : vector<16x16xf32>
    %29 = tpu.matmul %22, %28, %cst_9 {dimension_numbers = #tpu.dot_dimension_numbers<[1], [0], [0], [1], [0, 0, 1, 1], [], []>} : vector<16x16xf32>, vector<16x16xf32>, vector<16x16xf32> -> vector<16x16xf32>
    %30 = arith.addf %27, %29 : vector<16x16xf32>
    %c195 = arith.constant 195 : index
    %c0_10 = arith.constant 0 : index
    %31 = vector.load %arg1[%c195, %c0_10] : memref<200x128xf32, #tpu.memory_space<vmem>>, vector<1x16xf32>
    %32 = vector.broadcast %31 : vector<1x16xf32> to vector<16x16xf32>
    %33 = arith.addf %30, %32 : vector<16x16xf32>
    %cst_11 = arith.constant 0.000000e+00 : f32
    %34 = vector.broadcast %cst_11 : f32 to vector<16x16xf32>
    %35 = arith.maximumf %33, %34 : vector<16x16xf32>
    %36 = arith.addf %0, %35 : vector<16x16xf32>
    %c80 = arith.constant 80 : index
    %c0_12 = arith.constant 0 : index
    %37 = vector.load %arg1[%c80, %c0_12] : memref<200x128xf32, #tpu.memory_space<vmem>>, vector<16x48xf32>
    %cst_13 = arith.constant dense<0.000000e+00> : vector<16x48xf32>
    %38 = tpu.matmul %36, %37, %cst_13 {dimension_numbers = #tpu.dot_dimension_numbers<[1], [0], [0], [1], [0, 0, 1, 1], [], []>} : vector<16x16xf32>, vector<16x48xf32>, vector<16x48xf32> -> vector<16x48xf32>
    %c194 = arith.constant 194 : index
    %c0_14 = arith.constant 0 : index
    %39 = vector.load %arg1[%c194, %c0_14] : memref<200x128xf32, #tpu.memory_space<vmem>>, vector<1x48xf32>
    %40 = vector.broadcast %39 : vector<1x48xf32> to vector<16x48xf32>
    %41 = arith.addf %38, %40 : vector<16x48xf32>
    %42 = vector.extract_strided_slice %41 {offsets = [0, 0], sizes = [16, 16], strides = [1, 1]} : vector<16x48xf32> to vector<16x16xf32>
    %43 = vector.extract_strided_slice %41 {offsets = [0, 16], sizes = [16, 16], strides = [1, 1]} : vector<16x48xf32> to vector<16x16xf32>
    %44 = vector.extract_strided_slice %41 {offsets = [0, 32], sizes = [16, 16], strides = [1, 1]} : vector<16x48xf32> to vector<16x16xf32>
    %45 = tpu.iota {dimensions = array<i32: 0>} : vector<64x16xi32>
    %46 = tpu.iota {dimensions = array<i32: 1>} : vector<64x16xi32>
    %c15_i32 = arith.constant 15 : i32
    %47 = vector.broadcast %c15_i32 : i32 to vector<64x16xi32>
    %48 = arith.andi %45, %47 : vector<64x16xi32>
    %49 = arith.cmpi eq, %46, %48 : vector<64x16xi32>
    %50 = arith.extui %49 : vector<64x16xi1> to vector<64x16xi32>
    %51 = arith.sitofp %50 : vector<64x16xi32> to vector<64x16xf32>
    %c3_i32 = arith.constant 3 : i32
    %52 = vector.broadcast %c3_i32 : i32 to vector<64x16xi32>
    %53 = arith.shrsi %48, %52 : vector<64x16xi32>
    %c3_i32_15 = arith.constant 3 : i32
    %54 = vector.broadcast %c3_i32_15 : i32 to vector<64x16xi32>
    %55 = arith.shrsi %46, %54 : vector<64x16xi32>
    %56 = arith.cmpi eq, %53, %55 : vector<64x16xi32>
    %cst_16 = arith.constant 0.000000e+00 : f32
    %cst_17 = arith.constant -1.000000e+30 : f32
    %57 = vector.broadcast %cst_16 : f32 to vector<64x16xf32>
    %58 = vector.broadcast %cst_17 : f32 to vector<64x16xf32>
    %59 = arith.select %56, %57, %58 : vector<64x16xi1>, vector<64x16xf32>
    %60 = tpu.iota {dimensions = array<i32: 0>} : vector<64x16xi32>
    %c4_i32 = arith.constant 4 : i32
    %61 = vector.broadcast %c4_i32 : i32 to vector<64x16xi32>
    %62 = arith.shrsi %60, %61 : vector<64x16xi32>
    %63 = tpu.iota {dimensions = array<i32: 1>} : vector<64x16xi32>
    %c2_i32 = arith.constant 2 : i32
    %64 = vector.broadcast %c2_i32 : i32 to vector<64x16xi32>
    %65 = arith.shrsi %63, %64 : vector<64x16xi32>
    %66 = arith.cmpi eq, %62, %65 : vector<64x16xi32>
    %67 = arith.extui %66 : vector<64x16xi1> to vector<64x16xi32>
    %68 = arith.sitofp %67 : vector<64x16xi32> to vector<64x16xf32>
    %69 = tpu.iota {dimensions = array<i32: 0>} : vector<16x64xi32>
    %70 = tpu.iota {dimensions = array<i32: 1>} : vector<16x64xi32>
    %c15_i32_18 = arith.constant 15 : i32
    %71 = vector.broadcast %c15_i32_18 : i32 to vector<16x64xi32>
    %72 = arith.andi %70, %71 : vector<16x64xi32>
    %73 = arith.cmpi eq, %69, %72 : vector<16x64xi32>
    %74 = arith.extui %73 : vector<16x64xi1> to vector<16x64xi32>
    %75 = arith.sitofp %74 : vector<16x64xi32> to vector<16x64xf32>
    %cst_19 = arith.constant dense<0.000000e+00> : vector<64x16xf32>
    %76 = tpu.matmul %51, %42, %cst_19 {dimension_numbers = #tpu.dot_dimension_numbers<[1], [0], [0], [1], [0, 0, 1, 1], [], []>} : vector<64x16xf32>, vector<16x16xf32>, vector<64x16xf32> -> vector<64x16xf32>
    %77 = arith.mulf %76, %68 : vector<64x16xf32>
    %cst_20 = arith.constant dense<0.000000e+00> : vector<64x16xf32>
    %78 = tpu.matmul %77, %43, %cst_20 {dimension_numbers = #tpu.dot_dimension_numbers<[1], [1], [0], [0], [0, 0, 1, 0], [], []>} : vector<64x16xf32>, vector<16x16xf32>, vector<64x16xf32> -> vector<64x16xf32>
    %79 = arith.addf %78, %59 : vector<64x16xf32>
    %cst_21 = arith.constant dense<0xFF800000> : vector<64xf32>
    %80 = vector.multi_reduction <maximumf>, %79, %cst_21 [1] : vector<64x16xf32> to vector<64xf32>
    %81 = vector.shape_cast %80 : vector<64xf32> to vector<64x1xf32>
    %82 = vector.broadcast %81 : vector<64x1xf32> to vector<64x16xf32>
    %83 = arith.subf %79, %82 : vector<64x16xf32>
    %84 = math.exp %83 : vector<64x16xf32>
    %cst_22 = arith.constant dense<0.000000e+00> : vector<64xf32>
    %85 = vector.multi_reduction <add>, %84, %cst_22 [1] : vector<64x16xf32> to vector<64xf32>
    %86 = vector.shape_cast %85 : vector<64xf32> to vector<64x1xf32>
    %87 = tpu.reciprocal %86 : vector<64x1xf32> -> vector<64x1xf32>
    %88 = vector.broadcast %87 : vector<64x1xf32> to vector<64x16xf32>
    %89 = arith.mulf %84, %88 : vector<64x16xf32>
    %cst_23 = arith.constant dense<0.000000e+00> : vector<64x16xf32>
    %90 = tpu.matmul %89, %44, %cst_23 {dimension_numbers = #tpu.dot_dimension_numbers<[1], [0], [0], [1], [0, 0, 1, 1], [], []>} : vector<64x16xf32>, vector<16x16xf32>, vector<64x16xf32> -> vector<64x16xf32>
    %91 = arith.mulf %90, %68 : vector<64x16xf32>
    %cst_24 = arith.constant dense<0.000000e+00> : vector<16x16xf32>
    %92 = tpu.matmul %75, %91, %cst_24 {dimension_numbers = #tpu.dot_dimension_numbers<[1], [0], [0], [1], [0, 0, 1, 1], [], []>} : vector<16x64xf32>, vector<64x16xf32>, vector<16x16xf32> -> vector<16x16xf32>
    %c144 = arith.constant 144 : index
    %c0_25 = arith.constant 0 : index
    %93 = vector.load %arg1[%c144, %c0_25] : memref<200x128xf32, #tpu.memory_space<vmem>>, vector<16x16xf32>
    %cst_26 = arith.constant dense<0.000000e+00> : vector<16x16xf32>
    %94 = tpu.matmul %92, %93, %cst_26 {dimension_numbers = #tpu.dot_dimension_numbers<[1], [0], [0], [1], [0, 0, 1, 1], [], []>} : vector<16x16xf32>, vector<16x16xf32>, vector<16x16xf32> -> vector<16x16xf32>
    %c196 = arith.constant 196 : index
    %c0_27 = arith.constant 0 : index
    %95 = vector.load %arg1[%c196, %c0_27] : memref<200x128xf32, #tpu.memory_space<vmem>>, vector<1x16xf32>
    %96 = vector.broadcast %95 : vector<1x16xf32> to vector<16x16xf32>
    %97 = arith.addf %94, %96 : vector<16x16xf32>
    %cst_28 = arith.constant dense<0.000000e+00> : vector<16xf32>
    %98 = vector.multi_reduction <add>, %97, %cst_28 [1] : vector<16x16xf32> to vector<16xf32>
    %99 = vector.shape_cast %98 : vector<16xf32> to vector<16x1xf32>
    %cst_29 = arith.constant 1.600000e+01 : f32
    %100 = vector.broadcast %cst_29 : f32 to vector<16x1xf32>
    %101 = arith.divf %99, %100 : vector<16x1xf32>
    %102 = vector.broadcast %101 : vector<16x1xf32> to vector<16x16xf32>
    %103 = arith.subf %97, %102 : vector<16x16xf32>
    %104 = arith.mulf %103, %103 : vector<16x16xf32>
    %cst_30 = arith.constant dense<0.000000e+00> : vector<16xf32>
    %105 = vector.multi_reduction <add>, %104, %cst_30 [1] : vector<16x16xf32> to vector<16xf32>
    %106 = vector.shape_cast %105 : vector<16xf32> to vector<16x1xf32>
    %cst_31 = arith.constant 1.600000e+01 : f32
    %107 = vector.broadcast %cst_31 : f32 to vector<16x1xf32>
    %108 = arith.divf %106, %107 : vector<16x1xf32>
    %109 = vector.broadcast %101 : vector<16x1xf32> to vector<16x16xf32>
    %110 = arith.subf %97, %109 : vector<16x16xf32>
    %cst_32 = arith.constant 9.99999974E-6 : f32
    %111 = vector.broadcast %cst_32 : f32 to vector<16x1xf32>
    %112 = arith.addf %108, %111 : vector<16x1xf32>
    %113 = math.rsqrt %112 : vector<16x1xf32>
    %114 = vector.broadcast %113 : vector<16x1xf32> to vector<16x16xf32>
    %115 = arith.mulf %110, %114 : vector<16x16xf32>
    %c197 = arith.constant 197 : index
    %c0_33 = arith.constant 0 : index
    %116 = vector.load %arg1[%c197, %c0_33] : memref<200x128xf32, #tpu.memory_space<vmem>>, vector<1x16xf32>
    %117 = vector.broadcast %116 : vector<1x16xf32> to vector<16x16xf32>
    %118 = arith.mulf %115, %117 : vector<16x16xf32>
    %c198 = arith.constant 198 : index
    %c0_34 = arith.constant 0 : index
    %119 = vector.load %arg1[%c198, %c0_34] : memref<200x128xf32, #tpu.memory_space<vmem>>, vector<1x16xf32>
    %120 = vector.broadcast %119 : vector<1x16xf32> to vector<16x16xf32>
    %121 = arith.addf %118, %120 : vector<16x16xf32>
    %122 = arith.addf %36, %121 : vector<16x16xf32>
    %c0_35 = arith.constant 0 : index
    %c0_36 = arith.constant 0 : index
    %123 = vector.load %arg1[%c0_35, %c0_36] : memref<200x128xf32, #tpu.memory_space<vmem>>, vector<16x128xf32>
    %c16 = arith.constant 16 : index
    %c0_37 = arith.constant 0 : index
    %124 = vector.load %arg1[%c16, %c0_37] : memref<200x128xf32, #tpu.memory_space<vmem>>, vector<32x128xf32>
    %c192 = arith.constant 192 : index
    %c0_38 = arith.constant 0 : index
    %125 = vector.load %arg1[%c192, %c0_38] : memref<200x128xf32, #tpu.memory_space<vmem>>, vector<1x128xf32>
    %cst_39 = arith.constant dense<0.000000e+00> : vector<16x128xf32>
    %126 = tpu.matmul %122, %123, %cst_39 {dimension_numbers = #tpu.dot_dimension_numbers<[1], [0], [0], [1], [0, 0, 1, 1], [], []>} : vector<16x16xf32>, vector<16x128xf32>, vector<16x128xf32> -> vector<16x128xf32>
    %127 = vector.broadcast %125 : vector<1x128xf32> to vector<16x128xf32>
    %128 = arith.addf %126, %127 : vector<16x128xf32>
    %129 = tpu.iota {dimensions = array<i32: 1>} : vector<16x128xi32>
    %c4_i32_40 = arith.constant 4 : i32
    %130 = vector.broadcast %c4_i32_40 : i32 to vector<16x128xi32>
    %131 = arith.shrsi %129, %130 : vector<16x128xi32>
    %c1_i32_41 = arith.constant 1 : i32
    %132 = vector.broadcast %c1_i32_41 : i32 to vector<16x128xi32>
    %133 = arith.andi %131, %132 : vector<16x128xi32>
    %c0_i32_42 = arith.constant 0 : i32
    %134 = vector.broadcast %c0_i32_42 : i32 to vector<16x128xi32>
    %135 = arith.cmpi eq, %133, %134 : vector<16x128xi32>
    %136 = tpu.iota {dimensions = array<i32: 0>} : vector<16x16xi32>
    %137 = tpu.iota {dimensions = array<i32: 1>} : vector<16x16xi32>
    %c1_i32_43 = arith.constant 1 : i32
    %138 = vector.broadcast %c1_i32_43 : i32 to vector<16x16xi32>
    %139 = arith.andi %136, %138 : vector<16x16xi32>
    %c1_i32_44 = arith.constant 1 : i32
    %140 = vector.broadcast %c1_i32_44 : i32 to vector<16x16xi32>
    %141 = arith.shrsi %136, %140 : vector<16x16xi32>
    %c8_i32 = arith.constant 8 : i32
    %142 = vector.broadcast %c8_i32 : i32 to vector<16x16xi32>
    %143 = arith.muli %139, %142 : vector<16x16xi32>
    %144 = arith.addi %143, %141 : vector<16x16xi32>
    %145 = arith.cmpi eq, %137, %144 : vector<16x16xi32>
    %146 = arith.extui %145 : vector<16x16xi1> to vector<16x16xi32>
    %147 = arith.sitofp %146 : vector<16x16xi32> to vector<16x16xf32>
    %c8_i32_45 = arith.constant 8 : i32
    %148 = vector.broadcast %c8_i32_45 : i32 to vector<16x16xi32>
    %149 = arith.muli %139, %148 : vector<16x16xi32>
    %c7_i32_46 = arith.constant 7 : i32
    %150 = vector.broadcast %c7_i32_46 : i32 to vector<16x16xi32>
    %151 = arith.subi %150, %141 : vector<16x16xi32>
    %152 = arith.addi %149, %151 : vector<16x16xi32>
    %153 = arith.cmpi eq, %137, %152 : vector<16x16xi32>
    %154 = arith.extui %153 : vector<16x16xi1> to vector<16x16xi32>
    %155 = arith.sitofp %154 : vector<16x16xi32> to vector<16x16xf32>
    %cst_47 = arith.constant 0.000000e+00 : f32
    %156 = vector.broadcast %cst_47 : f32 to vector<16x128xf32>
    %157 = arith.select %135, %128, %156 : vector<16x128xi1>, vector<16x128xf32>
    %cst_48 = arith.constant dense<0.000000e+00> : vector<16x128xf32>
    %158 = tpu.matmul %147, %157, %cst_48 {dimension_numbers = #tpu.dot_dimension_numbers<[1], [0], [0], [1], [0, 0, 1, 1], [], []>} : vector<16x16xf32>, vector<16x128xf32>, vector<16x128xf32> -> vector<16x128xf32>
    %cst_49 = arith.constant 0.000000e+00 : f32
    %159 = vector.broadcast %cst_49 : f32 to vector<16x128xf32>
    %160 = arith.select %135, %159, %128 : vector<16x128xi1>, vector<16x128xf32>
    %cst_50 = arith.constant dense<0.000000e+00> : vector<16x128xf32>
    %161 = tpu.matmul %155, %160, %cst_50 {dimension_numbers = #tpu.dot_dimension_numbers<[1], [0], [0], [1], [0, 0, 1, 1], [], []>} : vector<16x16xf32>, vector<16x128xf32>, vector<16x128xf32> -> vector<16x128xf32>
    %162 = arith.addf %158, %161 : vector<16x128xf32>
    %163 = tpu.iota {dimensions = array<i32: 1>} : vector<2x128xi32>
    %c64_i32 = arith.constant 64 : i32
    %164 = vector.broadcast %c64_i32 : i32 to vector<2x128xi32>
    %165 = arith.cmpi sge, %163, %164 : vector<2x128xi32>
    %c96_i32 = arith.constant 96 : i32
    %166 = vector.broadcast %c96_i32 : i32 to vector<2x128xi32>
    %167 = arith.cmpi slt, %163, %166 : vector<2x128xi32>
    %168 = arith.andi %165, %167 : vector<2x128xi1>
    %cst_51 = arith.constant 1.000000e+00 : f32
    %cst_52 = arith.constant 5.000000e-01 : f32
    %169 = vector.broadcast %cst_51 : f32 to vector<2x128xf32>
    %170 = vector.broadcast %cst_52 : f32 to vector<2x128xf32>
    %171 = arith.select %168, %169, %170 : vector<2x128xi1>, vector<2x128xf32>
    %cst_53 = arith.constant 0.000000e+00 : f32
    %172 = vector.broadcast %cst_53 : f32 to vector<2x32xf32>
    %cst_54 = arith.constant 0.000000e+00 : f32
    %173 = vector.broadcast %cst_54 : f32 to vector<2x32xf32>
    %174 = vector.extract_strided_slice %162 {offsets = [0, 0], sizes = [2, 128], strides = [1, 1]} : vector<16x128xf32> to vector<2x128xf32>
    %175 = arith.mulf %174, %171 : vector<2x128xf32>
    %176 = math.tanh %175 : vector<2x128xf32>
    %cst_55 = arith.constant 5.000000e-01 : f32
    %177 = vector.broadcast %cst_55 : f32 to vector<2x128xf32>
    %178 = arith.mulf %177, %176 : vector<2x128xf32>
    %cst_56 = arith.constant 5.000000e-01 : f32
    %179 = vector.broadcast %cst_56 : f32 to vector<2x128xf32>
    %180 = arith.addf %178, %179 : vector<2x128xf32>
    %181 = arith.select %168, %176, %180 : vector<2x128xi1>, vector<2x128xf32>
    %182 = vector.extract_strided_slice %181 {offsets = [0, 32], sizes = [2, 32], strides = [1, 1]} : vector<2x128xf32> to vector<2x32xf32>
    %183 = arith.mulf %182, %172 : vector<2x32xf32>
    %184 = vector.extract_strided_slice %181 {offsets = [0, 0], sizes = [2, 32], strides = [1, 1]} : vector<2x128xf32> to vector<2x32xf32>
    %185 = vector.extract_strided_slice %181 {offsets = [0, 64], sizes = [2, 32], strides = [1, 1]} : vector<2x128xf32> to vector<2x32xf32>
    %186 = arith.mulf %184, %185 : vector<2x32xf32>
    %187 = arith.addf %183, %186 : vector<2x32xf32>
    %188 = vector.extract_strided_slice %181 {offsets = [0, 96], sizes = [2, 32], strides = [1, 1]} : vector<2x128xf32> to vector<2x32xf32>
    %189 = math.tanh %187 : vector<2x32xf32>
    %190 = arith.mulf %188, %189 : vector<2x32xf32>
    %191 = arith.maximumf %173, %190 : vector<2x32xf32>
    %192 = vector.extract_strided_slice %162 {offsets = [2, 0], sizes = [2, 128], strides = [1, 1]} : vector<16x128xf32> to vector<2x128xf32>
    %cst_57 = arith.constant dense<0.000000e+00> : vector<2x128xf32>
    %193 = tpu.matmul %190, %124, %cst_57 {dimension_numbers = #tpu.dot_dimension_numbers<[1], [0], [0], [1], [0, 0, 1, 1], [], []>} : vector<2x32xf32>, vector<32x128xf32>, vector<2x128xf32> -> vector<2x128xf32>
    %194 = arith.addf %192, %193 : vector<2x128xf32>
    %195 = arith.mulf %194, %171 : vector<2x128xf32>
    %196 = math.tanh %195 : vector<2x128xf32>
    %cst_58 = arith.constant 5.000000e-01 : f32
    %197 = vector.broadcast %cst_58 : f32 to vector<2x128xf32>
    %198 = arith.mulf %197, %196 : vector<2x128xf32>
    %cst_59 = arith.constant 5.000000e-01 : f32
    %199 = vector.broadcast %cst_59 : f32 to vector<2x128xf32>
    %200 = arith.addf %198, %199 : vector<2x128xf32>
    %201 = arith.select %168, %196, %200 : vector<2x128xi1>, vector<2x128xf32>
    %202 = vector.extract_strided_slice %201 {offsets = [0, 32], sizes = [2, 32], strides = [1, 1]} : vector<2x128xf32> to vector<2x32xf32>
    %203 = arith.mulf %202, %187 : vector<2x32xf32>
    %204 = vector.extract_strided_slice %201 {offsets = [0, 0], sizes = [2, 32], strides = [1, 1]} : vector<2x128xf32> to vector<2x32xf32>
    %205 = vector.extract_strided_slice %201 {offsets = [0, 64], sizes = [2, 32], strides = [1, 1]} : vector<2x128xf32> to vector<2x32xf32>
    %206 = arith.mulf %204, %205 : vector<2x32xf32>
    %207 = arith.addf %203, %206 : vector<2x32xf32>
    %208 = vector.extract_strided_slice %201 {offsets = [0, 96], sizes = [2, 32], strides = [1, 1]} : vector<2x128xf32> to vector<2x32xf32>
    %209 = math.tanh %207 : vector<2x32xf32>
    %210 = arith.mulf %208, %209 : vector<2x32xf32>
    %211 = arith.maximumf %191, %210 : vector<2x32xf32>
    %212 = vector.extract_strided_slice %162 {offsets = [4, 0], sizes = [2, 128], strides = [1, 1]} : vector<16x128xf32> to vector<2x128xf32>
    %cst_60 = arith.constant dense<0.000000e+00> : vector<2x128xf32>
    %213 = tpu.matmul %210, %124, %cst_60 {dimension_numbers = #tpu.dot_dimension_numbers<[1], [0], [0], [1], [0, 0, 1, 1], [], []>} : vector<2x32xf32>, vector<32x128xf32>, vector<2x128xf32> -> vector<2x128xf32>
    %214 = arith.addf %212, %213 : vector<2x128xf32>
    %215 = arith.mulf %214, %171 : vector<2x128xf32>
    %216 = math.tanh %215 : vector<2x128xf32>
    %cst_61 = arith.constant 5.000000e-01 : f32
    %217 = vector.broadcast %cst_61 : f32 to vector<2x128xf32>
    %218 = arith.mulf %217, %216 : vector<2x128xf32>
    %cst_62 = arith.constant 5.000000e-01 : f32
    %219 = vector.broadcast %cst_62 : f32 to vector<2x128xf32>
    %220 = arith.addf %218, %219 : vector<2x128xf32>
    %221 = arith.select %168, %216, %220 : vector<2x128xi1>, vector<2x128xf32>
    %222 = vector.extract_strided_slice %221 {offsets = [0, 32], sizes = [2, 32], strides = [1, 1]} : vector<2x128xf32> to vector<2x32xf32>
    %223 = arith.mulf %222, %207 : vector<2x32xf32>
    %224 = vector.extract_strided_slice %221 {offsets = [0, 0], sizes = [2, 32], strides = [1, 1]} : vector<2x128xf32> to vector<2x32xf32>
    %225 = vector.extract_strided_slice %221 {offsets = [0, 64], sizes = [2, 32], strides = [1, 1]} : vector<2x128xf32> to vector<2x32xf32>
    %226 = arith.mulf %224, %225 : vector<2x32xf32>
    %227 = arith.addf %223, %226 : vector<2x32xf32>
    %228 = vector.extract_strided_slice %221 {offsets = [0, 96], sizes = [2, 32], strides = [1, 1]} : vector<2x128xf32> to vector<2x32xf32>
    %229 = math.tanh %227 : vector<2x32xf32>
    %230 = arith.mulf %228, %229 : vector<2x32xf32>
    %231 = arith.maximumf %211, %230 : vector<2x32xf32>
    %232 = vector.extract_strided_slice %162 {offsets = [6, 0], sizes = [2, 128], strides = [1, 1]} : vector<16x128xf32> to vector<2x128xf32>
    %cst_63 = arith.constant dense<0.000000e+00> : vector<2x128xf32>
    %233 = tpu.matmul %230, %124, %cst_63 {dimension_numbers = #tpu.dot_dimension_numbers<[1], [0], [0], [1], [0, 0, 1, 1], [], []>} : vector<2x32xf32>, vector<32x128xf32>, vector<2x128xf32> -> vector<2x128xf32>
    %234 = arith.addf %232, %233 : vector<2x128xf32>
    %235 = arith.mulf %234, %171 : vector<2x128xf32>
    %236 = math.tanh %235 : vector<2x128xf32>
    %cst_64 = arith.constant 5.000000e-01 : f32
    %237 = vector.broadcast %cst_64 : f32 to vector<2x128xf32>
    %238 = arith.mulf %237, %236 : vector<2x128xf32>
    %cst_65 = arith.constant 5.000000e-01 : f32
    %239 = vector.broadcast %cst_65 : f32 to vector<2x128xf32>
    %240 = arith.addf %238, %239 : vector<2x128xf32>
    %241 = arith.select %168, %236, %240 : vector<2x128xi1>, vector<2x128xf32>
    %242 = vector.extract_strided_slice %241 {offsets = [0, 32], sizes = [2, 32], strides = [1, 1]} : vector<2x128xf32> to vector<2x32xf32>
    %243 = arith.mulf %242, %227 : vector<2x32xf32>
    %244 = vector.extract_strided_slice %241 {offsets = [0, 0], sizes = [2, 32], strides = [1, 1]} : vector<2x128xf32> to vector<2x32xf32>
    %245 = vector.extract_strided_slice %241 {offsets = [0, 64], sizes = [2, 32], strides = [1, 1]} : vector<2x128xf32> to vector<2x32xf32>
    %246 = arith.mulf %244, %245 : vector<2x32xf32>
    %247 = arith.addf %243, %246 : vector<2x32xf32>
    %248 = vector.extract_strided_slice %241 {offsets = [0, 96], sizes = [2, 32], strides = [1, 1]} : vector<2x128xf32> to vector<2x32xf32>
    %249 = math.tanh %247 : vector<2x32xf32>
    %250 = arith.mulf %248, %249 : vector<2x32xf32>
    %251 = arith.maximumf %231, %250 : vector<2x32xf32>
    %252 = vector.extract_strided_slice %162 {offsets = [8, 0], sizes = [2, 128], strides = [1, 1]} : vector<16x128xf32> to vector<2x128xf32>
    %cst_66 = arith.constant dense<0.000000e+00> : vector<2x128xf32>
    %253 = tpu.matmul %250, %124, %cst_66 {dimension_numbers = #tpu.dot_dimension_numbers<[1], [0], [0], [1], [0, 0, 1, 1], [], []>} : vector<2x32xf32>, vector<32x128xf32>, vector<2x128xf32> -> vector<2x128xf32>
    %254 = arith.addf %252, %253 : vector<2x128xf32>
    %255 = arith.mulf %254, %171 : vector<2x128xf32>
    %256 = math.tanh %255 : vector<2x128xf32>
    %cst_67 = arith.constant 5.000000e-01 : f32
    %257 = vector.broadcast %cst_67 : f32 to vector<2x128xf32>
    %258 = arith.mulf %257, %256 : vector<2x128xf32>
    %cst_68 = arith.constant 5.000000e-01 : f32
    %259 = vector.broadcast %cst_68 : f32 to vector<2x128xf32>
    %260 = arith.addf %258, %259 : vector<2x128xf32>
    %261 = arith.select %168, %256, %260 : vector<2x128xi1>, vector<2x128xf32>
    %262 = vector.extract_strided_slice %261 {offsets = [0, 32], sizes = [2, 32], strides = [1, 1]} : vector<2x128xf32> to vector<2x32xf32>
    %263 = arith.mulf %262, %247 : vector<2x32xf32>
    %264 = vector.extract_strided_slice %261 {offsets = [0, 0], sizes = [2, 32], strides = [1, 1]} : vector<2x128xf32> to vector<2x32xf32>
    %265 = vector.extract_strided_slice %261 {offsets = [0, 64], sizes = [2, 32], strides = [1, 1]} : vector<2x128xf32> to vector<2x32xf32>
    %266 = arith.mulf %264, %265 : vector<2x32xf32>
    %267 = arith.addf %263, %266 : vector<2x32xf32>
    %268 = vector.extract_strided_slice %261 {offsets = [0, 96], sizes = [2, 32], strides = [1, 1]} : vector<2x128xf32> to vector<2x32xf32>
    %269 = math.tanh %267 : vector<2x32xf32>
    %270 = arith.mulf %268, %269 : vector<2x32xf32>
    %271 = arith.maximumf %251, %270 : vector<2x32xf32>
    %272 = vector.extract_strided_slice %162 {offsets = [10, 0], sizes = [2, 128], strides = [1, 1]} : vector<16x128xf32> to vector<2x128xf32>
    %cst_69 = arith.constant dense<0.000000e+00> : vector<2x128xf32>
    %273 = tpu.matmul %270, %124, %cst_69 {dimension_numbers = #tpu.dot_dimension_numbers<[1], [0], [0], [1], [0, 0, 1, 1], [], []>} : vector<2x32xf32>, vector<32x128xf32>, vector<2x128xf32> -> vector<2x128xf32>
    %274 = arith.addf %272, %273 : vector<2x128xf32>
    %275 = arith.mulf %274, %171 : vector<2x128xf32>
    %276 = math.tanh %275 : vector<2x128xf32>
    %cst_70 = arith.constant 5.000000e-01 : f32
    %277 = vector.broadcast %cst_70 : f32 to vector<2x128xf32>
    %278 = arith.mulf %277, %276 : vector<2x128xf32>
    %cst_71 = arith.constant 5.000000e-01 : f32
    %279 = vector.broadcast %cst_71 : f32 to vector<2x128xf32>
    %280 = arith.addf %278, %279 : vector<2x128xf32>
    %281 = arith.select %168, %276, %280 : vector<2x128xi1>, vector<2x128xf32>
    %282 = vector.extract_strided_slice %281 {offsets = [0, 32], sizes = [2, 32], strides = [1, 1]} : vector<2x128xf32> to vector<2x32xf32>
    %283 = arith.mulf %282, %267 : vector<2x32xf32>
    %284 = vector.extract_strided_slice %281 {offsets = [0, 0], sizes = [2, 32], strides = [1, 1]} : vector<2x128xf32> to vector<2x32xf32>
    %285 = vector.extract_strided_slice %281 {offsets = [0, 64], sizes = [2, 32], strides = [1, 1]} : vector<2x128xf32> to vector<2x32xf32>
    %286 = arith.mulf %284, %285 : vector<2x32xf32>
    %287 = arith.addf %283, %286 : vector<2x32xf32>
    %288 = vector.extract_strided_slice %281 {offsets = [0, 96], sizes = [2, 32], strides = [1, 1]} : vector<2x128xf32> to vector<2x32xf32>
    %289 = math.tanh %287 : vector<2x32xf32>
    %290 = arith.mulf %288, %289 : vector<2x32xf32>
    %291 = arith.maximumf %271, %290 : vector<2x32xf32>
    %292 = vector.extract_strided_slice %162 {offsets = [12, 0], sizes = [2, 128], strides = [1, 1]} : vector<16x128xf32> to vector<2x128xf32>
    %cst_72 = arith.constant dense<0.000000e+00> : vector<2x128xf32>
    %293 = tpu.matmul %290, %124, %cst_72 {dimension_numbers = #tpu.dot_dimension_numbers<[1], [0], [0], [1], [0, 0, 1, 1], [], []>} : vector<2x32xf32>, vector<32x128xf32>, vector<2x128xf32> -> vector<2x128xf32>
    %294 = arith.addf %292, %293 : vector<2x128xf32>
    %295 = arith.mulf %294, %171 : vector<2x128xf32>
    %296 = math.tanh %295 : vector<2x128xf32>
    %cst_73 = arith.constant 5.000000e-01 : f32
    %297 = vector.broadcast %cst_73 : f32 to vector<2x128xf32>
    %298 = arith.mulf %297, %296 : vector<2x128xf32>
    %cst_74 = arith.constant 5.000000e-01 : f32
    %299 = vector.broadcast %cst_74 : f32 to vector<2x128xf32>
    %300 = arith.addf %298, %299 : vector<2x128xf32>
    %301 = arith.select %168, %296, %300 : vector<2x128xi1>, vector<2x128xf32>
    %302 = vector.extract_strided_slice %301 {offsets = [0, 32], sizes = [2, 32], strides = [1, 1]} : vector<2x128xf32> to vector<2x32xf32>
    %303 = arith.mulf %302, %287 : vector<2x32xf32>
    %304 = vector.extract_strided_slice %301 {offsets = [0, 0], sizes = [2, 32], strides = [1, 1]} : vector<2x128xf32> to vector<2x32xf32>
    %305 = vector.extract_strided_slice %301 {offsets = [0, 64], sizes = [2, 32], strides = [1, 1]} : vector<2x128xf32> to vector<2x32xf32>
    %306 = arith.mulf %304, %305 : vector<2x32xf32>
    %307 = arith.addf %303, %306 : vector<2x32xf32>
    %308 = vector.extract_strided_slice %301 {offsets = [0, 96], sizes = [2, 32], strides = [1, 1]} : vector<2x128xf32> to vector<2x32xf32>
    %309 = math.tanh %307 : vector<2x32xf32>
    %310 = arith.mulf %308, %309 : vector<2x32xf32>
    %311 = arith.maximumf %291, %310 : vector<2x32xf32>
    %312 = vector.extract_strided_slice %162 {offsets = [14, 0], sizes = [2, 128], strides = [1, 1]} : vector<16x128xf32> to vector<2x128xf32>
    %cst_75 = arith.constant dense<0.000000e+00> : vector<2x128xf32>
    %313 = tpu.matmul %310, %124, %cst_75 {dimension_numbers = #tpu.dot_dimension_numbers<[1], [0], [0], [1], [0, 0, 1, 1], [], []>} : vector<2x32xf32>, vector<32x128xf32>, vector<2x128xf32> -> vector<2x128xf32>
    %314 = arith.addf %312, %313 : vector<2x128xf32>
    %315 = arith.mulf %314, %171 : vector<2x128xf32>
    %316 = math.tanh %315 : vector<2x128xf32>
    %cst_76 = arith.constant 5.000000e-01 : f32
    %317 = vector.broadcast %cst_76 : f32 to vector<2x128xf32>
    %318 = arith.mulf %317, %316 : vector<2x128xf32>
    %cst_77 = arith.constant 5.000000e-01 : f32
    %319 = vector.broadcast %cst_77 : f32 to vector<2x128xf32>
    %320 = arith.addf %318, %319 : vector<2x128xf32>
    %321 = arith.select %168, %316, %320 : vector<2x128xi1>, vector<2x128xf32>
    %322 = vector.extract_strided_slice %321 {offsets = [0, 32], sizes = [2, 32], strides = [1, 1]} : vector<2x128xf32> to vector<2x32xf32>
    %323 = arith.mulf %322, %307 : vector<2x32xf32>
    %324 = vector.extract_strided_slice %321 {offsets = [0, 0], sizes = [2, 32], strides = [1, 1]} : vector<2x128xf32> to vector<2x32xf32>
    %325 = vector.extract_strided_slice %321 {offsets = [0, 64], sizes = [2, 32], strides = [1, 1]} : vector<2x128xf32> to vector<2x32xf32>
    %326 = arith.mulf %324, %325 : vector<2x32xf32>
    %327 = arith.addf %323, %326 : vector<2x32xf32>
    %328 = vector.extract_strided_slice %321 {offsets = [0, 96], sizes = [2, 32], strides = [1, 1]} : vector<2x128xf32> to vector<2x32xf32>
    %329 = math.tanh %327 : vector<2x32xf32>
    %330 = arith.mulf %328, %329 : vector<2x32xf32>
    %331 = arith.maximumf %311, %330 : vector<2x32xf32>
    %c160 = arith.constant 160 : index
    %c0_78 = arith.constant 0 : index
    %332 = vector.load %arg1[%c160, %c0_78] : memref<200x128xf32, #tpu.memory_space<vmem>>, vector<32x32xf32>
    %cst_79 = arith.constant dense<0.000000e+00> : vector<2x32xf32>
    %333 = tpu.matmul %331, %332, %cst_79 {dimension_numbers = #tpu.dot_dimension_numbers<[1], [0], [0], [1], [0, 0, 1, 1], [], []>} : vector<2x32xf32>, vector<32x32xf32>, vector<2x32xf32> -> vector<2x32xf32>
    %c199 = arith.constant 199 : index
    %c0_80 = arith.constant 0 : index
    %334 = vector.load %arg1[%c199, %c0_80] : memref<200x128xf32, #tpu.memory_space<vmem>>, vector<1x32xf32>
    %335 = vector.broadcast %334 : vector<1x32xf32> to vector<2x32xf32>
    %336 = arith.addf %333, %335 : vector<2x32xf32>
    %cst_81 = arith.constant 0.000000e+00 : f32
    %337 = vector.broadcast %cst_81 : f32 to vector<2x32xf32>
    %338 = arith.maximumf %336, %337 : vector<2x32xf32>
    %c48 = arith.constant 48 : index
    %c0_82 = arith.constant 0 : index
    %339 = vector.load %arg1[%c48, %c0_82] : memref<200x128xf32, #tpu.memory_space<vmem>>, vector<32x128xf32>
    %cst_83 = arith.constant dense<0.000000e+00> : vector<2x128xf32>
    %340 = tpu.matmul %338, %339, %cst_83 {dimension_numbers = #tpu.dot_dimension_numbers<[1], [0], [0], [1], [0, 0, 1, 1], [], []>} : vector<2x32xf32>, vector<32x128xf32>, vector<2x128xf32> -> vector<2x128xf32>
    %c193 = arith.constant 193 : index
    %c0_84 = arith.constant 0 : index
    %341 = vector.load %arg1[%c193, %c0_84] : memref<200x128xf32, #tpu.memory_space<vmem>>, vector<1x128xf32>
    %342 = vector.broadcast %341 : vector<1x128xf32> to vector<2x128xf32>
    %343 = arith.addf %340, %342 : vector<2x128xf32>
    %c0_85 = arith.constant 0 : index
    %c0_86 = arith.constant 0 : index
    %344 = vector.load %arg2[%c0_85, %c0_86] : memref<2x128xf32, #tpu.memory_space<vmem>>, vector<2x128xf32>
    tpu.vector_store %arg2[%c0_85, %c0_86], %343 {strides = array<i32>} : memref<2x128xf32, #tpu.memory_space<vmem>>, vector<2x128xf32>,
    return
  }
}

</mosaic_0001>

<llo_original>
// kernel: tpu_custom_call.1
$region0: #{tpu_custom_call.1}
  #allocation0 [shape = 'u32[]', space=smem, size = 0x4, offset = 0x4, fixed_abs, tag = 'smem constant byte address 0x4 - core index']
  #allocation1 [shape = 'u32[144,128]{1,0:T(1,128)}', space=vmem, size = 0x12000, scoped, tag = 'internal scratch']
  %s0 = inlined_call_operand.hbm [shape: f32[16,16], index: 0, kind: input, shape index: {}]
  %s1 = inlined_call_operand.hbm [shape: f32[200,128], index: 1, kind: input, shape index: {}]
  %s2 = inlined_call_operand.hbm [shape: f32[2,128], index: 2, kind: output, shape index: {}]
  %s3 = sld [smem:[#allocation0]]
  $region26: #{tpu_custom_call.1} parent=0
    _
  %s5 = ssub.s32 1, %s3
  %s6 = scalar_select 0, %s5, %s3
  $region1: #{tpu_custom_call.1} parent=0
    #allocation2 [shape = 'u8[8192]{0}', space=vmem, size = 0x2000, scoped, tag = 'input window, operand 0, single buffered']
    #allocation3 [shape = 's32[1]{0}', space=sflag, size = 0x4, scoped, tag = 'scoped memory for tpu_custom_call.1']
    #allocation4 [shape = 's32[1]{0}', space=sflag, size = 0x4, scoped, tag = 'scoped memory for tpu_custom_call.1']
    #allocation5 [shape = 'u8[102400]{0}', space=vmem, size = 0x19000, scoped, tag = 'input window, operand 1, single buffered']
    #allocation6 [shape = 's32[1]{0}', space=sflag, size = 0x4, scoped, tag = 'scoped memory for tpu_custom_call.1']
    #allocation7 [shape = 'u8[1024]{0}', space=vmem, size = 0x400, scoped, tag = 'output window, operand 0, single buffered']
    %7 = vsyncpa [#allocation3], 0
    %8 = vsyncpa [#allocation6], 0
    %9 = vsyncpa [#allocation4], 0
    // Predicated region
    $region2: #{tpu_custom_call.1} parent=1 // pred_check
      _
    $region3: #{tpu_custom_call.1} parent=1 // pred_check_branch
      %11 = sbr.rel (0) target = $region5
    $region4: #{tpu_custom_call.1} parent=1 // pred_region
      %s13 = ssub.s32 256, 256
      %14 = vsyncadd [#allocation3], %s13
      %s15 = sshll.u32 [#allocation2], 4
      %s16 = int_to_ptr.vmem [resolvable:$true] %s15
      %21 = dma.hbm_to_vmem [thread:$0]  %s0, 256, %s16, [#allocation3], 128, 128, 8
    $region5: #{tpu_custom_call.1} parent=1 // pred_fallthru
      _
    // Predicated region
    $region6: #{tpu_custom_call.1} parent=1 // pred_check
      _
    $region7: #{tpu_custom_call.1} parent=1 // pred_check_branch
      %23 = sbr.rel (0) target = $region9
    $region8: #{tpu_custom_call.1} parent=1 // pred_region
      %s25 = ssub.s32 3200, 3200
      %26 = vsyncadd [#allocation6], %s25
      %s27 = sshll.u32 [#allocation5], 4
      %s28 = int_to_ptr.vmem [resolvable:$true] %s27
      %33 = dma.hbm_to_vmem [thread:$0]  %s1, 3200, %s28, [#allocation6], 128, 128, 8
    $region9: #{tpu_custom_call.1} parent=1 // pred_fallthru
      _
    // Predicated region
    $region10: #{tpu_custom_call.1} parent=1 // pred_check
      _
    $region11: #{tpu_custom_call.1} parent=1 // pred_check_branch
      %35 = sbr.rel (0) target = $region13
    $region12: #{tpu_custom_call.1} parent=1 // pred_region
      %36 = dma.done [#allocation3], 256
    $region13: #{tpu_custom_call.1} parent=1 // pred_fallthru
      _
    // Predicated region
    $region14: #{tpu_custom_call.1} parent=1 // pred_check
      _
    $region15: #{tpu_custom_call.1} parent=1 // pred_check_branch
      %38 = sbr.rel (0) target = $region17
    $region16: #{tpu_custom_call.1} parent=1 // pred_region
      %39 = dma.done [#allocation6], 3200
    $region17: #{tpu_custom_call.1} parent=1 // pred_fallthru
      _
    %v40 = vld [vmem:[#allocation2] sm:$0xff]
    %v41 = vld [vmem:[#allocation2 + $0x8] sm:$0xff]
    %v42 = vlaneseq
    %v43 = vshrl.u32 %v42, 7
    %v44 = vadd.s32 %v43, 8
    %v45 = vlaneseq
    %v46 = vand.u32 %v45, 127
    %v47 = vand.u32 %v43, 7
    %v48 = vand.u32 %v44, 7
    %v49 = vsub.s32 %v43, 1
    %v50 = vsub.s32 %v44, 1
    %vm51 = vcmp.eq.s32.totalorder %v46, %v49
    %vm52 = vcmp.eq.s32.totalorder %v46, %v50
    %vm53 = vcmp.ne.s32.totalorder %v47, 0
    %vm54 = vcmp.ne.s32.totalorder %v48, 0
    %vm55 = vmand %vm51, %vm53
    %vm56 = vmand %vm52, %vm54
    %v57 = vsel %vm55, 1, 0
    %v58 = vsel %vm56, 1, 0
    %v59 = vcvt.s32.f32 %v57
    %v60 = vcvt.s32.f32 %v58
    %v61 = vadd.s32 %v43, 1
    %v62 = vadd.s32 %v44, 1
    %vm63 = vcmp.eq.s32.totalorder %v46, %v61
    %vm64 = vcmp.eq.s32.totalorder %v46, %v62
    %vm65 = vcmp.ne.s32.totalorder %v47, 7
    %vm66 = vcmp.ne.s32.totalorder %v48, 7
    %vm67 = vmand %vm63, %vm65
    %vm68 = vmand %vm64, %vm66
    %v69 = vsel %vm67, 1, 0
    %v70 = vsel %vm68, 1, 0
    %v71 = vcvt.s32.f32 %v69
    %v72 = vcvt.s32.f32 %v70
    %vm73 = vcmask 130048
    %v75 = vsel %vm73, %v59, 0
    %v78 = vsel %vm73, %v60, 0
    %80 = vmatprep.subr.mxu0 0.0
    %81 = vmatpush1.msra.mxu0 %v40
    %82 = vmatprep.subr.mxu0 0.0
    %83 = vmatpush1.msra.mxu0 %v41
    %84 = vmatprep.subr.mxu0 0.0
    %85 = vmatpush1.msra.mxu0 0.0
    %86 = vmatprep.subr.mxu0 0.0
    %87 = vmatpush1.msra.mxu0 0.0
    %88 = vmatprep.subr.mxu0 0.0
    %89 = vmatpush1.msra.mxu0 0.0
    %90 = vmatprep.subr.mxu0 0.0
    %91 = vmatpush1.msra.mxu0 0.0
    %92 = vmatprep.subr.mxu0 0.0
    %93 = vmatpush1.msra.mxu0 0.0
    %94 = vmatprep.subr.mxu0 0.0
    %95 = vmatpush1.msra.mxu0 0.0
    %96 = vmatprep.subr.mxu0 0.0
    %97 = vmatpush1.msra.mxu0 0.0
    %98 = vmatprep.subr.mxu0 0.0
    %99 = vmatpush1.msra.mxu0 0.0
    %100 = vmatprep.subr.mxu0 0.0
    %101 = vmatpush1.msra.mxu0 0.0
    %102 = vmatprep.subr.mxu0 0.0
    %103 = vmatpush1.msra.mxu0 0.0
    %104 = vmatprep.subr.mxu0 0.0
    %105 = vmatpush1.msra.mxu0 0.0
    %106 = vmatprep.subr.mxu0 0.0
    %107 = vmatpush1.msra.mxu0 0.0
    %108 = vmatprep.subr.mxu0 0.0
    %109 = vmatpush1.msra.mxu0 0.0
    %110 = vmatprep.subr.mxu0 0.0
    %111 = vmatpush1.msra.mxu0 0.0
    %112 = vmatprep.subr.mxu0 0.0
    %113 = vmatpush1.msra.mxu0 0.0
    %114 = vmatprep.subr.mxu0 0.0
    %115 = vmatpush1.msra.mxu0 0.0
    %116 = vmatprep.subr.mxu0 0.0
    %117 = vmatpush1.msra.mxu0 0.0
    %118 = vmatprep.subr.mxu0 0.0
    %119 = vmatpush1.msra.mxu0 0.0
    %120 = vmatprep.subr.mxu0 0.0
    %121 = vmatpush1.msra.mxu0 0.0
    %122 = vmatprep.subr.mxu0 0.0
    %123 = vmatpush1.msra.mxu0 0.0
    %124 = vmatprep.subr.mxu0 0.0
    %125 = vmatpush1.msra.mxu0 0.0
    %126 = vmatprep.subr.mxu0 0.0
    %127 = vmatpush1.msra.mxu0 0.0
    %128 = vmatprep.subr.mxu0 0.0
    %129 = vmatpush1.msra.mxu0 0.0
    %130 = vmatprep.subr.mxu0 0.0
    %131 = vmatpush1.msra.mxu0 0.0
    %132 = vmatprep.subr.mxu0 0.0
    %133 = vmatpush1.msra.mxu0 0.0
    %134 = vmatprep.subr.mxu0 0.0
    %135 = vmatpush1.msra.mxu0 0.0
    %136 = vmatprep.subr.mxu0 0.0
    %137 = vmatpush1.msra.mxu0 0.0
    %138 = vmatprep.subr.mxu0 0.0
    %139 = vmatpush1.msra.mxu0 0.0
    %140 = vmatprep.subr.mxu0 0.0
    %141 = vmatpush1.msra.mxu0 0.0
    %142 = vmatprep.subr.mxu0 0.0
    %143 = vmatpush1.msra.mxu0 0.0
    %144 = vmatprep.mubr.f32.mxu0 0.0
    %145 = vmatmul.mubr.f32.gmra.mrb[0].mxu0 %v75
    %v146 = vpop.f32.mrb[0].mxu0
    %v147 = vadd.f32 0.0, %v146
    %v148 = vpop.f32.mrb[0].mxu0
    %149 = vmatprep.mubr.f32.mxu0 0.0
    %150 = vmatmul.mubr.f32.gmra.mrb[0].mxu0 %v78
    %v151 = vpop.f32.mrb[0].mxu0
    %v152 = vadd.f32 0.0, %v151
    %v153 = vpop.f32.mrb[0].mxu0
    %154 = vdwg.mxu0
    %v156 = vsel %vm73, %v71, 0
    %v159 = vsel %vm73, %v72, 0
    %161 = vmatprep.subr.mxu0 0.0
    %162 = vmatpush1.msra.mxu0 %v40
    %163 = vmatprep.subr.mxu0 0.0
    %164 = vmatpush1.msra.mxu0 %v41
    %165 = vmatprep.subr.mxu0 0.0
    %166 = vmatpush1.msra.mxu0 0.0
    %167 = vmatprep.subr.mxu0 0.0
    %168 = vmatpush1.msra.mxu0 0.0
    %169 = vmatprep.subr.mxu0 0.0
    %170 = vmatpush1.msra.mxu0 0.0
    %171 = vmatprep.subr.mxu0 0.0
    %172 = vmatpush1.msra.mxu0 0.0
    %173 = vmatprep.subr.mxu0 0.0
    %174 = vmatpush1.msra.mxu0 0.0
    %175 = vmatprep.subr.mxu0 0.0
    %176 = vmatpush1.msra.mxu0 0.0
    %177 = vmatprep.subr.mxu0 0.0
    %178 = vmatpush1.msra.mxu0 0.0
    %179 = vmatprep.subr.mxu0 0.0
    %180 = vmatpush1.msra.mxu0 0.0
    %181 = vmatprep.subr.mxu0 0.0
    %182 = vmatpush1.msra.mxu0 0.0
    %183 = vmatprep.subr.mxu0 0.0
    %184 = vmatpush1.msra.mxu0 0.0
    %185 = vmatprep.subr.mxu0 0.0
    %186 = vmatpush1.msra.mxu0 0.0
    %187 = vmatprep.subr.mxu0 0.0
    %188 = vmatpush1.msra.mxu0 0.0
    %189 = vmatprep.subr.mxu0 0.0
    %190 = vmatpush1.msra.mxu0 0.0
    %191 = vmatprep.subr.mxu0 0.0
    %192 = vmatpush1.msra.mxu0 0.0
    %193 = vmatprep.subr.mxu0 0.0
    %194 = vmatpush1.msra.mxu0 0.0
    %195 = vmatprep.subr.mxu0 0.0
    %196 = vmatpush1.msra.mxu0 0.0
    %197 = vmatprep.subr.mxu0 0.0
    %198 = vmatpush1.msra.mxu0 0.0
    %199 = vmatprep.subr.mxu0 0.0
    %200 = vmatpush1.msra.mxu0 0.0
    %201 = vmatprep.subr.mxu0 0.0
    %202 = vmatpush1.msra.mxu0 0.0
    %203 = vmatprep.subr.mxu0 0.0
    %204 = vmatpush1.msra.mxu0 0.0
    %205 = vmatprep.subr.mxu0 0.0
    %206 = vmatpush1.msra.mxu0 0.0
    %207 = vmatprep.subr.mxu0 0.0
    %208 = vmatpush1.msra.mxu0 0.0
    %209 = vmatprep.subr.mxu0 0.0
    %210 = vmatpush1.msra.mxu0 0.0
    %211 = vmatprep.subr.mxu0 0.0
    %212 = vmatpush1.msra.mxu0 0.0
    %213 = vmatprep.subr.mxu0 0.0
    %214 = vmatpush1.msra.mxu0 0.0
    %215 = vmatprep.subr.mxu0 0.0
    %216 = vmatpush1.msra.mxu0 0.0
    %217 = vmatprep.subr.mxu0 0.0
    %218 = vmatpush1.msra.mxu0 0.0
    %219 = vmatprep.subr.mxu0 0.0
    %220 = vmatpush1.msra.mxu0 0.0
    %221 = vmatprep.subr.mxu0 0.0
    %222 = vmatpush1.msra.mxu0 0.0
    %223 = vmatprep.subr.mxu0 0.0
    %224 = vmatpush1.msra.mxu0 0.0
    %225 = vmatprep.mubr.f32.mxu0 0.0
    %226 = vmatmul.mubr.f32.gmra.mrb[0].mxu0 %v156
    %v227 = vpop.f32.mrb[0].mxu0
    %v228 = vadd.f32 0.0, %v227
    %v229 = vpop.f32.mrb[0].mxu0
    %230 = vmatprep.mubr.f32.mxu0 0.0
    %231 = vmatmul.mubr.f32.gmra.mrb[0].mxu0 %v159
    %v232 = vpop.f32.mrb[0].mxu0
    %v233 = vadd.f32 0.0, %v232
    %v234 = vpop.f32.mrb[0].mxu0
    %235 = vdwg.mxu0
    %v236 = vld [vmem:[#allocation5 + $0x60] sm:$0xff]
    %v237 = vld [vmem:[#allocation5 + $0x68] sm:$0xff]
    %v238 = vld [vmem:[#allocation5 + $0x70] sm:$0xff]
    %v239 = vld [vmem:[#allocation5 + $0x78] sm:$0xff]
    %v241 = vsel %vm73, %v40, 0
    %v244 = vsel %vm73, %v41, 0
    %246 = vmatprep.subr.mxu0 0.0
    %247 = vmatpush1.msra.mxu0 %v238
    %248 = vmatprep.subr.mxu0 0.0
    %249 = vmatpush1.msra.mxu0 %v239
    %250 = vmatprep.subr.mxu0 0.0
    %251 = vmatpush1.msra.mxu0 0.0
    %252 = vmatprep.subr.mxu0 0.0
    %253 = vmatpush1.msra.mxu0 0.0
    %254 = vmatprep.subr.mxu0 0.0
    %255 = vmatpush1.msra.mxu0 0.0
    %256 = vmatprep.subr.mxu0 0.0
    %257 = vmatpush1.msra.mxu0 0.0
    %258 = vmatprep.subr.mxu0 0.0
    %259 = vmatpush1.msra.mxu0 0.0
    %260 = vmatprep.subr.mxu0 0.0
    %261 = vmatpush1.msra.mxu0 0.0
    %262 = vmatprep.subr.mxu0 0.0
    %263 = vmatpush1.msra.mxu0 0.0
    %264 = vmatprep.subr.mxu0 0.0
    %265 = vmatpush1.msra.mxu0 0.0
    %266 = vmatprep.subr.mxu0 0.0
    %267 = vmatpush1.msra.mxu0 0.0
    %268 = vmatprep.subr.mxu0 0.0
    %269 = vmatpush1.msra.mxu0 0.0
    %270 = vmatprep.subr.mxu0 0.0
    %271 = vmatpush1.msra.mxu0 0.0
    %272 = vmatprep.subr.mxu0 0.0
    %273 = vmatpush1.msra.mxu0 0.0
    %274 = vmatprep.subr.mxu0 0.0
    %275 = vmatpush1.msra.mxu0 0.0
    %276 = vmatprep.subr.mxu0 0.0
    %277 = vmatpush1.msra.mxu0 0.0
    %278 = vmatprep.subr.mxu0 0.0
    %279 = vmatpush1.msra.mxu0 0.0
    %280 = vmatprep.subr.mxu0 0.0
    %281 = vmatpush1.msra.mxu0 0.0
    %282 = vmatprep.subr.mxu0 0.0
    %283 = vmatpush1.msra.mxu0 0.0
    %284 = vmatprep.subr.mxu0 0.0
    %285 = vmatpush1.msra.mxu0 0.0
    %286 = vmatprep.subr.mxu0 0.0
    %287 = vmatpush1.msra.mxu0 0.0
    %288 = vmatprep.subr.mxu0 0.0
    %289 = vmatpush1.msra.mxu0 0.0
    %290 = vmatprep.subr.mxu0 0.0
    %291 = vmatpush1.msra.mxu0 0.0
    %292 = vmatprep.subr.mxu0 0.0
    %293 = vmatpush1.msra.mxu0 0.0
    %294 = vmatprep.subr.mxu0 0.0
    %295 = vmatpush1.msra.mxu0 0.0
    %296 = vmatprep.subr.mxu0 0.0
    %297 = vmatpush1.msra.mxu0 0.0
    %298 = vmatprep.subr.mxu0 0.0
    %299 = vmatpush1.msra.mxu0 0.0
    %300 = vmatprep.subr.mxu0 0.0
    %301 = vmatpush1.msra.mxu0 0.0
    %302 = vmatprep.subr.mxu0 0.0
    %303 = vmatpush1.msra.mxu0 0.0
    %304 = vmatprep.subr.mxu0 0.0
    %305 = vmatpush1.msra.mxu0 0.0
    %306 = vmatprep.subr.mxu0 0.0
    %307 = vmatpush1.msra.mxu0 0.0
    %308 = vmatprep.subr.mxu0 0.0
    %309 = vmatpush1.msra.mxu0 0.0
    %310 = vmatprep.mubr.f32.mxu0 0.0
    %311 = vmatmul.mubr.f32.gmra.mrb[0].mxu0 %v241
    %v312 = vpop.f32.mrb[0].mxu0
    %v313 = vadd.f32 0.0, %v312
    %v314 = vpop.f32.mrb[0].mxu0
    %315 = vmatprep.mubr.f32.mxu0 0.0
    %316 = vmatmul.mubr.f32.gmra.mrb[0].mxu0 %v244
    %v317 = vpop.f32.mrb[0].mxu0
    %v318 = vadd.f32 0.0, %v317
    %v319 = vpop.f32.mrb[0].mxu0
    %320 = vdwg.mxu0
    %v322 = vsel %vm73, %v147, 0
    %v325 = vsel %vm73, %v152, 0
    %327 = vmatprep.subr.mxu0 0.0
    %328 = vmatpush1.msra.mxu0 %v236
    %329 = vmatprep.subr.mxu0 0.0
    %330 = vmatpush1.msra.mxu0 %v237
    %331 = vmatprep.subr.mxu0 0.0
    %332 = vmatpush1.msra.mxu0 0.0
    %333 = vmatprep.subr.mxu0 0.0
    %334 = vmatpush1.msra.mxu0 0.0
    %335 = vmatprep.subr.mxu0 0.0
    %336 = vmatpush1.msra.mxu0 0.0
    %337 = vmatprep.subr.mxu0 0.0
    %338 = vmatpush1.msra.mxu0 0.0
    %339 = vmatprep.subr.mxu0 0.0
    %340 = vmatpush1.msra.mxu0 0.0
    %341 = vmatprep.subr.mxu0 0.0
    %342 = vmatpush1.msra.mxu0 0.0
    %343 = vmatprep.subr.mxu0 0.0
    %344 = vmatpush1.msra.mxu0 0.0
    %345 = vmatprep.subr.mxu0 0.0
    %346 = vmatpush1.msra.mxu0 0.0
    %347 = vmatprep.subr.mxu0 0.0
    %348 = vmatpush1.msra.mxu0 0.0
    %349 = vmatprep.subr.mxu0 0.0
    %350 = vmatpush1.msra.mxu0 0.0
    %351 = vmatprep.subr.mxu0 0.0
    %352 = vmatpush1.msra.mxu0 0.0
    %353 = vmatprep.subr.mxu0 0.0
    %354 = vmatpush1.msra.mxu0 0.0
    %355 = vmatprep.subr.mxu0 0.0
    %356 = vmatpush1.msra.mxu0 0.0
    %357 = vmatprep.subr.mxu0 0.0
    %358 = vmatpush1.msra.mxu0 0.0
    %359 = vmatprep.subr.mxu0 0.0
    %360 = vmatpush1.msra.mxu0 0.0
    %361 = vmatprep.subr.mxu0 0.0
    %362 = vmatpush1.msra.mxu0 0.0
    %363 = vmatprep.subr.mxu0 0.0
    %364 = vmatpush1.msra.mxu0 0.0
    %365 = vmatprep.subr.mxu0 0.0
    %366 = vmatpush1.msra.mxu0 0.0
    %367 = vmatprep.subr.mxu0 0.0
    %368 = vmatpush1.msra.mxu0 0.0
    %369 = vmatprep.subr.mxu0 0.0
    %370 = vmatpush1.msra.mxu0 0.0
    %371 = vmatprep.subr.mxu0 0.0
    %372 = vmatpush1.msra.mxu0 0.0
    %373 = vmatprep.subr.mxu0 0.0
    %374 = vmatpush1.msra.mxu0 0.0
    %375 = vmatprep.subr.mxu0 0.0
    %376 = vmatpush1.msra.mxu0 0.0
    %377 = vmatprep.subr.mxu0 0.0
    %378 = vmatpush1.msra.mxu0 0.0
    %379 = vmatprep.subr.mxu0 0.0
    %380 = vmatpush1.msra.mxu0 0.0
    %381 = vmatprep.subr.mxu0 0.0
    %382 = vmatpush1.msra.mxu0 0.0
    %383 = vmatprep.subr.mxu0 0.0
    %384 = vmatpush1.msra.mxu0 0.0
    %385 = vmatprep.subr.mxu0 0.0
    %386 = vmatpush1.msra.mxu0 0.0
    %387 = vmatprep.subr.mxu0 0.0
    %388 = vmatpush1.msra.mxu0 0.0
    %389 = vmatprep.subr.mxu0 0.0
    %390 = vmatpush1.msra.mxu0 0.0
    %391 = vmatprep.mubr.f32.mxu0 0.0
    %392 = vmatmul.mubr.f32.gmra.mrb[0].mxu0 %v322
    %v393 = vpop.f32.mrb[0].mxu0
    %v394 = vadd.f32 %v313, %v393
    %v395 = vpop.f32.mrb[0].mxu0
    %396 = vmatprep.mubr.f32.mxu0 0.0
    %397 = vmatmul.mubr.f32.gmra.mrb[0].mxu0 %v325
    %v398 = vpop.f32.mrb[0].mxu0
    %v399 = vadd.f32 %v318, %v398
    %v400 = vpop.f32.mrb[0].mxu0
    %401 = vdwg.mxu0
    %v402 = vld [vmem:[#allocation5 + $0x80] sm:$0xff]
    %v403 = vld [vmem:[#allocation5 + $0x88] sm:$0xff]
    %v405 = vsel %vm73, %v228, 0
    %v408 = vsel %vm73, %v233, 0
    %410 = vmatprep.subr.mxu0 0.0
    %411 = vmatpush1.msra.mxu0 %v402
    %412 = vmatprep.subr.mxu0 0.0
    %413 = vmatpush1.msra.mxu0 %v403
    %414 = vmatprep.subr.mxu0 0.0
    %415 = vmatpush1.msra.mxu0 0.0
    %416 = vmatprep.subr.mxu0 0.0
    %417 = vmatpush1.msra.mxu0 0.0
    %418 = vmatprep.subr.mxu0 0.0
    %419 = vmatpush1.msra.mxu0 0.0
    %420 = vmatprep.subr.mxu0 0.0
    %421 = vmatpush1.msra.mxu0 0.0
    %422 = vmatprep.subr.mxu0 0.0
    %423 = vmatpush1.msra.mxu0 0.0
    %424 = vmatprep.subr.mxu0 0.0
    %425 = vmatpush1.msra.mxu0 0.0
    %426 = vmatprep.subr.mxu0 0.0
    %427 = vmatpush1.msra.mxu0 0.0
    %428 = vmatprep.subr.mxu0 0.0
    %429 = vmatpush1.msra.mxu0 0.0
    %430 = vmatprep.subr.mxu0 0.0
    %431 = vmatpush1.msra.mxu0 0.0
    %432 = vmatprep.subr.mxu0 0.0
    %433 = vmatpush1.msra.mxu0 0.0
    %434 = vmatprep.subr.mxu0 0.0
    %435 = vmatpush1.msra.mxu0 0.0
    %436 = vmatprep.subr.mxu0 0.0
    %437 = vmatpush1.msra.mxu0 0.0
    %438 = vmatprep.subr.mxu0 0.0
    %439 = vmatpush1.msra.mxu0 0.0
    %440 = vmatprep.subr.mxu0 0.0
    %441 = vmatpush1.msra.mxu0 0.0
    %442 = vmatprep.subr.mxu0 0.0
    %443 = vmatpush1.msra.mxu0 0.0
    %444 = vmatprep.subr.mxu0 0.0
    %445 = vmatpush1.msra.mxu0 0.0
    %446 = vmatprep.subr.mxu0 0.0
    %447 = vmatpush1.msra.mxu0 0.0
    %448 = vmatprep.subr.mxu0 0.0
    %449 = vmatpush1.msra.mxu0 0.0
    %450 = vmatprep.subr.mxu0 0.0
    %451 = vmatpush1.msra.mxu0 0.0
    %452 = vmatprep.subr.mxu0 0.0
    %453 = vmatpush1.msra.mxu0 0.0
    %454 = vmatprep.subr.mxu0 0.0
    %455 = vmatpush1.msra.mxu0 0.0
    %456 = vmatprep.subr.mxu0 0.0
    %457 = vmatpush1.msra.mxu0 0.0
    %458 = vmatprep.subr.mxu0 0.0
    %459 = vmatpush1.msra.mxu0 0.0
    %460 = vmatprep.subr.mxu0 0.0
    %461 = vmatpush1.msra.mxu0 0.0
    %462 = vmatprep.subr.mxu0 0.0
    %463 = vmatpush1.msra.mxu0 0.0
    %464 = vmatprep.subr.mxu0 0.0
    %465 = vmatpush1.msra.mxu0 0.0
    %466 = vmatprep.subr.mxu0 0.0
    %467 = vmatpush1.msra.mxu0 0.0
    %468 = vmatprep.subr.mxu0 0.0
    %469 = vmatpush1.msra.mxu0 0.0
    %470 = vmatprep.subr.mxu0 0.0
    %471 = vmatpush1.msra.mxu0 0.0
    %472 = vmatprep.subr.mxu0 0.0
    %473 = vmatpush1.msra.mxu0 0.0
    %474 = vmatprep.mubr.f32.mxu0 0.0
    %475 = vmatmul.mubr.f32.gmra.mrb[0].mxu0 %v405
    %v476 = vpop.f32.mrb[0].mxu0
    %v477 = vadd.f32 0.0, %v476
    %v478 = vpop.f32.mrb[0].mxu0
    %479 = vmatprep.mubr.f32.mxu0 0.0
    %480 = vmatmul.mubr.f32.gmra.mrb[0].mxu0 %v408
    %v481 = vpop.f32.mrb[0].mxu0
    %v482 = vadd.f32 0.0, %v481
    %v483 = vpop.f32.mrb[0].mxu0
    %484 = vdwg.mxu0
    %v485 = vadd.f32 %v394, %v477
    %v486 = vadd.f32 %v399, %v482
    %v487 = vld [vmem:[#allocation5 + $0xc3] sm:$0x1]
    %v488 = vlaneseq
    %v489 = vshrl.u32 %v488, 7
    %v490 = vsub.s32 0, %v489
    %v491 = vrot.slane %v487, %v490
    %v492 = vadd.f32 %v485, %v491
    %v493 = vadd.f32 %v486, %v491
    %v494 = vmax.f32 %v492, 0.0
    %v495 = vmax.f32 %v493, 0.0
    %v496 = vadd.f32 %v40, %v494
    %v497 = vadd.f32 %v41, %v495
    %v498 = vld [vmem:[#allocation5 + $0x50] sm:$0xff]
    %v499 = vld [vmem:[#allocation5 + $0x58] sm:$0xff]
    %v500 = vld [vmem:[#allocation5 + $0xc2] sm:$0x1]
    %v501 = vlaneseq
    %v502 = vshrl.u32 %v501, 7
    %v503 = vsub.s32 0, %v502
    %v504 = vrot.slane %v500, %v503
    %v506 = vsel %vm73, %v496, 0
    %v509 = vsel %vm73, %v497, 0
    %511 = vmatprep.subr.mxu0 0.0
    %512 = vmatpush1.msra.mxu0 %v498
    %513 = vmatprep.subr.mxu0 0.0
    %514 = vmatpush1.msra.mxu0 %v499
    %515 = vmatprep.subr.mxu0 0.0
    %516 = vmatpush1.msra.mxu0 0.0
    %517 = vmatprep.subr.mxu0 0.0
    %518 = vmatpush1.msra.mxu0 0.0
    %519 = vmatprep.subr.mxu0 0.0
    %520 = vmatpush1.msra.mxu0 0.0
    %521 = vmatprep.subr.mxu0 0.0
    %522 = vmatpush1.msra.mxu0 0.0
    %523 = vmatprep.subr.mxu0 0.0
    %524 = vmatpush1.msra.mxu0 0.0
    %525 = vmatprep.subr.mxu0 0.0
    %526 = vmatpush1.msra.mxu0 0.0
    %527 = vmatprep.subr.mxu0 0.0
    %528 = vmatpush1.msra.mxu0 0.0
    %529 = vmatprep.subr.mxu0 0.0
    %530 = vmatpush1.msra.mxu0 0.0
    %531 = vmatprep.subr.mxu0 0.0
    %532 = vmatpush1.msra.mxu0 0.0
    %533 = vmatprep.subr.mxu0 0.0
    %534 = vmatpush1.msra.mxu0 0.0
    %535 = vmatprep.subr.mxu0 0.0
    %536 = vmatpush1.msra.mxu0 0.0
    %537 = vmatprep.subr.mxu0 0.0
    %538 = vmatpush1.msra.mxu0 0.0
    %539 = vmatprep.subr.mxu0 0.0
    %540 = vmatpush1.msra.mxu0 0.0
    %541 = vmatprep.subr.mxu0 0.0
    %542 = vmatpush1.msra.mxu0 0.0
    %543 = vmatprep.subr.mxu0 0.0
    %544 = vmatpush1.msra.mxu0 0.0
    %545 = vmatprep.subr.mxu0 0.0
    %546 = vmatpush1.msra.mxu0 0.0
    %547 = vmatprep.subr.mxu0 0.0
    %548 = vmatpush1.msra.mxu0 0.0
    %549 = vmatprep.subr.mxu0 0.0
    %550 = vmatpush1.msra.mxu0 0.0
    %551 = vmatprep.subr.mxu0 0.0
    %552 = vmatpush1.msra.mxu0 0.0
    %553 = vmatprep.subr.mxu0 0.0
    %554 = vmatpush1.msra.mxu0 0.0
    %555 = vmatprep.subr.mxu0 0.0
    %556 = vmatpush1.msra.mxu0 0.0
    %557 = vmatprep.subr.mxu0 0.0
    %558 = vmatpush1.msra.mxu0 0.0
    %559 = vmatprep.subr.mxu0 0.0
    %560 = vmatpush1.msra.mxu0 0.0
    %561 = vmatprep.subr.mxu0 0.0
    %562 = vmatpush1.msra.mxu0 0.0
    %563 = vmatprep.subr.mxu0 0.0
    %564 = vmatpush1.msra.mxu0 0.0
    %565 = vmatprep.subr.mxu0 0.0
    %566 = vmatpush1.msra.mxu0 0.0
    %567 = vmatprep.subr.mxu0 0.0
    %568 = vmatpush1.msra.mxu0 0.0
    %569 = vmatprep.subr.mxu0 0.0
    %570 = vmatpush1.msra.mxu0 0.0
    %571 = vmatprep.subr.mxu0 0.0
    %572 = vmatpush1.msra.mxu0 0.0
    %573 = vmatprep.subr.mxu0 0.0
    %574 = vmatpush1.msra.mxu0 0.0
    %575 = vmatprep.mubr.f32.mxu0 0.0
    %576 = vmatmul.mubr.f32.gmra.mrb[0].mxu0 %v506
    %v577 = vpop.f32.mrb[0].mxu0
    %v578 = vadd.f32 %v504, %v577
    %v579 = vpop.f32.mrb[0].mxu0
    %580 = vmatprep.mubr.f32.mxu0 0.0
    %581 = vmatmul.mubr.f32.gmra.mrb[0].mxu0 %v509
    %v582 = vpop.f32.mrb[0].mxu0
    %v583 = vadd.f32 %v504, %v582
    %v584 = vpop.f32.mrb[0].mxu0
    %585 = vdwg.mxu0
    %v586 = vadd.s32 %v43, 16
    %v587 = vadd.s32 %v43, 24
    %v588 = vadd.s32 %v43, 32
    %v589 = vadd.s32 %v43, 40
    %v590 = vadd.s32 %v43, 48
    %v591 = vadd.s32 %v43, 56
    %v592 = vand.u32 %v43, 15
    %v593 = vand.u32 %v44, 15
    %v594 = vand.u32 %v586, 15
    %v595 = vand.u32 %v587, 15
    %v596 = vand.u32 %v588, 15
    %v597 = vand.u32 %v589, 15
    %v598 = vand.u32 %v590, 15
    %v599 = vand.u32 %v591, 15
    %vm600 = vcmp.eq.s32.totalorder %v46, %v592
    %vm601 = vcmp.eq.s32.totalorder %v46, %v593
    %vm602 = vcmp.eq.s32.totalorder %v46, %v594
    %vm603 = vcmp.eq.s32.totalorder %v46, %v595
    %vm604 = vcmp.eq.s32.totalorder %v46, %v596
    %vm605 = vcmp.eq.s32.totalorder %v46, %v597
    %vm606 = vcmp.eq.s32.totalorder %v46, %v598
    %vm607 = vcmp.eq.s32.totalorder %v46, %v599
    %v608 = vsel %vm600, 1, 0
    %v609 = vsel %vm601, 1, 0
    %v610 = vsel %vm602, 1, 0
    %v611 = vsel %vm603, 1, 0
    %v612 = vsel %vm604, 1, 0
    %v613 = vsel %vm605, 1, 0
    %v614 = vsel %vm606, 1, 0
    %v615 = vsel %vm607, 1, 0
    %v616 = vcvt.s32.f32 %v608
    %v617 = vcvt.s32.f32 %v609
    %v618 = vcvt.s32.f32 %v610
    %v619 = vcvt.s32.f32 %v611
    %v620 = vcvt.s32.f32 %v612
    %v621 = vcvt.s32.f32 %v613
    %v622 = vcvt.s32.f32 %v614
    %v623 = vcvt.s32.f32 %v615
    %v624 = vshra.s32 %v592, 3
    %v625 = vshra.s32 %v593, 3
    %v626 = vshra.s32 %v594, 3
    %v627 = vshra.s32 %v595, 3
    %v628 = vshra.s32 %v596, 3
    %v629 = vshra.s32 %v597, 3
    %v630 = vshra.s32 %v598, 3
    %v631 = vshra.s32 %v599, 3
    %v632 = vshra.s32 %v46, 3
    %vm633 = vcmp.eq.s32.totalorder %v624, %v632
    %vm634 = vcmp.eq.s32.totalorder %v625, %v632
    %vm635 = vcmp.eq.s32.totalorder %v626, %v632
    %vm636 = vcmp.eq.s32.totalorder %v627, %v632
    %vm637 = vcmp.eq.s32.totalorder %v628, %v632
    %vm638 = vcmp.eq.s32.totalorder %v629, %v632
    %vm639 = vcmp.eq.s32.totalorder %v630, %v632
    %vm640 = vcmp.eq.s32.totalorder %v631, %v632
    %v641 = vsel %vm633, 0.0, -1e+30
    %v642 = vsel %vm634, 0.0, -1e+30
    %v643 = vsel %vm635, 0.0, -1e+30
    %v644 = vsel %vm636, 0.0, -1e+30
    %v645 = vsel %vm637, 0.0, -1e+30
    %v646 = vsel %vm638, 0.0, -1e+30
    %v647 = vsel %vm639, 0.0, -1e+30
    %v648 = vsel %vm640, 0.0, -1e+30
    %v649 = vshra.s32 %v43, 4
    %v650 = vshra.s32 %v44, 4
    %v651 = vshra.s32 %v586, 4
    %v652 = vshra.s32 %v587, 4
    %v653 = vshra.s32 %v588, 4
    %v654 = vshra.s32 %v589, 4
    %v655 = vshra.s32 %v590, 4
    %v656 = vshra.s32 %v591, 4
    %v657 = vshra.s32 %v46, 2
    %vm658 = vcmp.eq.s32.totalorder %v649, %v657
    %vm659 = vcmp.eq.s32.totalorder %v650, %v657
    %vm660 = vcmp.eq.s32.totalorder %v651, %v657
    %vm661 = vcmp.eq.s32.totalorder %v652, %v657
    %vm662 = vcmp.eq.s32.totalorder %v653, %v657
    %vm663 = vcmp.eq.s32.totalorder %v654, %v657
    %vm664 = vcmp.eq.s32.totalorder %v655, %v657
    %vm665 = vcmp.eq.s32.totalorder %v656, %v657
    %v666 = vsel %vm658, 1, 0
    %v667 = vsel %vm659, 1, 0
    %v668 = vsel %vm660, 1, 0
    %v669 = vsel %vm661, 1, 0
    %v670 = vsel %vm662, 1, 0
    %v671 = vsel %vm663, 1, 0
    %v672 = vsel %vm664, 1, 0
    %v673 = vsel %vm665, 1, 0
    %v674 = vcvt.s32.f32 %v666
    %v675 = vcvt.s32.f32 %v667
    %v676 = vcvt.s32.f32 %v668
    %v677 = vcvt.s32.f32 %v669
    %v678 = vcvt.s32.f32 %v670
    %v679 = vcvt.s32.f32 %v671
    %v680 = vcvt.s32.f32 %v672
    %v681 = vcvt.s32.f32 %v673
    %v682 = vand.u32 %v46, 15
    %vm683 = vcmp.eq.s32.totalorder %v43, %v682
    %vm684 = vcmp.eq.s32.totalorder %v44, %v682
    %v685 = vsel %vm683, 1, 0
    %v686 = vsel %vm684, 1, 0
    %v687 = vcvt.s32.f32 %v685
    %v688 = vcvt.s32.f32 %v686
    %v690 = vsel %vm73, %v616, 0
    %v693 = vsel %vm73, %v617, 0
    %v696 = vsel %vm73, %v618, 0
    %v699 = vsel %vm73, %v619, 0
    %v702 = vsel %vm73, %v620, 0
    %v705 = vsel %vm73, %v621, 0
    %v708 = vsel %vm73, %v622, 0
    %v711 = vsel %vm73, %v623, 0
    %713 = vmatprep.subr.mxu0 0.0
    %714 = vmatpush1.msra.mxu0 %v578
    %715 = vmatprep.subr.mxu0 0.0
    %716 = vmatpush1.msra.mxu0 %v583
    %717 = vmatprep.subr.mxu0 0.0
    %718 = vmatpush1.msra.mxu0 0.0
    %719 = vmatprep.subr.mxu0 0.0
    %720 = vmatpush1.msra.mxu0 0.0
    %721 = vmatprep.subr.mxu0 0.0
    %722 = vmatpush1.msra.mxu0 0.0
    %723 = vmatprep.subr.mxu0 0.0
    %724 = vmatpush1.msra.mxu0 0.0
    %725 = vmatprep.subr.mxu0 0.0
    %726 = vmatpush1.msra.mxu0 0.0
    %727 = vmatprep.subr.mxu0 0.0
    %728 = vmatpush1.msra.mxu0 0.0
    %729 = vmatprep.subr.mxu0 0.0
    %730 = vmatpush1.msra.mxu0 0.0
    %731 = vmatprep.subr.mxu0 0.0
    %732 = vmatpush1.msra.mxu0 0.0
    %733 = vmatprep.subr.mxu0 0.0
    %734 = vmatpush1.msra.mxu0 0.0
    %735 = vmatprep.subr.mxu0 0.0
    %736 = vmatpush1.msra.mxu0 0.0
    %737 = vmatprep.subr.mxu0 0.0
    %738 = vmatpush1.msra.mxu0 0.0
    %739 = vmatprep.subr.mxu0 0.0
    %740 = vmatpush1.msra.mxu0 0.0
    %741 = vmatprep.subr.mxu0 0.0
    %742 = vmatpush1.msra.mxu0 0.0
    %743 = vmatprep.subr.mxu0 0.0
    %744 = vmatpush1.msra.mxu0 0.0
    %745 = vmatprep.subr.mxu0 0.0
    %746 = vmatpush1.msra.mxu0 0.0
    %747 = vmatprep.subr.mxu0 0.0
    %748 = vmatpush1.msra.mxu0 0.0
    %749 = vmatprep.subr.mxu0 0.0
    %750 = vmatpush1.msra.mxu0 0.0
    %751 = vmatprep.subr.mxu0 0.0
    %752 = vmatpush1.msra.mxu0 0.0
    %753 = vmatprep.subr.mxu0 0.0
    %754 = vmatpush1.msra.mxu0 0.0
    %755 = vmatprep.subr.mxu0 0.0
    %756 = vmatpush1.msra.mxu0 0.0
    %757 = vmatprep.subr.mxu0 0.0
    %758 = vmatpush1.msra.mxu0 0.0
    %759 = vmatprep.subr.mxu0 0.0
    %760 = vmatpush1.msra.mxu0 0.0
    %761 = vmatprep.subr.mxu0 0.0
    %762 = vmatpush1.msra.mxu0 0.0
    %763 = vmatprep.subr.mxu0 0.0
    %764 = vmatpush1.msra.mxu0 0.0
    %765 = vmatprep.subr.mxu0 0.0
    %766 = vmatpush1.msra.mxu0 0.0
    %767 = vmatprep.subr.mxu0 0.0
    %768 = vmatpush1.msra.mxu0 0.0
    %769 = vmatprep.subr.mxu0 0.0
    %770 = vmatpush1.msra.mxu0 0.0
    %771 = vmatprep.subr.mxu0 0.0
    %772 = vmatpush1.msra.mxu0 0.0
    %773 = vmatprep.subr.mxu0 0.0
    %774 = vmatpush1.msra.mxu0 0.0
    %775 = vmatprep.subr.mxu0 0.0
    %776 = vmatpush1.msra.mxu0 0.0
    %777 = vmatprep.mubr.f32.mxu0 0.0
    %778 = vmatmul.mubr.f32.gmra.mrb[0].mxu0 %v690
    %v779 = vpop.f32.mrb[0].mxu0
    %v780 = vadd.f32 0.0, %v779
    %v781 = vpop.f32.mrb[0].mxu0
    %782 = vmatprep.mubr.f32.mxu0 0.0
    %783 = vmatmul.mubr.f32.gmra.mrb[0].mxu0 %v693
    %v784 = vpop.f32.mrb[0].mxu0
    %v785 = vadd.f32 0.0, %v784
    %v786 = vpop.f32.mrb[0].mxu0
    %787 = vmatprep.mubr.f32.mxu0 0.0
    %788 = vmatmul.mubr.f32.gmra.mrb[0].mxu0 %v696
    %v789 = vpop.f32.mrb[0].mxu0
    %v790 = vadd.f32 0.0, %v789
    %v791 = vpop.f32.mrb[0].mxu0
    %792 = vmatprep.mubr.f32.mxu0 0.0
    %793 = vmatmul.mubr.f32.gmra.mrb[0].mxu0 %v699
    %v794 = vpop.f32.mrb[0].mxu0
    %v795 = vadd.f32 0.0, %v794
    %v796 = vpop.f32.mrb[0].mxu0
    %797 = vmatprep.mubr.f32.mxu0 0.0
    %798 = vmatmul.mubr.f32.gmra.mrb[0].mxu0 %v702
    %v799 = vpop.f32.mrb[0].mxu0
    %v800 = vadd.f32 0.0, %v799
    %v801 = vpop.f32.mrb[0].mxu0
    %802 = vmatprep.mubr.f32.mxu0 0.0
    %803 = vmatmul.mubr.f32.gmra.mrb[0].mxu0 %v705
    %v804 = vpop.f32.mrb[0].mxu0
    %v805 = vadd.f32 0.0, %v804
    %v806 = vpop.f32.mrb[0].mxu0
    %807 = vmatprep.mubr.f32.mxu0 0.0
    %808 = vmatmul.mubr.f32.gmra.mrb[0].mxu0 %v708
    %v809 = vpop.f32.mrb[0].mxu0
    %v810 = vadd.f32 0.0, %v809
    %v811 = vpop.f32.mrb[0].mxu0
    %812 = vmatprep.mubr.f32.mxu0 0.0
    %813 = vmatmul.mubr.f32.gmra.mrb[0].mxu0 %v711
    %v814 = vpop.f32.mrb[0].mxu0
    %v815 = vadd.f32 0.0, %v814
    %v816 = vpop.f32.mrb[0].mxu0
    %817 = vdwg.mxu0
    %v818 = vmul.f32 %v780, %v674
    %v819 = vmul.f32 %v785, %v675
    %v820 = vmul.f32 %v790, %v676
    %v821 = vmul.f32 %v795, %v677
    %v822 = vmul.f32 %v800, %v678
    %v823 = vmul.f32 %v805, %v679
    %v824 = vmul.f32 %v810, %v680
    %v825 = vmul.f32 %v815, %v681
    %828 = vrot.lane.b32.xlu0 %v578, 112
    %v829 = vpop.permute.xlu0 %828
    %830 = vrot.lane.b32.xlu0 %v583, 112
    %v831 = vpop.permute.xlu0 %830
    %v833 = vsel %vm73, %v818, 0
    %v836 = vsel %vm73, %v819, 0
    %v839 = vsel %vm73, %v820, 0
    %v842 = vsel %vm73, %v821, 0
    %v845 = vsel %vm73, %v822, 0
    %v848 = vsel %vm73, %v823, 0
    %v851 = vsel %vm73, %v824, 0
    %v854 = vsel %vm73, %v825, 0
    %v856 = vsel %vm73, %v829, 0
    %v858 = vsel %vm73, %v831, 0
    %860 = vmatprep.subr.mxu0 0.0
    %861 = vmatpush1.xpose.msra.mxu0 %v856
    %862 = vmatprep.subr.mxu0 0.0
    %863 = vmatpush1.xpose.msra.mxu0 %v858
    %864 = vmatprep.subr.mxu0 0.0
    %865 = vmatpush1.xpose.msra.mxu0 0.0
    %866 = vmatprep.subr.mxu0 0.0
    %867 = vmatpush1.xpose.msra.mxu0 0.0
    %868 = vmatprep.subr.mxu0 0.0
    %869 = vmatpush1.xpose.msra.mxu0 0.0
    %870 = vmatprep.subr.mxu0 0.0
    %871 = vmatpush1.xpose.msra.mxu0 0.0
    %872 = vmatprep.subr.mxu0 0.0
    %873 = vmatpush1.xpose.msra.mxu0 0.0
    %874 = vmatprep.subr.mxu0 0.0
    %875 = vmatpush1.xpose.msra.mxu0 0.0
    %876 = vmatprep.subr.mxu0 0.0
    %877 = vmatpush1.xpose.msra.mxu0 0.0
    %878 = vmatprep.subr.mxu0 0.0
    %879 = vmatpush1.xpose.msra.mxu0 0.0
    %880 = vmatprep.subr.mxu0 0.0
    %881 = vmatpush1.xpose.msra.mxu0 0.0
    %882 = vmatprep.subr.mxu0 0.0
    %883 = vmatpush1.xpose.msra.mxu0 0.0
    %884 = vmatprep.subr.mxu0 0.0
    %885 = vmatpush1.xpose.msra.mxu0 0.0
    %886 = vmatprep.subr.mxu0 0.0
    %887 = vmatpush1.xpose.msra.mxu0 0.0
    %888 = vmatprep.subr.mxu0 0.0
    %889 = vmatpush1.xpose.msra.mxu0 0.0
    %890 = vmatprep.subr.mxu0 0.0
    %891 = vmatpush1.xpose.msra.mxu0 0.0
    %892 = vmatprep.subr.mxu0 0.0
    %893 = vmatpush1.xpose.msra.mxu0 0.0
    %894 = vmatprep.subr.mxu0 0.0
    %895 = vmatpush1.xpose.msra.mxu0 0.0
    %896 = vmatprep.subr.mxu0 0.0
    %897 = vmatpush1.xpose.msra.mxu0 0.0
    %898 = vmatprep.subr.mxu0 0.0
    %899 = vmatpush1.xpose.msra.mxu0 0.0
    %900 = vmatprep.subr.mxu0 0.0
    %901 = vmatpush1.xpose.msra.mxu0 0.0
    %902 = vmatprep.subr.mxu0 0.0
    %903 = vmatpush1.xpose.msra.mxu0 0.0
    %904 = vmatprep.subr.mxu0 0.0
    %905 = vmatpush1.xpose.msra.mxu0 0.0
    %906 = vmatprep.subr.mxu0 0.0
    %907 = vmatpush1.xpose.msra.mxu0 0.0
    %908 = vmatprep.subr.mxu0 0.0
    %909 = vmatpush1.xpose.msra.mxu0 0.0
    %910 = vmatprep.subr.mxu0 0.0
    %911 = vmatpush1.xpose.msra.mxu0 0.0
    %912 = vmatprep.subr.mxu0 0.0
    %913 = vmatpush1.xpose.msra.mxu0 0.0
    %914 = vmatprep.subr.mxu0 0.0
    %915 = vmatpush1.xpose.msra.mxu0 0.0
    %916 = vmatprep.subr.mxu0 0.0
    %917 = vmatpush1.xpose.msra.mxu0 0.0
    %918 = vmatprep.subr.mxu0 0.0
    %919 = vmatpush1.xpose.msra.mxu0 0.0
    %920 = vmatprep.subr.mxu0 0.0
    %921 = vmatpush1.xpose.msra.mxu0 0.0
    %922 = vmatprep.subr.mxu0 0.0
    %923 = vmatpush1.xpose.msra.mxu0 0.0
    %924 = vmatprep.mubr.f32.mxu0 0.0
    %925 = vmatmul.mubr.f32.gmra.mrb[0].mxu0 %v833
    %v926 = vpop.f32.mrb[0].mxu0
    %v927 = vadd.f32 %v641, %v926
    %v928 = vpop.f32.mrb[0].mxu0
    %929 = vmatprep.mubr.f32.mxu0 0.0
    %930 = vmatmul.mubr.f32.gmra.mrb[0].mxu0 %v836
    %v931 = vpop.f32.mrb[0].mxu0
    %v932 = vadd.f32 %v642, %v931
    %v933 = vpop.f32.mrb[0].mxu0
    %934 = vmatprep.mubr.f32.mxu0 0.0
    %935 = vmatmul.mubr.f32.gmra.mrb[0].mxu0 %v839
    %v936 = vpop.f32.mrb[0].mxu0
    %v937 = vadd.f32 %v643, %v936
    %v938 = vpop.f32.mrb[0].mxu0
    %939 = vmatprep.mubr.f32.mxu0 0.0
    %940 = vmatmul.mubr.f32.gmra.mrb[0].mxu0 %v842
    %v941 = vpop.f32.mrb[0].mxu0
    %v942 = vadd.f32 %v644, %v941
    %v943 = vpop.f32.mrb[0].mxu0
    %944 = vmatprep.mubr.f32.mxu0 0.0
    %945 = vmatmul.mubr.f32.gmra.mrb[0].mxu0 %v845
    %v946 = vpop.f32.mrb[0].mxu0
    %v947 = vadd.f32 %v645, %v946
    %v948 = vpop.f32.mrb[0].mxu0
    %949 = vmatprep.mubr.f32.mxu0 0.0
    %950 = vmatmul.mubr.f32.gmra.mrb[0].mxu0 %v848
    %v951 = vpop.f32.mrb[0].mxu0
    %v952 = vadd.f32 %v646, %v951
    %v953 = vpop.f32.mrb[0].mxu0
    %954 = vmatprep.mubr.f32.mxu0 0.0
    %955 = vmatmul.mubr.f32.gmra.mrb[0].mxu0 %v851
    %v956 = vpop.f32.mrb[0].mxu0
    %v957 = vadd.f32 %v647, %v956
    %v958 = vpop.f32.mrb[0].mxu0
    %959 = vmatprep.mubr.f32.mxu0 0.0
    %960 = vmatmul.mubr.f32.gmra.mrb[0].mxu0 %v854
    %v961 = vpop.f32.mrb[0].mxu0
    %v962 = vadd.f32 %v648, %v961
    %v963 = vpop.f32.mrb[0].mxu0
    %964 = vdwg.mxu0
    %v965 = vsel %vm73, %v927, -inf
    %966 = vmax.xlane.f32.xlu0 %v965
    %v967 = vpop.xlane.xlu0 %966
    %v968 = vsel %vm73, %v932, -inf
    %969 = vmax.xlane.f32.xlu0 %v968
    %v970 = vpop.xlane.xlu0 %969
    %v971 = vsel %vm73, %v937, -inf
    %972 = vmax.xlane.f32.xlu0 %v971
    %v973 = vpop.xlane.xlu0 %972
    %v974 = vsel %vm73, %v942, -inf
    %975 = vmax.xlane.f32.xlu0 %v974
    %v976 = vpop.xlane.xlu0 %975
    %v977 = vsel %vm73, %v947, -inf
    %978 = vmax.xlane.f32.xlu0 %v977
    %v979 = vpop.xlane.xlu0 %978
    %v980 = vsel %vm73, %v952, -inf
    %981 = vmax.xlane.f32.xlu0 %v980
    %v982 = vpop.xlane.xlu0 %981
    %v983 = vsel %vm73, %v957, -inf
    %984 = vmax.xlane.f32.xlu0 %v983
    %v985 = vpop.xlane.xlu0 %984
    %v986 = vsel %vm73, %v962, -inf
    %987 = vmax.xlane.f32.xlu0 %v986
    %v988 = vpop.xlane.xlu0 %987
    %v989 = vsub.f32 %v927, %v967
    %v990 = vsub.f32 %v932, %v970
    %v991 = vsub.f32 %v937, %v973
    %v992 = vsub.f32 %v942, %v976
    %v993 = vsub.f32 %v947, %v979
    %v994 = vsub.f32 %v952, %v982
    %v995 = vsub.f32 %v957, %v985
    %v996 = vsub.f32 %v962, %v988
    %v997 = vmul.f32 %v989, 1.442695
    %v998 = vpow.pop %v997
    %v999 = vmul.f32 %v990, 1.442695
    %v1000 = vpow.pop %v999
    %v1001 = vmul.f32 %v991, 1.442695
    %v1002 = vpow.pop %v1001
    %v1003 = vmul.f32 %v992, 1.442695
    %v1004 = vpow.pop %v1003
    %v1005 = vmul.f32 %v993, 1.442695
    %v1006 = vpow.pop %v1005
    %v1007 = vmul.f32 %v994, 1.442695
    %v1008 = vpow.pop %v1007
    %v1009 = vmul.f32 %v995, 1.442695
    %v1010 = vpow.pop %v1009
    %v1011 = vmul.f32 %v996, 1.442695
    %v1012 = vpow.pop %v1011
    %v1013 = vsel %vm73, %v998, 0.0
    %1014 = vadd.xlane.f32.xlu0 %v1013
    %v1015 = vpop.xlane.xlu0 %1014
    %v1016 = vsel %vm73, %v1000, 0.0
    %1017 = vadd.xlane.f32.xlu0 %v1016
    %v1018 = vpop.xlane.xlu0 %1017
    %v1019 = vsel %vm73, %v1002, 0.0
    %1020 = vadd.xlane.f32.xlu0 %v1019
    %v1021 = vpop.xlane.xlu0 %1020
    %v1022 = vsel %vm73, %v1004, 0.0
    %1023 = vadd.xlane.f32.xlu0 %v1022
    %v1024 = vpop.xlane.xlu0 %1023
    %v1025 = vsel %vm73, %v1006, 0.0
    %1026 = vadd.xlane.f32.xlu0 %v1025
    %v1027 = vpop.xlane.xlu0 %1026
    %v1028 = vsel %vm73, %v1008, 0.0
    %1029 = vadd.xlane.f32.xlu0 %v1028
    %v1030 = vpop.xlane.xlu0 %1029
    %v1031 = vsel %vm73, %v1010, 0.0
    %1032 = vadd.xlane.f32.xlu0 %v1031
    %v1033 = vpop.xlane.xlu0 %1032
    %v1034 = vsel %vm73, %v1012, 0.0
    %1035 = vadd.xlane.f32.xlu0 %v1034
    %v1036 = vpop.xlane.xlu0 %1035
    %v1037 = vrcp.pop %v1015
    %v1038 = vrcp.pop %v1018
    %v1039 = vrcp.pop %v1021
    %v1040 = vrcp.pop %v1024
    %v1041 = vrcp.pop %v1027
    %v1042 = vrcp.pop %v1030
    %v1043 = vrcp.pop %v1033
    %v1044 = vrcp.pop %v1036
    %v1045 = vmul.f32 %v998, %v1037
    %v1046 = vmul.f32 %v1000, %v1038
    %v1047 = vmul.f32 %v1002, %v1039
    %v1048 = vmul.f32 %v1004, %v1040
    %v1049 = vmul.f32 %v1006, %v1041
    %v1050 = vmul.f32 %v1008, %v1042
    %v1051 = vmul.f32 %v1010, %v1043
    %v1052 = vmul.f32 %v1012, %v1044
    %1053 = vrot.lane.b32.xlu0 %v578, 96
    %v1054 = vpop.permute.xlu0 %1053
    %1055 = vrot.lane.b32.xlu0 %v583, 96
    %v1056 = vpop.permute.xlu0 %1055
    %v1060 = vsel %vm73, %v1045, 0
    %v1063 = vsel %vm73, %v1046, 0
    %v1066 = vsel %vm73, %v1047, 0
    %v1069 = vsel %vm73, %v1048, 0
    %v1072 = vsel %vm73, %v1049, 0
    %v1075 = vsel %vm73, %v1050, 0
    %v1078 = vsel %vm73, %v1051, 0
    %v1081 = vsel %vm73, %v1052, 0
    %1083 = vmatprep.subr.mxu0 0.0
    %1084 = vmatpush1.msra.mxu0 %v1054
    %1085 = vmatprep.subr.mxu0 0.0
    %1086 = vmatpush1.msra.mxu0 %v1056
    %1087 = vmatprep.subr.mxu0 0.0
    %1088 = vmatpush1.msra.mxu0 0.0
    %1089 = vmatprep.subr.mxu0 0.0
    %1090 = vmatpush1.msra.mxu0 0.0
    %1091 = vmatprep.subr.mxu0 0.0
    %1092 = vmatpush1.msra.mxu0 0.0
    %1093 = vmatprep.subr.mxu0 0.0
    %1094 = vmatpush1.msra.mxu0 0.0
    %1095 = vmatprep.subr.mxu0 0.0
    %1096 = vmatpush1.msra.mxu0 0.0
    %1097 = vmatprep.subr.mxu0 0.0
    %1098 = vmatpush1.msra.mxu0 0.0
    %1099 = vmatprep.subr.mxu0 0.0
    %1100 = vmatpush1.msra.mxu0 0.0
    %1101 = vmatprep.subr.mxu0 0.0
    %1102 = vmatpush1.msra.mxu0 0.0
    %1103 = vmatprep.subr.mxu0 0.0
    %1104 = vmatpush1.msra.mxu0 0.0
    %1105 = vmatprep.subr.mxu0 0.0
    %1106 = vmatpush1.msra.mxu0 0.0
    %1107 = vmatprep.subr.mxu0 0.0
    %1108 = vmatpush1.msra.mxu0 0.0
    %1109 = vmatprep.subr.mxu0 0.0
    %1110 = vmatpush1.msra.mxu0 0.0
    %1111 = vmatprep.subr.mxu0 0.0
    %1112 = vmatpush1.msra.mxu0 0.0
    %1113 = vmatprep.subr.mxu0 0.0
    %1114 = vmatpush1.msra.mxu0 0.0
    %1115 = vmatprep.subr.mxu0 0.0
    %1116 = vmatpush1.msra.mxu0 0.0
    %1117 = vmatprep.subr.mxu0 0.0
    %1118 = vmatpush1.msra.mxu0 0.0
    %1119 = vmatprep.subr.mxu0 0.0
    %1120 = vmatpush1.msra.mxu0 0.0
    %1121 = vmatprep.subr.mxu0 0.0
    %1122 = vmatpush1.msra.mxu0 0.0
    %1123 = vmatprep.subr.mxu0 0.0
    %1124 = vmatpush1.msra.mxu0 0.0
    %1125 = vmatprep.subr.mxu0 0.0
    %1126 = vmatpush1.msra.mxu0 0.0
    %1127 = vmatprep.subr.mxu0 0.0
    %1128 = vmatpush1.msra.mxu0 0.0
    %1129 = vmatprep.subr.mxu0 0.0
    %1130 = vmatpush1.msra.mxu0 0.0
    %1131 = vmatprep.subr.mxu0 0.0
    %1132 = vmatpush1.msra.mxu0 0.0
    %1133 = vmatprep.subr.mxu0 0.0
    %1134 = vmatpush1.msra.mxu0 0.0
    %1135 = vmatprep.subr.mxu0 0.0
    %1136 = vmatpush1.msra.mxu0 0.0
    %1137 = vmatprep.subr.mxu0 0.0
    %1138 = vmatpush1.msra.mxu0 0.0
    %1139 = vmatprep.subr.mxu0 0.0
    %1140 = vmatpush1.msra.mxu0 0.0
    %1141 = vmatprep.subr.mxu0 0.0
    %1142 = vmatpush1.msra.mxu0 0.0
    %1143 = vmatprep.subr.mxu0 0.0
    %1144 = vmatpush1.msra.mxu0 0.0
    %1145 = vmatprep.subr.mxu0 0.0
    %1146 = vmatpush1.msra.mxu0 0.0
    %1147 = vmatprep.mubr.f32.mxu0 0.0
    %1148 = vmatmul.mubr.f32.gmra.mrb[0].mxu0 %v1060
    %v1149 = vpop.f32.mrb[0].mxu0
    %v1150 = vadd.f32 0.0, %v1149
    %v1151 = vpop.f32.mrb[0].mxu0
    %1152 = vmatprep.mubr.f32.mxu0 0.0
    %1153 = vmatmul.mubr.f32.gmra.mrb[0].mxu0 %v1063
    %v1154 = vpop.f32.mrb[0].mxu0
    %v1155 = vadd.f32 0.0, %v1154
    %v1156 = vpop.f32.mrb[0].mxu0
    %1157 = vmatprep.mubr.f32.mxu0 0.0
    %1158 = vmatmul.mubr.f32.gmra.mrb[0].mxu0 %v1066
    %v1159 = vpop.f32.mrb[0].mxu0
    %v1160 = vadd.f32 0.0, %v1159
    %v1161 = vpop.f32.mrb[0].mxu0
    %1162 = vmatprep.mubr.f32.mxu0 0.0
    %1163 = vmatmul.mubr.f32.gmra.mrb[0].mxu0 %v1069
    %v1164 = vpop.f32.mrb[0].mxu0
    %v1165 = vadd.f32 0.0, %v1164
    %v1166 = vpop.f32.mrb[0].mxu0
    %1167 = vmatprep.mubr.f32.mxu0 0.0
    %1168 = vmatmul.mubr.f32.gmra.mrb[0].mxu0 %v1072
    %v1169 = vpop.f32.mrb[0].mxu0
    %v1170 = vadd.f32 0.0, %v1169
    %v1171 = vpop.f32.mrb[0].mxu0
    %1172 = vmatprep.mubr.f32.mxu0 0.0
    %1173 = vmatmul.mubr.f32.gmra.mrb[0].mxu0 %v1075
    %v1174 = vpop.f32.mrb[0].mxu0
    %v1175 = vadd.f32 0.0, %v1174
    %v1176 = vpop.f32.mrb[0].mxu0
    %1177 = vmatprep.mubr.f32.mxu0 0.0
    %1178 = vmatmul.mubr.f32.gmra.mrb[0].mxu0 %v1078
    %v1179 = vpop.f32.mrb[0].mxu0
    %v1180 = vadd.f32 0.0, %v1179
    %v1181 = vpop.f32.mrb[0].mxu0
    %1182 = vmatprep.mubr.f32.mxu0 0.0
    %1183 = vmatmul.mubr.f32.gmra.mrb[0].mxu0 %v1081
    %v1184 = vpop.f32.mrb[0].mxu0
    %v1185 = vadd.f32 0.0, %v1184
    %v1186 = vpop.f32.mrb[0].mxu0
    %1187 = vdwg.mxu0
    %v1188 = vmul.f32 %v1150, %v674
    %v1189 = vmul.f32 %v1155, %v675
    %v1190 = vmul.f32 %v1160, %v676
    %v1191 = vmul.f32 %v1165, %v677
    %v1192 = vmul.f32 %v1170, %v678
    %v1193 = vmul.f32 %v1175, %v679
    %v1194 = vmul.f32 %v1180, %v680
    %v1195 = vmul.f32 %v1185, %v681
    %vm1196 = vcmask 523264
    %v1198 = vsel %vm1196, %v687, 0
    %v1201 = vsel %vm1196, %v688, 0
    %1203 = vmatprep.subr.mxu0 0.0
    %1204 = vmatpush1.msra.mxu0 %v1188
    %1205 = vmatprep.subr.mxu0 0.0
    %1206 = vmatpush1.msra.mxu0 %v1189
    %1207 = vmatprep.subr.mxu0 0.0
    %1208 = vmatpush1.msra.mxu0 %v1190
    %1209 = vmatprep.subr.mxu0 0.0
    %1210 = vmatpush1.msra.mxu0 %v1191
    %1211 = vmatprep.subr.mxu0 0.0
    %1212 = vmatpush1.msra.mxu0 %v1192
    %1213 = vmatprep.subr.mxu0 0.0
    %1214 = vmatpush1.msra.mxu0 %v1193
    %1215 = vmatprep.subr.mxu0 0.0
    %1216 = vmatpush1.msra.mxu0 %v1194
    %1217 = vmatprep.subr.mxu0 0.0
    %1218 = vmatpush1.msra.mxu0 %v1195
    %1219 = vmatprep.subr.mxu0 0.0
    %1220 = vmatpush1.msra.mxu0 0.0
    %1221 = vmatprep.subr.mxu0 0.0
    %1222 = vmatpush1.msra.mxu0 0.0
    %1223 = vmatprep.subr.mxu0 0.0
    %1224 = vmatpush1.msra.mxu0 0.0
    %1225 = vmatprep.subr.mxu0 0.0
    %1226 = vmatpush1.msra.mxu0 0.0
    %1227 = vmatprep.subr.mxu0 0.0
    %1228 = vmatpush1.msra.mxu0 0.0
    %1229 = vmatprep.subr.mxu0 0.0
    %1230 = vmatpush1.msra.mxu0 0.0
    %1231 = vmatprep.subr.mxu0 0.0
    %1232 = vmatpush1.msra.mxu0 0.0
    %1233 = vmatprep.subr.mxu0 0.0
    %1234 = vmatpush1.msra.mxu0 0.0
    %1235 = vmatprep.subr.mxu0 0.0
    %1236 = vmatpush1.msra.mxu0 0.0
    %1237 = vmatprep.subr.mxu0 0.0
    %1238 = vmatpush1.msra.mxu0 0.0
    %1239 = vmatprep.subr.mxu0 0.0
    %1240 = vmatpush1.msra.mxu0 0.0
    %1241 = vmatprep.subr.mxu0 0.0
    %1242 = vmatpush1.msra.mxu0 0.0
    %1243 = vmatprep.subr.mxu0 0.0
    %1244 = vmatpush1.msra.mxu0 0.0
    %1245 = vmatprep.subr.mxu0 0.0
    %1246 = vmatpush1.msra.mxu0 0.0
    %1247 = vmatprep.subr.mxu0 0.0
    %1248 = vmatpush1.msra.mxu0 0.0
    %1249 = vmatprep.subr.mxu0 0.0
    %1250 = vmatpush1.msra.mxu0 0.0
    %1251 = vmatprep.subr.mxu0 0.0
    %1252 = vmatpush1.msra.mxu0 0.0
    %1253 = vmatprep.subr.mxu0 0.0
    %1254 = vmatpush1.msra.mxu0 0.0
    %1255 = vmatprep.subr.mxu0 0.0
    %1256 = vmatpush1.msra.mxu0 0.0
    %1257 = vmatprep.subr.mxu0 0.0
    %1258 = vmatpush1.msra.mxu0 0.0
    %1259 = vmatprep.subr.mxu0 0.0
    %1260 = vmatpush1.msra.mxu0 0.0
    %1261 = vmatprep.subr.mxu0 0.0
    %1262 = vmatpush1.msra.mxu0 0.0
    %1263 = vmatprep.subr.mxu0 0.0
    %1264 = vmatpush1.msra.mxu0 0.0
    %1265 = vmatprep.subr.mxu0 0.0
    %1266 = vmatpush1.msra.mxu0 0.0
    %1267 = vmatprep.mubr.f32.mxu0 0.0
    %1268 = vmatmul.mubr.f32.gmra.mrb[0].mxu0 %v1198
    %v1269 = vpop.f32.mrb[0].mxu0
    %v1270 = vadd.f32 0.0, %v1269
    %v1271 = vpop.f32.mrb[0].mxu0
    %1272 = vmatprep.mubr.f32.mxu0 0.0
    %1273 = vmatmul.mubr.f32.gmra.mrb[0].mxu0 %v1201
    %v1274 = vpop.f32.mrb[0].mxu0
    %v1275 = vadd.f32 0.0, %v1274
    %v1276 = vpop.f32.mrb[0].mxu0
    %1277 = vdwg.mxu0
    %v1278 = vld [vmem:[#allocation5 + $0x90] sm:$0xff]
    %v1279 = vld [vmem:[#allocation5 + $0x98] sm:$0xff]
    %v1280 = vld [vmem:[#allocation5 + $0xc4] sm:$0x1]
    %v1281 = vlaneseq
    %v1282 = vshrl.u32 %v1281, 7
    %v1283 = vsub.s32 0, %v1282
    %v1284 = vrot.slane %v1280, %v1283
    %v1286 = vsel %vm73, %v1270, 0
    %v1289 = vsel %vm73, %v1275, 0
    %1291 = vmatprep.subr.mxu0 0.0
    %1292 = vmatpush1.msra.mxu0 %v1278
    %1293 = vmatprep.subr.mxu0 0.0
    %1294 = vmatpush1.msra.mxu0 %v1279
    %1295 = vmatprep.subr.mxu0 0.0
    %1296 = vmatpush1.msra.mxu0 0.0
    %1297 = vmatprep.subr.mxu0 0.0
    %1298 = vmatpush1.msra.mxu0 0.0
    %1299 = vmatprep.subr.mxu0 0.0
    %1300 = vmatpush1.msra.mxu0 0.0
    %1301 = vmatprep.subr.mxu0 0.0
    %1302 = vmatpush1.msra.mxu0 0.0
    %1303 = vmatprep.subr.mxu0 0.0
    %1304 = vmatpush1.msra.mxu0 0.0
    %1305 = vmatprep.subr.mxu0 0.0
    %1306 = vmatpush1.msra.mxu0 0.0
    %1307 = vmatprep.subr.mxu0 0.0
    %1308 = vmatpush1.msra.mxu0 0.0
    %1309 = vmatprep.subr.mxu0 0.0
    %1310 = vmatpush1.msra.mxu0 0.0
    %1311 = vmatprep.subr.mxu0 0.0
    %1312 = vmatpush1.msra.mxu0 0.0
    %1313 = vmatprep.subr.mxu0 0.0
    %1314 = vmatpush1.msra.mxu0 0.0
    %1315 = vmatprep.subr.mxu0 0.0
    %1316 = vmatpush1.msra.mxu0 0.0
    %1317 = vmatprep.subr.mxu0 0.0
    %1318 = vmatpush1.msra.mxu0 0.0
    %1319 = vmatprep.subr.mxu0 0.0
    %1320 = vmatpush1.msra.mxu0 0.0
    %1321 = vmatprep.subr.mxu0 0.0
    %1322 = vmatpush1.msra.mxu0 0.0
    %1323 = vmatprep.subr.mxu0 0.0
    %1324 = vmatpush1.msra.mxu0 0.0
    %1325 = vmatprep.subr.mxu0 0.0
    %1326 = vmatpush1.msra.mxu0 0.0
    %1327 = vmatprep.subr.mxu0 0.0
    %1328 = vmatpush1.msra.mxu0 0.0
    %1329 = vmatprep.subr.mxu0 0.0
    %1330 = vmatpush1.msra.mxu0 0.0
    %1331 = vmatprep.subr.mxu0 0.0
    %1332 = vmatpush1.msra.mxu0 0.0
    %1333 = vmatprep.subr.mxu0 0.0
    %1334 = vmatpush1.msra.mxu0 0.0
    %1335 = vmatprep.subr.mxu0 0.0
    %1336 = vmatpush1.msra.mxu0 0.0
    %1337 = vmatprep.subr.mxu0 0.0
    %1338 = vmatpush1.msra.mxu0 0.0
    %1339 = vmatprep.subr.mxu0 0.0
    %1340 = vmatpush1.msra.mxu0 0.0
    %1341 = vmatprep.subr.mxu0 0.0
    %1342 = vmatpush1.msra.mxu0 0.0
    %1343 = vmatprep.subr.mxu0 0.0
    %1344 = vmatpush1.msra.mxu0 0.0
    %1345 = vmatprep.subr.mxu0 0.0
    %1346 = vmatpush1.msra.mxu0 0.0
    %1347 = vmatprep.subr.mxu0 0.0
    %1348 = vmatpush1.msra.mxu0 0.0
    %1349 = vmatprep.subr.mxu0 0.0
    %1350 = vmatpush1.msra.mxu0 0.0
    %1351 = vmatprep.subr.mxu0 0.0
    %1352 = vmatpush1.msra.mxu0 0.0
    %1353 = vmatprep.subr.mxu0 0.0
    %1354 = vmatpush1.msra.mxu0 0.0
    %1355 = vmatprep.mubr.f32.mxu0 0.0
    %1356 = vmatmul.mubr.f32.gmra.mrb[0].mxu0 %v1286
    %v1357 = vpop.f32.mrb[0].mxu0
    %v1358 = vadd.f32 %v1284, %v1357
    %v1359 = vpop.f32.mrb[0].mxu0
    %1360 = vmatprep.mubr.f32.mxu0 0.0
    %1361 = vmatmul.mubr.f32.gmra.mrb[0].mxu0 %v1289
    %v1362 = vpop.f32.mrb[0].mxu0
    %v1363 = vadd.f32 %v1284, %v1362
    %v1364 = vpop.f32.mrb[0].mxu0
    %1365 = vdwg.mxu0
    %v1366 = vsel %vm73, %v1358, 0.0
    %1367 = vadd.xlane.f32.xlu0 %v1366
    %v1368 = vpop.xlane.xlu0 %1367
    %v1369 = vsel %vm73, %v1363, 0.0
    %1370 = vadd.xlane.f32.xlu0 %v1369
    %v1371 = vpop.xlane.xlu0 %1370
    %v1372 = vrcp.pop 16.0
    %v1373 = vmul.f32 %v1368, %v1372
    %v1374 = vmul.f32 %v1371, %v1372
    %v1375 = vsub.f32 %v1358, %v1373
    %v1376 = vsub.f32 %v1363, %v1374
    %v1377 = vmul.f32 %v1375, %v1375
    %v1378 = vmul.f32 %v1376, %v1376
    %v1379 = vsel %vm73, %v1377, 0.0
    %1380 = vadd.xlane.f32.xlu0 %v1379
    %v1381 = vpop.xlane.xlu0 %1380
    %v1382 = vsel %vm73, %v1378, 0.0
    %1383 = vadd.xlane.f32.xlu0 %v1382
    %v1384 = vpop.xlane.xlu0 %1383
    %v1385 = vmul.f32 %v1381, %v1372
    %v1386 = vmul.f32 %v1384, %v1372
    %v1387 = vadd.f32 %v1385, 1e-05
    %v1388 = vadd.f32 %v1386, 1e-05
    %v1389 = vrsqrt.pop %v1387
    %v1390 = vrsqrt.pop %v1388
    %v1391 = vmul.f32 %v1375, %v1389
    %v1392 = vmul.f32 %v1376, %v1390
    %v1393 = vld [vmem:[#allocation5 + $0xc5] sm:$0x1]
    %v1394 = vlaneseq
    %v1395 = vshrl.u32 %v1394, 7
    %v1396 = vsub.s32 0, %v1395
    %v1397 = vrot.slane %v1393, %v1396
    %v1398 = vmul.f32 %v1391, %v1397
    %v1399 = vmul.f32 %v1392, %v1397
    %v1400 = vld [vmem:[#allocation5 + $0xc6] sm:$0x1]
    %v1401 = vlaneseq
    %v1402 = vshrl.u32 %v1401, 7
    %v1403 = vsub.s32 0, %v1402
    %v1404 = vrot.slane %v1400, %v1403
    %v1405 = vadd.f32 %v1398, %v1404
    %v1406 = vadd.f32 %v1399, %v1404
    %v1407 = vadd.f32 %v496, %v1405
    %v1408 = vadd.f32 %v497, %v1406
    %v1409 = vld [vmem:[#allocation5] sm:$0xff]
    %v1410 = vld [vmem:[#allocation5 + $0x8] sm:$0xff]
    %v1411 = vld [vmem:[#allocation5 + $0x10] sm:$0xff]
    %v1412 = vld [vmem:[#allocation5 + $0x18] sm:$0xff]
    %v1413 = vld [vmem:[#allocation5 + $0x20] sm:$0xff]
    %v1414 = vld [vmem:[#allocation5 + $0x28] sm:$0xff]
    %v1415 = vld [vmem:[#allocation5 + $0xc0] sm:$0x1]
    %v1416 = vlaneseq
    %v1417 = vshrl.u32 %v1416, 7
    %v1418 = vsub.s32 0, %v1417
    %v1419 = vrot.slane %v1415, %v1418
    %v1421 = vsel %vm73, %v1407, 0
    %v1424 = vsel %vm73, %v1408, 0
    %1426 = vmatprep.subr.mxu0 0.0
    %1427 = vmatpush1.msra.mxu0 %v1409
    %1428 = vmatprep.subr.mxu0 0.0
    %1429 = vmatpush1.msra.mxu0 %v1410
    %1430 = vmatprep.subr.mxu0 0.0
    %1431 = vmatpush1.msra.mxu0 0.0
    %1432 = vmatprep.subr.mxu0 0.0
    %1433 = vmatpush1.msra.mxu0 0.0
    %1434 = vmatprep.subr.mxu0 0.0
    %1435 = vmatpush1.msra.mxu0 0.0
    %1436 = vmatprep.subr.mxu0 0.0
    %1437 = vmatpush1.msra.mxu0 0.0
    %1438 = vmatprep.subr.mxu0 0.0
    %1439 = vmatpush1.msra.mxu0 0.0
    %1440 = vmatprep.subr.mxu0 0.0
    %1441 = vmatpush1.msra.mxu0 0.0
    %1442 = vmatprep.subr.mxu0 0.0
    %1443 = vmatpush1.msra.mxu0 0.0
    %1444 = vmatprep.subr.mxu0 0.0
    %1445 = vmatpush1.msra.mxu0 0.0
    %1446 = vmatprep.subr.mxu0 0.0
    %1447 = vmatpush1.msra.mxu0 0.0
    %1448 = vmatprep.subr.mxu0 0.0
    %1449 = vmatpush1.msra.mxu0 0.0
    %1450 = vmatprep.subr.mxu0 0.0
    %1451 = vmatpush1.msra.mxu0 0.0
    %1452 = vmatprep.subr.mxu0 0.0
    %1453 = vmatpush1.msra.mxu0 0.0
    %1454 = vmatprep.subr.mxu0 0.0
    %1455 = vmatpush1.msra.mxu0 0.0
    %1456 = vmatprep.subr.mxu0 0.0
    %1457 = vmatpush1.msra.mxu0 0.0
    %1458 = vmatprep.subr.mxu0 0.0
    %1459 = vmatpush1.msra.mxu0 0.0
    %1460 = vmatprep.subr.mxu0 0.0
    %1461 = vmatpush1.msra.mxu0 0.0
    %1462 = vmatprep.subr.mxu0 0.0
    %1463 = vmatpush1.msra.mxu0 0.0
    %1464 = vmatprep.subr.mxu0 0.0
    %1465 = vmatpush1.msra.mxu0 0.0
    %1466 = vmatprep.subr.mxu0 0.0
    %1467 = vmatpush1.msra.mxu0 0.0
    %1468 = vmatprep.subr.mxu0 0.0
    %1469 = vmatpush1.msra.mxu0 0.0
    %1470 = vmatprep.subr.mxu0 0.0
    %1471 = vmatpush1.msra.mxu0 0.0
    %1472 = vmatprep.subr.mxu0 0.0
    %1473 = vmatpush1.msra.mxu0 0.0
    %1474 = vmatprep.subr.mxu0 0.0
    %1475 = vmatpush1.msra.mxu0 0.0
    %1476 = vmatprep.subr.mxu0 0.0
    %1477 = vmatpush1.msra.mxu0 0.0
    %1478 = vmatprep.subr.mxu0 0.0
    %1479 = vmatpush1.msra.mxu0 0.0
    %1480 = vmatprep.subr.mxu0 0.0
    %1481 = vmatpush1.msra.mxu0 0.0
    %1482 = vmatprep.subr.mxu0 0.0
    %1483 = vmatpush1.msra.mxu0 0.0
    %1484 = vmatprep.subr.mxu0 0.0
    %1485 = vmatpush1.msra.mxu0 0.0
    %1486 = vmatprep.subr.mxu0 0.0
    %1487 = vmatpush1.msra.mxu0 0.0
    %1488 = vmatprep.subr.mxu0 0.0
    %1489 = vmatpush1.msra.mxu0 0.0
    %1490 = vmatprep.mubr.f32.mxu0 0.0
    %1491 = vmatmul.mubr.f32.gmra.mrb[0].mxu0 %v1421
    %v1492 = vpop.f32.mrb[0].mxu0
    %v1493 = vadd.f32 %v1419, %v1492
    %v1494 = vpop.f32.mrb[0].mxu0
    %1495 = vmatprep.mubr.f32.mxu0 0.0
    %1496 = vmatmul.mubr.f32.gmra.mrb[0].mxu0 %v1424
    %v1497 = vpop.f32.mrb[0].mxu0
    %v1498 = vadd.f32 %v1419, %v1497
    %v1499 = vpop.f32.mrb[0].mxu0
    %1500 = vdwg.mxu0
    %v1501 = vshra.s32 %v46, 4
    %v1502 = vand.u32 %v1501, 1
    %vm1503 = vcmp.eq.s32.totalorder %v1502, 0
    %v1504 = vand.u32 %v43, 1
    %v1505 = vand.u32 %v44, 1
    %v1506 = vshra.s32 %v43, 1
    %v1507 = vshra.s32 %v44, 1
    %v1508 = vmul.u32 %v1504, 8
    %v1509 = vmul.u32 %v1505, 8
    %v1510 = vadd.s32 %v1508, %v1506
    %v1511 = vadd.s32 %v1509, %v1507
    %vm1512 = vcmp.eq.s32.totalorder %v46, %v1510
    %vm1513 = vcmp.eq.s32.totalorder %v46, %v1511
    %v1514 = vsel %vm1512, 1, 0
    %v1515 = vsel %vm1513, 1, 0
    %v1516 = vcvt.s32.f32 %v1514
    %v1517 = vcvt.s32.f32 %v1515
    %v1518 = vsub.s32 7, %v1506
    %v1519 = vsub.s32 7, %v1507
    %v1520 = vadd.s32 %v1508, %v1518
    %v1521 = vadd.s32 %v1509, %v1519
    %vm1522 = vcmp.eq.s32.totalorder %v46, %v1520
    %vm1523 = vcmp.eq.s32.totalorder %v46, %v1521
    %v1524 = vsel %vm1522, 1, 0
    %v1525 = vsel %vm1523, 1, 0
    %v1526 = vcvt.s32.f32 %v1524
    %v1527 = vcvt.s32.f32 %v1525
    %v1528 = vsel %vm1503, %v1493, 0.0
    %v1529 = vsel %vm1503, %v1498, 0.0
    %v1530 = vsel %vm1503, 0.0, %v1493
    %v1531 = vsel %vm1503, 0.0, %v1498
    %v1533 = vsel %vm73, %v1526, 0
    %v1536 = vsel %vm73, %v1527, 0
    %1538 = vmatprep.subr.mxu0 0.0
    %1539 = vmatpush1.msra.mxu0 %v1530
    %1540 = vmatprep.subr.mxu0 0.0
    %1541 = vmatpush1.msra.mxu0 %v1531
    %1542 = vmatprep.subr.mxu0 0.0
    %1543 = vmatpush1.msra.mxu0 0.0
    %1544 = vmatprep.subr.mxu0 0.0
    %1545 = vmatpush1.msra.mxu0 0.0
    %1546 = vmatprep.subr.mxu0 0.0
    %1547 = vmatpush1.msra.mxu0 0.0
    %1548 = vmatprep.subr.mxu0 0.0
    %1549 = vmatpush1.msra.mxu0 0.0
    %1550 = vmatprep.subr.mxu0 0.0
    %1551 = vmatpush1.msra.mxu0 0.0
    %1552 = vmatprep.subr.mxu0 0.0
    %1553 = vmatpush1.msra.mxu0 0.0
    %1554 = vmatprep.subr.mxu0 0.0
    %1555 = vmatpush1.msra.mxu0 0.0
    %1556 = vmatprep.subr.mxu0 0.0
    %1557 = vmatpush1.msra.mxu0 0.0
    %1558 = vmatprep.subr.mxu0 0.0
    %1559 = vmatpush1.msra.mxu0 0.0
    %1560 = vmatprep.subr.mxu0 0.0
    %1561 = vmatpush1.msra.mxu0 0.0
    %1562 = vmatprep.subr.mxu0 0.0
    %1563 = vmatpush1.msra.mxu0 0.0
    %1564 = vmatprep.subr.mxu0 0.0
    %1565 = vmatpush1.msra.mxu0 0.0
    %1566 = vmatprep.subr.mxu0 0.0
    %1567 = vmatpush1.msra.mxu0 0.0
    %1568 = vmatprep.subr.mxu0 0.0
    %1569 = vmatpush1.msra.mxu0 0.0
    %1570 = vmatprep.subr.mxu0 0.0
    %1571 = vmatpush1.msra.mxu0 0.0
    %1572 = vmatprep.subr.mxu0 0.0
    %1573 = vmatpush1.msra.mxu0 0.0
    %1574 = vmatprep.subr.mxu0 0.0
    %1575 = vmatpush1.msra.mxu0 0.0
    %1576 = vmatprep.subr.mxu0 0.0
    %1577 = vmatpush1.msra.mxu0 0.0
    %1578 = vmatprep.subr.mxu0 0.0
    %1579 = vmatpush1.msra.mxu0 0.0
    %1580 = vmatprep.subr.mxu0 0.0
    %1581 = vmatpush1.msra.mxu0 0.0
    %1582 = vmatprep.subr.mxu0 0.0
    %1583 = vmatpush1.msra.mxu0 0.0
    %1584 = vmatprep.subr.mxu0 0.0
    %1585 = vmatpush1.msra.mxu0 0.0
    %1586 = vmatprep.subr.mxu0 0.0
    %1587 = vmatpush1.msra.mxu0 0.0
    %1588 = vmatprep.subr.mxu0 0.0
    %1589 = vmatpush1.msra.mxu0 0.0
    %1590 = vmatprep.subr.mxu0 0.0
    %1591 = vmatpush1.msra.mxu0 0.0
    %1592 = vmatprep.subr.mxu0 0.0
    %1593 = vmatpush1.msra.mxu0 0.0
    %1594 = vmatprep.subr.mxu0 0.0
    %1595 = vmatpush1.msra.mxu0 0.0
    %1596 = vmatprep.subr.mxu0 0.0
    %1597 = vmatpush1.msra.mxu0 0.0
    %1598 = vmatprep.subr.mxu0 0.0
    %1599 = vmatpush1.msra.mxu0 0.0
    %1600 = vmatprep.subr.mxu0 0.0
    %1601 = vmatpush1.msra.mxu0 0.0
    %1602 = vmatprep.mubr.f32.mxu0 0.0
    %1603 = vmatmul.mubr.f32.gmra.mrb[0].mxu0 %v1533
    %v1604 = vpop.f32.mrb[0].mxu0
    %v1605 = vadd.f32 0.0, %v1604
    %v1606 = vpop.f32.mrb[0].mxu0
    %1607 = vmatprep.mubr.f32.mxu0 0.0
    %1608 = vmatmul.mubr.f32.gmra.mrb[0].mxu0 %v1536
    %v1609 = vpop.f32.mrb[0].mxu0
    %v1610 = vadd.f32 0.0, %v1609
    %v1611 = vpop.f32.mrb[0].mxu0
    %1612 = vdwg.mxu0
    %v1614 = vsel %vm73, %v1516, 0
    %v1617 = vsel %vm73, %v1517, 0
    %1619 = vmatprep.subr.mxu0 0.0
    %1620 = vmatpush1.msra.mxu0 %v1528
    %1621 = vmatprep.subr.mxu0 0.0
    %1622 = vmatpush1.msra.mxu0 %v1529
    %1623 = vmatprep.subr.mxu0 0.0
    %1624 = vmatpush1.msra.mxu0 0.0
    %1625 = vmatprep.subr.mxu0 0.0
    %1626 = vmatpush1.msra.mxu0 0.0
    %1627 = vmatprep.subr.mxu0 0.0
    %1628 = vmatpush1.msra.mxu0 0.0
    %1629 = vmatprep.subr.mxu0 0.0
    %1630 = vmatpush1.msra.mxu0 0.0
    %1631 = vmatprep.subr.mxu0 0.0
    %1632 = vmatpush1.msra.mxu0 0.0
    %1633 = vmatprep.subr.mxu0 0.0
    %1634 = vmatpush1.msra.mxu0 0.0
    %1635 = vmatprep.subr.mxu0 0.0
    %1636 = vmatpush1.msra.mxu0 0.0
    %1637 = vmatprep.subr.mxu0 0.0
    %1638 = vmatpush1.msra.mxu0 0.0
    %1639 = vmatprep.subr.mxu0 0.0
    %1640 = vmatpush1.msra.mxu0 0.0
    %1641 = vmatprep.subr.mxu0 0.0
    %1642 = vmatpush1.msra.mxu0 0.0
    %1643 = vmatprep.subr.mxu0 0.0
    %1644 = vmatpush1.msra.mxu0 0.0
    %1645 = vmatprep.subr.mxu0 0.0
    %1646 = vmatpush1.msra.mxu0 0.0
    %1647 = vmatprep.subr.mxu0 0.0
    %1648 = vmatpush1.msra.mxu0 0.0
    %1649 = vmatprep.subr.mxu0 0.0
    %1650 = vmatpush1.msra.mxu0 0.0
    %1651 = vmatprep.subr.mxu0 0.0
    %1652 = vmatpush1.msra.mxu0 0.0
    %1653 = vmatprep.subr.mxu0 0.0
    %1654 = vmatpush1.msra.mxu0 0.0
    %1655 = vmatprep.subr.mxu0 0.0
    %1656 = vmatpush1.msra.mxu0 0.0
    %1657 = vmatprep.subr.mxu0 0.0
    %1658 = vmatpush1.msra.mxu0 0.0
    %1659 = vmatprep.subr.mxu0 0.0
    %1660 = vmatpush1.msra.mxu0 0.0
    %1661 = vmatprep.subr.mxu0 0.0
    %1662 = vmatpush1.msra.mxu0 0.0
    %1663 = vmatprep.subr.mxu0 0.0
    %1664 = vmatpush1.msra.mxu0 0.0
    %1665 = vmatprep.subr.mxu0 0.0
    %1666 = vmatpush1.msra.mxu0 0.0
    %1667 = vmatprep.subr.mxu0 0.0
    %1668 = vmatpush1.msra.mxu0 0.0
    %1669 = vmatprep.subr.mxu0 0.0
    %1670 = vmatpush1.msra.mxu0 0.0
    %1671 = vmatprep.subr.mxu0 0.0
    %1672 = vmatpush1.msra.mxu0 0.0
    %1673 = vmatprep.subr.mxu0 0.0
    %1674 = vmatpush1.msra.mxu0 0.0
    %1675 = vmatprep.subr.mxu0 0.0
    %1676 = vmatpush1.msra.mxu0 0.0
    %1677 = vmatprep.subr.mxu0 0.0
    %1678 = vmatpush1.msra.mxu0 0.0
    %1679 = vmatprep.subr.mxu0 0.0
    %1680 = vmatpush1.msra.mxu0 0.0
    %1681 = vmatprep.subr.mxu0 0.0
    %1682 = vmatpush1.msra.mxu0 0.0
    %1683 = vmatprep.mubr.f32.mxu0 0.0
    %1684 = vmatmul.mubr.f32.gmra.mrb[0].mxu0 %v1614
    %v1685 = vpop.f32.mrb[0].mxu0
    %v1686 = vadd.f32 %v1605, %v1685
    %v1687 = vpop.f32.mrb[0].mxu0
    %1688 = vmatprep.mubr.f32.mxu0 0.0
    %1689 = vmatmul.mubr.f32.gmra.mrb[0].mxu0 %v1617
    %v1690 = vpop.f32.mrb[0].mxu0
    %v1691 = vadd.f32 %v1610, %v1690
    %v1692 = vpop.f32.mrb[0].mxu0
    %1693 = vdwg.mxu0
    %vm1694 = vcmp.ge.s32.totalorder %v46, 64
    %vm1695 = vcmp.lt.s32.totalorder %v46, 96
    %vm1696 = vmand %vm1694, %vm1695
    %v1697 = vsel %vm1696, 1.0, 0.5
    %v1698 = vmul.f32 %v1686, %v1697
    %v1699 = vtanh.pop %v1698
    %v1700 = vmul.f32 %v1699, 0.5
    %v1701 = vadd.f32 %v1700, 0.5
    %v1702 = vsel %vm1696, %v1699, %v1701
    %v1703 = vmul.f32 %v1702, 0.0
    %1705 = vrot.lane.b32.xlu0 %v1702, 64
    %v1706 = vpop.permute.xlu0 %1705
    %v1708 = vmul.f32 %v1702, %v1706
    %1710 = vrot.lane.b32.xlu0 %v1708, 32
    %v1711 = vpop.permute.xlu0 %1710
    %v1713 = vadd.f32 %v1703, %v1711
    %v1714 = vtanh.pop %v1713
    %1716 = vrot.lane.b32.xlu0 %v1714, 64
    %v1717 = vpop.permute.xlu0 %1716
    %v1719 = vmul.f32 %v1702, %v1717
    %v1720 = vmax.f32 %v1719, 0.0
    %1722 = vrot.lane.b32.xlu0 %v1719, 32
    %v1723 = vpop.permute.xlu0 %1722
    %vm1724 = vcmask 261120
    %v1725 = vsel %vm1724, %v1723, 0
    %1727 = vmatprep.subr.mxu0 0.0
    %1728 = vmatpush1.msra.mxu0 %v1411
    %1729 = vmatprep.subr.mxu0 0.0
    %1730 = vmatpush1.msra.mxu0 %v1412
    %1731 = vmatprep.subr.mxu0 0.0
    %1732 = vmatpush1.msra.mxu0 %v1413
    %1733 = vmatprep.subr.mxu0 0.0
    %1734 = vmatpush1.msra.mxu0 %v1414
    %1735 = vmatprep.subr.mxu0 0.0
    %1736 = vmatpush1.msra.mxu0 0.0
    %1737 = vmatprep.subr.mxu0 0.0
    %1738 = vmatpush1.msra.mxu0 0.0
    %1739 = vmatprep.subr.mxu0 0.0
    %1740 = vmatpush1.msra.mxu0 0.0
    %1741 = vmatprep.subr.mxu0 0.0
    %1742 = vmatpush1.msra.mxu0 0.0
    %1743 = vmatprep.subr.mxu0 0.0
    %1744 = vmatpush1.msra.mxu0 0.0
    %1745 = vmatprep.subr.mxu0 0.0
    %1746 = vmatpush1.msra.mxu0 0.0
    %1747 = vmatprep.subr.mxu0 0.0
    %1748 = vmatpush1.msra.mxu0 0.0
    %1749 = vmatprep.subr.mxu0 0.0
    %1750 = vmatpush1.msra.mxu0 0.0
    %1751 = vmatprep.subr.mxu0 0.0
    %1752 = vmatpush1.msra.mxu0 0.0
    %1753 = vmatprep.subr.mxu0 0.0
    %1754 = vmatpush1.msra.mxu0 0.0
    %1755 = vmatprep.subr.mxu0 0.0
    %1756 = vmatpush1.msra.mxu0 0.0
    %1757 = vmatprep.subr.mxu0 0.0
    %1758 = vmatpush1.msra.mxu0 0.0
    %1759 = vmatprep.subr.mxu0 0.0
    %1760 = vmatpush1.msra.mxu0 0.0
    %1761 = vmatprep.subr.mxu0 0.0
    %1762 = vmatpush1.msra.mxu0 0.0
    %1763 = vmatprep.subr.mxu0 0.0
    %1764 = vmatpush1.msra.mxu0 0.0
    %1765 = vmatprep.subr.mxu0 0.0
    %1766 = vmatpush1.msra.mxu0 0.0
    %1767 = vmatprep.subr.mxu0 0.0
    %1768 = vmatpush1.msra.mxu0 0.0
    %1769 = vmatprep.subr.mxu0 0.0
    %1770 = vmatpush1.msra.mxu0 0.0
    %1771 = vmatprep.subr.mxu0 0.0
    %1772 = vmatpush1.msra.mxu0 0.0
    %1773 = vmatprep.subr.mxu0 0.0
    %1774 = vmatpush1.msra.mxu0 0.0
    %1775 = vmatprep.subr.mxu0 0.0
    %1776 = vmatpush1.msra.mxu0 0.0
    %1777 = vmatprep.subr.mxu0 0.0
    %1778 = vmatpush1.msra.mxu0 0.0
    %1779 = vmatprep.subr.mxu0 0.0
    %1780 = vmatpush1.msra.mxu0 0.0
    %1781 = vmatprep.subr.mxu0 0.0
    %1782 = vmatpush1.msra.mxu0 0.0
    %1783 = vmatprep.subr.mxu0 0.0
    %1784 = vmatpush1.msra.mxu0 0.0
    %1785 = vmatprep.subr.mxu0 0.0
    %1786 = vmatpush1.msra.mxu0 0.0
    %1787 = vmatprep.subr.mxu0 0.0
    %1788 = vmatpush1.msra.mxu0 0.0
    %1789 = vmatprep.subr.mxu0 0.0
    %1790 = vmatpush1.msra.mxu0 0.0
    %1791 = vmatprep.mubr.f32.mxu0 0.0
    %1792 = vmatmul.mubr.f32.gmra.mrb[0].mxu0 %v1725
    %v1793 = vpop.f32.mrb[0].mxu0
    %v1794 = vadd.f32 0.0, %v1793
    %v1795 = vpop.f32.mrb[0].mxu0
    %1796 = vdwg.mxu0
    %v1798 = vrot.slane %v1794, 6
    %v1800 = vadd.f32 %v1686, %v1798
    %v1801 = vmul.f32 %v1800, %v1697
    %v1802 = vtanh.pop %v1801
    %v1803 = vmul.f32 %v1802, 0.5
    %v1804 = vadd.f32 %v1803, 0.5
    %v1805 = vsel %vm1696, %v1802, %v1804
    %v1807 = vrot.slane %v1713, 6
    %v1809 = vmul.f32 %v1805, %v1807
    %1811 = vrot.lane.b32.xlu0 %v1805, 64
    %v1812 = vpop.permute.xlu0 %1811
    %v1814 = vmul.f32 %v1805, %v1812
    %1816 = vrot.lane.b32.xlu0 %v1814, 32
    %v1817 = vpop.permute.xlu0 %1816
    %v1819 = vadd.f32 %v1809, %v1817
    %v1820 = vtanh.pop %v1819
    %1822 = vrot.lane.b32.xlu0 %v1820, 64
    %v1823 = vpop.permute.xlu0 %1822
    %v1825 = vmul.f32 %v1805, %v1823
    %v1827 = vrot.slane %v1825, 2
    %v1829 = vmax.f32 %v1720, %v1827
    %1830 = vrot.lane.b32.xlu0 %v1827, 32
    %v1831 = vpop.permute.xlu0 %1830
    %v1832 = vsel %vm1724, %v1831, 0
    %1834 = vmatprep.subr.mxu0 0.0
    %1835 = vmatpush1.msra.mxu0 %v1411
    %1836 = vmatprep.subr.mxu0 0.0
    %1837 = vmatpush1.msra.mxu0 %v1412
    %1838 = vmatprep.subr.mxu0 0.0
    %1839 = vmatpush1.msra.mxu0 %v1413
    %1840 = vmatprep.subr.mxu0 0.0
    %1841 = vmatpush1.msra.mxu0 %v1414
    %1842 = vmatprep.subr.mxu0 0.0
    %1843 = vmatpush1.msra.mxu0 0.0
    %1844 = vmatprep.subr.mxu0 0.0
    %1845 = vmatpush1.msra.mxu0 0.0
    %1846 = vmatprep.subr.mxu0 0.0
    %1847 = vmatpush1.msra.mxu0 0.0
    %1848 = vmatprep.subr.mxu0 0.0
    %1849 = vmatpush1.msra.mxu0 0.0
    %1850 = vmatprep.subr.mxu0 0.0
    %1851 = vmatpush1.msra.mxu0 0.0
    %1852 = vmatprep.subr.mxu0 0.0
    %1853 = vmatpush1.msra.mxu0 0.0
    %1854 = vmatprep.subr.mxu0 0.0
    %1855 = vmatpush1.msra.mxu0 0.0
    %1856 = vmatprep.subr.mxu0 0.0
    %1857 = vmatpush1.msra.mxu0 0.0
    %1858 = vmatprep.subr.mxu0 0.0
    %1859 = vmatpush1.msra.mxu0 0.0
    %1860 = vmatprep.subr.mxu0 0.0
    %1861 = vmatpush1.msra.mxu0 0.0
    %1862 = vmatprep.subr.mxu0 0.0
    %1863 = vmatpush1.msra.mxu0 0.0
    %1864 = vmatprep.subr.mxu0 0.0
    %1865 = vmatpush1.msra.mxu0 0.0
    %1866 = vmatprep.subr.mxu0 0.0
    %1867 = vmatpush1.msra.mxu0 0.0
    %1868 = vmatprep.subr.mxu0 0.0
    %1869 = vmatpush1.msra.mxu0 0.0
    %1870 = vmatprep.subr.mxu0 0.0
    %1871 = vmatpush1.msra.mxu0 0.0
    %1872 = vmatprep.subr.mxu0 0.0
    %1873 = vmatpush1.msra.mxu0 0.0
    %1874 = vmatprep.subr.mxu0 0.0
    %1875 = vmatpush1.msra.mxu0 0.0
    %1876 = vmatprep.subr.mxu0 0.0
    %1877 = vmatpush1.msra.mxu0 0.0
    %1878 = vmatprep.subr.mxu0 0.0
    %1879 = vmatpush1.msra.mxu0 0.0
    %1880 = vmatprep.subr.mxu0 0.0
    %1881 = vmatpush1.msra.mxu0 0.0
    %1882 = vmatprep.subr.mxu0 0.0
    %1883 = vmatpush1.msra.mxu0 0.0
    %1884 = vmatprep.subr.mxu0 0.0
    %1885 = vmatpush1.msra.mxu0 0.0
    %1886 = vmatprep.subr.mxu0 0.0
    %1887 = vmatpush1.msra.mxu0 0.0
    %1888 = vmatprep.subr.mxu0 0.0
    %1889 = vmatpush1.msra.mxu0 0.0
    %1890 = vmatprep.subr.mxu0 0.0
    %1891 = vmatpush1.msra.mxu0 0.0
    %1892 = vmatprep.subr.mxu0 0.0
    %1893 = vmatpush1.msra.mxu0 0.0
    %1894 = vmatprep.subr.mxu0 0.0
    %1895 = vmatpush1.msra.mxu0 0.0
    %1896 = vmatprep.subr.mxu0 0.0
    %1897 = vmatpush1.msra.mxu0 0.0
    %1898 = vmatprep.mubr.f32.mxu0 0.0
    %1899 = vmatmul.mubr.f32.gmra.mrb[0].mxu0 %v1832
    %v1900 = vpop.f32.mrb[0].mxu0
    %v1901 = vadd.f32 0.0, %v1900
    %v1902 = vpop.f32.mrb[0].mxu0
    %1903 = vdwg.mxu0
    %v1905 = vrot.slane %v1901, 4
    %v1907 = vadd.f32 %v1686, %v1905
    %v1908 = vmul.f32 %v1907, %v1697
    %v1909 = vtanh.pop %v1908
    %v1910 = vmul.f32 %v1909, 0.5
    %v1911 = vadd.f32 %v1910, 0.5
    %v1912 = vsel %vm1696, %v1909, %v1911
    %v1914 = vrot.slane %v1819, 6
    %v1916 = vmul.f32 %v1912, %v1914
    %1918 = vrot.lane.b32.xlu0 %v1912, 64
    %v1919 = vpop.permute.xlu0 %1918
    %v1921 = vmul.f32 %v1912, %v1919
    %1923 = vrot.lane.b32.xlu0 %v1921, 32
    %v1924 = vpop.permute.xlu0 %1923
    %v1926 = vadd.f32 %v1916, %v1924
    %v1927 = vtanh.pop %v1926
    %1929 = vrot.lane.b32.xlu0 %v1927, 64
    %v1930 = vpop.permute.xlu0 %1929
    %v1932 = vmul.f32 %v1912, %v1930
    %v1934 = vrot.slane %v1932, 4
    %v1936 = vmax.f32 %v1829, %v1934
    %1937 = vrot.lane.b32.xlu0 %v1934, 32
    %v1938 = vpop.permute.xlu0 %1937
    %v1939 = vsel %vm1724, %v1938, 0
    %1941 = vmatprep.subr.mxu0 0.0
    %1942 = vmatpush1.msra.mxu0 %v1411
    %1943 = vmatprep.subr.mxu0 0.0
    %1944 = vmatpush1.msra.mxu0 %v1412
    %1945 = vmatprep.subr.mxu0 0.0
    %1946 = vmatpush1.msra.mxu0 %v1413
    %1947 = vmatprep.subr.mxu0 0.0
    %1948 = vmatpush1.msra.mxu0 %v1414
    %1949 = vmatprep.subr.mxu0 0.0
    %1950 = vmatpush1.msra.mxu0 0.0
    %1951 = vmatprep.subr.mxu0 0.0
    %1952 = vmatpush1.msra.mxu0 0.0
    %1953 = vmatprep.subr.mxu0 0.0
    %1954 = vmatpush1.msra.mxu0 0.0
    %1955 = vmatprep.subr.mxu0 0.0
    %1956 = vmatpush1.msra.mxu0 0.0
    %1957 = vmatprep.subr.mxu0 0.0
    %1958 = vmatpush1.msra.mxu0 0.0
    %1959 = vmatprep.subr.mxu0 0.0
    %1960 = vmatpush1.msra.mxu0 0.0
    %1961 = vmatprep.subr.mxu0 0.0
    %1962 = vmatpush1.msra.mxu0 0.0
    %1963 = vmatprep.subr.mxu0 0.0
    %1964 = vmatpush1.msra.mxu0 0.0
    %1965 = vmatprep.subr.mxu0 0.0
    %1966 = vmatpush1.msra.mxu0 0.0
    %1967 = vmatprep.subr.mxu0 0.0
    %1968 = vmatpush1.msra.mxu0 0.0
    %1969 = vmatprep.subr.mxu0 0.0
    %1970 = vmatpush1.msra.mxu0 0.0
    %1971 = vmatprep.subr.mxu0 0.0
    %1972 = vmatpush1.msra.mxu0 0.0
    %1973 = vmatprep.subr.mxu0 0.0
    %1974 = vmatpush1.msra.mxu0 0.0
    %1975 = vmatprep.subr.mxu0 0.0
    %1976 = vmatpush1.msra.mxu0 0.0
    %1977 = vmatprep.subr.mxu0 0.0
    %1978 = vmatpush1.msra.mxu0 0.0
    %1979 = vmatprep.subr.mxu0 0.0
    %1980 = vmatpush1.msra.mxu0 0.0
    %1981 = vmatprep.subr.mxu0 0.0
    %1982 = vmatpush1.msra.mxu0 0.0
    %1983 = vmatprep.subr.mxu0 0.0
    %1984 = vmatpush1.msra.mxu0 0.0
    %1985 = vmatprep.subr.mxu0 0.0
    %1986 = vmatpush1.msra.mxu0 0.0
    %1987 = vmatprep.subr.mxu0 0.0
    %1988 = vmatpush1.msra.mxu0 0.0
    %1989 = vmatprep.subr.mxu0 0.0
    %1990 = vmatpush1.msra.mxu0 0.0
    %1991 = vmatprep.subr.mxu0 0.0
    %1992 = vmatpush1.msra.mxu0 0.0
    %1993 = vmatprep.subr.mxu0 0.0
    %1994 = vmatpush1.msra.mxu0 0.0
    %1995 = vmatprep.subr.mxu0 0.0
    %1996 = vmatpush1.msra.mxu0 0.0
    %1997 = vmatprep.subr.mxu0 0.0
    %1998 = vmatpush1.msra.mxu0 0.0
    %1999 = vmatprep.subr.mxu0 0.0
    %2000 = vmatpush1.msra.mxu0 0.0
    %2001 = vmatprep.subr.mxu0 0.0
    %2002 = vmatpush1.msra.mxu0 0.0
    %2003 = vmatprep.subr.mxu0 0.0
    %2004 = vmatpush1.msra.mxu0 0.0
    %2005 = vmatprep.mubr.f32.mxu0 0.0
    %2006 = vmatmul.mubr.f32.gmra.mrb[0].mxu0 %v1939
    %v2007 = vpop.f32.mrb[0].mxu0
    %v2008 = vadd.f32 0.0, %v2007
    %v2009 = vpop.f32.mrb[0].mxu0
    %2010 = vdwg.mxu0
    %v2012 = vrot.slane %v2008, 2
    %v2014 = vadd.f32 %v1686, %v2012
    %v2015 = vmul.f32 %v2014, %v1697
    %v2016 = vtanh.pop %v2015
    %v2017 = vmul.f32 %v2016, 0.5
    %v2018 = vadd.f32 %v2017, 0.5
    %v2019 = vsel %vm1696, %v2016, %v2018
    %v2021 = vrot.slane %v1926, 6
    %v2023 = vmul.f32 %v2019, %v2021
    %2025 = vrot.lane.b32.xlu0 %v2019, 64
    %v2026 = vpop.permute.xlu0 %2025
    %v2028 = vmul.f32 %v2019, %v2026
    %2030 = vrot.lane.b32.xlu0 %v2028, 32
    %v2031 = vpop.permute.xlu0 %2030
    %v2033 = vadd.f32 %v2023, %v2031
    %v2034 = vtanh.pop %v2033
    %2036 = vrot.lane.b32.xlu0 %v2034, 64
    %v2037 = vpop.permute.xlu0 %2036
    %v2039 = vmul.f32 %v2019, %v2037
    %v2041 = vrot.slane %v2039, 6
    %v2043 = vmax.f32 %v1936, %v2041
    %2044 = vrot.lane.b32.xlu0 %v2041, 32
    %v2045 = vpop.permute.xlu0 %2044
    %v2046 = vsel %vm1724, %v2045, 0
    %2048 = vmatprep.subr.mxu0 0.0
    %2049 = vmatpush1.msra.mxu0 %v1411
    %2050 = vmatprep.subr.mxu0 0.0
    %2051 = vmatpush1.msra.mxu0 %v1412
    %2052 = vmatprep.subr.mxu0 0.0
    %2053 = vmatpush1.msra.mxu0 %v1413
    %2054 = vmatprep.subr.mxu0 0.0
    %2055 = vmatpush1.msra.mxu0 %v1414
    %2056 = vmatprep.subr.mxu0 0.0
    %2057 = vmatpush1.msra.mxu0 0.0
    %2058 = vmatprep.subr.mxu0 0.0
    %2059 = vmatpush1.msra.mxu0 0.0
    %2060 = vmatprep.subr.mxu0 0.0
    %2061 = vmatpush1.msra.mxu0 0.0
    %2062 = vmatprep.subr.mxu0 0.0
    %2063 = vmatpush1.msra.mxu0 0.0
    %2064 = vmatprep.subr.mxu0 0.0
    %2065 = vmatpush1.msra.mxu0 0.0
    %2066 = vmatprep.subr.mxu0 0.0
    %2067 = vmatpush1.msra.mxu0 0.0
    %2068 = vmatprep.subr.mxu0 0.0
    %2069 = vmatpush1.msra.mxu0 0.0
    %2070 = vmatprep.subr.mxu0 0.0
    %2071 = vmatpush1.msra.mxu0 0.0
    %2072 = vmatprep.subr.mxu0 0.0
    %2073 = vmatpush1.msra.mxu0 0.0
    %2074 = vmatprep.subr.mxu0 0.0
    %2075 = vmatpush1.msra.mxu0 0.0
    %2076 = vmatprep.subr.mxu0 0.0
    %2077 = vmatpush1.msra.mxu0 0.0
    %2078 = vmatprep.subr.mxu0 0.0
    %2079 = vmatpush1.msra.mxu0 0.0
    %2080 = vmatprep.subr.mxu0 0.0
    %2081 = vmatpush1.msra.mxu0 0.0
    %2082 = vmatprep.subr.mxu0 0.0
    %2083 = vmatpush1.msra.mxu0 0.0
    %2084 = vmatprep.subr.mxu0 0.0
    %2085 = vmatpush1.msra.mxu0 0.0
    %2086 = vmatprep.subr.mxu0 0.0
    %2087 = vmatpush1.msra.mxu0 0.0
    %2088 = vmatprep.subr.mxu0 0.0
    %2089 = vmatpush1.msra.mxu0 0.0
    %2090 = vmatprep.subr.mxu0 0.0
    %2091 = vmatpush1.msra.mxu0 0.0
    %2092 = vmatprep.subr.mxu0 0.0
    %2093 = vmatpush1.msra.mxu0 0.0
    %2094 = vmatprep.subr.mxu0 0.0
    %2095 = vmatpush1.msra.mxu0 0.0
    %2096 = vmatprep.subr.mxu0 0.0
    %2097 = vmatpush1.msra.mxu0 0.0
    %2098 = vmatprep.subr.mxu0 0.0
    %2099 = vmatpush1.msra.mxu0 0.0
    %2100 = vmatprep.subr.mxu0 0.0
    %2101 = vmatpush1.msra.mxu0 0.0
    %2102 = vmatprep.subr.mxu0 0.0
    %2103 = vmatpush1.msra.mxu0 0.0
    %2104 = vmatprep.subr.mxu0 0.0
    %2105 = vmatpush1.msra.mxu0 0.0
    %2106 = vmatprep.subr.mxu0 0.0
    %2107 = vmatpush1.msra.mxu0 0.0
    %2108 = vmatprep.subr.mxu0 0.0
    %2109 = vmatpush1.msra.mxu0 0.0
    %2110 = vmatprep.subr.mxu0 0.0
    %2111 = vmatpush1.msra.mxu0 0.0
    %2112 = vmatprep.mubr.f32.mxu0 0.0
    %2113 = vmatmul.mubr.f32.gmra.mrb[0].mxu0 %v2046
    %v2114 = vpop.f32.mrb[0].mxu0
    %v2115 = vadd.f32 0.0, %v2114
    %v2116 = vpop.f32.mrb[0].mxu0
    %2117 = vdwg.mxu0
    %v2118 = vadd.f32 %v1691, %v2115
    %v2119 = vmul.f32 %v2118, %v1697
    %v2120 = vtanh.pop %v2119
    %v2121 = vmul.f32 %v2120, 0.5
    %v2122 = vadd.f32 %v2121, 0.5
    %v2123 = vsel %vm1696, %v2120, %v2122
    %v2125 = vrot.slane %v2033, 6
    %v2127 = vmul.f32 %v2123, %v2125
    %2129 = vrot.lane.b32.xlu0 %v2123, 64
    %v2130 = vpop.permute.xlu0 %2129
    %v2132 = vmul.f32 %v2123, %v2130
    %2134 = vrot.lane.b32.xlu0 %v2132, 32
    %v2135 = vpop.permute.xlu0 %2134
    %v2137 = vadd.f32 %v2127, %v2135
    %v2138 = vtanh.pop %v2137
    %2140 = vrot.lane.b32.xlu0 %v2138, 64
    %v2141 = vpop.permute.xlu0 %2140
    %v2143 = vmul.f32 %v2123, %v2141
    %v2144 = vmax.f32 %v2043, %v2143
    %2146 = vrot.lane.b32.xlu0 %v2143, 32
    %v2147 = vpop.permute.xlu0 %2146
    %v2148 = vsel %vm1724, %v2147, 0
    %2150 = vmatprep.subr.mxu0 0.0
    %2151 = vmatpush1.msra.mxu0 %v1411
    %2152 = vmatprep.subr.mxu0 0.0
    %2153 = vmatpush1.msra.mxu0 %v1412
    %2154 = vmatprep.subr.mxu0 0.0
    %2155 = vmatpush1.msra.mxu0 %v1413
    %2156 = vmatprep.subr.mxu0 0.0
    %2157 = vmatpush1.msra.mxu0 %v1414
    %2158 = vmatprep.subr.mxu0 0.0
    %2159 = vmatpush1.msra.mxu0 0.0
    %2160 = vmatprep.subr.mxu0 0.0
    %2161 = vmatpush1.msra.mxu0 0.0
    %2162 = vmatprep.subr.mxu0 0.0
    %2163 = vmatpush1.msra.mxu0 0.0
    %2164 = vmatprep.subr.mxu0 0.0
    %2165 = vmatpush1.msra.mxu0 0.0
    %2166 = vmatprep.subr.mxu0 0.0
    %2167 = vmatpush1.msra.mxu0 0.0
    %2168 = vmatprep.subr.mxu0 0.0
    %2169 = vmatpush1.msra.mxu0 0.0
    %2170 = vmatprep.subr.mxu0 0.0
    %2171 = vmatpush1.msra.mxu0 0.0
    %2172 = vmatprep.subr.mxu0 0.0
    %2173 = vmatpush1.msra.mxu0 0.0
    %2174 = vmatprep.subr.mxu0 0.0
    %2175 = vmatpush1.msra.mxu0 0.0
    %2176 = vmatprep.subr.mxu0 0.0
    %2177 = vmatpush1.msra.mxu0 0.0
    %2178 = vmatprep.subr.mxu0 0.0
    %2179 = vmatpush1.msra.mxu0 0.0
    %2180 = vmatprep.subr.mxu0 0.0
    %2181 = vmatpush1.msra.mxu0 0.0
    %2182 = vmatprep.subr.mxu0 0.0
    %2183 = vmatpush1.msra.mxu0 0.0
    %2184 = vmatprep.subr.mxu0 0.0
    %2185 = vmatpush1.msra.mxu0 0.0
    %2186 = vmatprep.subr.mxu0 0.0
    %2187 = vmatpush1.msra.mxu0 0.0
    %2188 = vmatprep.subr.mxu0 0.0
    %2189 = vmatpush1.msra.mxu0 0.0
    %2190 = vmatprep.subr.mxu0 0.0
    %2191 = vmatpush1.msra.mxu0 0.0
    %2192 = vmatprep.subr.mxu0 0.0
    %2193 = vmatpush1.msra.mxu0 0.0
    %2194 = vmatprep.subr.mxu0 0.0
    %2195 = vmatpush1.msra.mxu0 0.0
    %2196 = vmatprep.subr.mxu0 0.0
    %2197 = vmatpush1.msra.mxu0 0.0
    %2198 = vmatprep.subr.mxu0 0.0
    %2199 = vmatpush1.msra.mxu0 0.0
    %2200 = vmatprep.subr.mxu0 0.0
    %2201 = vmatpush1.msra.mxu0 0.0
    %2202 = vmatprep.subr.mxu0 0.0
    %2203 = vmatpush1.msra.mxu0 0.0
    %2204 = vmatprep.subr.mxu0 0.0
    %2205 = vmatpush1.msra.mxu0 0.0
    %2206 = vmatprep.subr.mxu0 0.0
    %2207 = vmatpush1.msra.mxu0 0.0
    %2208 = vmatprep.subr.mxu0 0.0
    %2209 = vmatpush1.msra.mxu0 0.0
    %2210 = vmatprep.subr.mxu0 0.0
    %2211 = vmatpush1.msra.mxu0 0.0
    %2212 = vmatprep.subr.mxu0 0.0
    %2213 = vmatpush1.msra.mxu0 0.0
    %2214 = vmatprep.mubr.f32.mxu0 0.0
    %2215 = vmatmul.mubr.f32.gmra.mrb[0].mxu0 %v2148
    %v2216 = vpop.f32.mrb[0].mxu0
    %v2217 = vadd.f32 0.0, %v2216
    %v2218 = vpop.f32.mrb[0].mxu0
    %2219 = vdwg.mxu0
    %v2221 = vrot.slane %v2217, 6
    %v2223 = vadd.f32 %v1691, %v2221
    %v2224 = vmul.f32 %v2223, %v1697
    %v2225 = vtanh.pop %v2224
    %v2226 = vmul.f32 %v2225, 0.5
    %v2227 = vadd.f32 %v2226, 0.5
    %v2228 = vsel %vm1696, %v2225, %v2227
    %v2230 = vrot.slane %v2137, 6
    %v2232 = vmul.f32 %v2228, %v2230
    %2234 = vrot.lane.b32.xlu0 %v2228, 64
    %v2235 = vpop.permute.xlu0 %2234
    %v2237 = vmul.f32 %v2228, %v2235
    %2239 = vrot.lane.b32.xlu0 %v2237, 32
    %v2240 = vpop.permute.xlu0 %2239
    %v2242 = vadd.f32 %v2232, %v2240
    %v2243 = vtanh.pop %v2242
    %2245 = vrot.lane.b32.xlu0 %v2243, 64
    %v2246 = vpop.permute.xlu0 %2245
    %v2248 = vmul.f32 %v2228, %v2246
    %v2250 = vrot.slane %v2248, 2
    %v2252 = vmax.f32 %v2144, %v2250
    %2253 = vrot.lane.b32.xlu0 %v2250, 32
    %v2254 = vpop.permute.xlu0 %2253
    %v2255 = vsel %vm1724, %v2254, 0
    %2257 = vmatprep.subr.mxu0 0.0
    %2258 = vmatpush1.msra.mxu0 %v1411
    %2259 = vmatprep.subr.mxu0 0.0
    %2260 = vmatpush1.msra.mxu0 %v1412
    %2261 = vmatprep.subr.mxu0 0.0
    %2262 = vmatpush1.msra.mxu0 %v1413
    %2263 = vmatprep.subr.mxu0 0.0
    %2264 = vmatpush1.msra.mxu0 %v1414
    %2265 = vmatprep.subr.mxu0 0.0
    %2266 = vmatpush1.msra.mxu0 0.0
    %2267 = vmatprep.subr.mxu0 0.0
    %2268 = vmatpush1.msra.mxu0 0.0
    %2269 = vmatprep.subr.mxu0 0.0
    %2270 = vmatpush1.msra.mxu0 0.0
    %2271 = vmatprep.subr.mxu0 0.0
    %2272 = vmatpush1.msra.mxu0 0.0
    %2273 = vmatprep.subr.mxu0 0.0
    %2274 = vmatpush1.msra.mxu0 0.0
    %2275 = vmatprep.subr.mxu0 0.0
    %2276 = vmatpush1.msra.mxu0 0.0
    %2277 = vmatprep.subr.mxu0 0.0
    %2278 = vmatpush1.msra.mxu0 0.0
    %2279 = vmatprep.subr.mxu0 0.0
    %2280 = vmatpush1.msra.mxu0 0.0
    %2281 = vmatprep.subr.mxu0 0.0
    %2282 = vmatpush1.msra.mxu0 0.0
    %2283 = vmatprep.subr.mxu0 0.0
    %2284 = vmatpush1.msra.mxu0 0.0
    %2285 = vmatprep.subr.mxu0 0.0
    %2286 = vmatpush1.msra.mxu0 0.0
    %2287 = vmatprep.subr.mxu0 0.0
    %2288 = vmatpush1.msra.mxu0 0.0
    %2289 = vmatprep.subr.mxu0 0.0
    %2290 = vmatpush1.msra.mxu0 0.0
    %2291 = vmatprep.subr.mxu0 0.0
    %2292 = vmatpush1.msra.mxu0 0.0
    %2293 = vmatprep.subr.mxu0 0.0
    %2294 = vmatpush1.msra.mxu0 0.0
    %2295 = vmatprep.subr.mxu0 0.0
    %2296 = vmatpush1.msra.mxu0 0.0
    %2297 = vmatprep.subr.mxu0 0.0
    %2298 = vmatpush1.msra.mxu0 0.0
    %2299 = vmatprep.subr.mxu0 0.0
    %2300 = vmatpush1.msra.mxu0 0.0
    %2301 = vmatprep.subr.mxu0 0.0
    %2302 = vmatpush1.msra.mxu0 0.0
    %2303 = vmatprep.subr.mxu0 0.0
    %2304 = vmatpush1.msra.mxu0 0.0
    %2305 = vmatprep.subr.mxu0 0.0
    %2306 = vmatpush1.msra.mxu0 0.0
    %2307 = vmatprep.subr.mxu0 0.0
    %2308 = vmatpush1.msra.mxu0 0.0
    %2309 = vmatprep.subr.mxu0 0.0
    %2310 = vmatpush1.msra.mxu0 0.0
    %2311 = vmatprep.subr.mxu0 0.0
    %2312 = vmatpush1.msra.mxu0 0.0
    %2313 = vmatprep.subr.mxu0 0.0
    %2314 = vmatpush1.msra.mxu0 0.0
    %2315 = vmatprep.subr.mxu0 0.0
    %2316 = vmatpush1.msra.mxu0 0.0
    %2317 = vmatprep.subr.mxu0 0.0
    %2318 = vmatpush1.msra.mxu0 0.0
    %2319 = vmatprep.subr.mxu0 0.0
    %2320 = vmatpush1.msra.mxu0 0.0
    %2321 = vmatprep.mubr.f32.mxu0 0.0
    %2322 = vmatmul.mubr.f32.gmra.mrb[0].mxu0 %v2255
    %v2323 = vpop.f32.mrb[0].mxu0
    %v2324 = vadd.f32 0.0, %v2323
    %v2325 = vpop.f32.mrb[0].mxu0
    %2326 = vdwg.mxu0
    %v2328 = vrot.slane %v2324, 4
    %v2330 = vadd.f32 %v1691, %v2328
    %v2331 = vmul.f32 %v2330, %v1697
    %v2332 = vtanh.pop %v2331
    %v2333 = vmul.f32 %v2332, 0.5
    %v2334 = vadd.f32 %v2333, 0.5
    %v2335 = vsel %vm1696, %v2332, %v2334
    %v2337 = vrot.slane %v2242, 6
    %v2339 = vmul.f32 %v2335, %v2337
    %2341 = vrot.lane.b32.xlu0 %v2335, 64
    %v2342 = vpop.permute.xlu0 %2341
    %v2344 = vmul.f32 %v2335, %v2342
    %2346 = vrot.lane.b32.xlu0 %v2344, 32
    %v2347 = vpop.permute.xlu0 %2346
    %v2349 = vadd.f32 %v2339, %v2347
    %v2350 = vtanh.pop %v2349
    %2352 = vrot.lane.b32.xlu0 %v2350, 64
    %v2353 = vpop.permute.xlu0 %2352
    %v2355 = vmul.f32 %v2335, %v2353
    %v2357 = vrot.slane %v2355, 4
    %v2359 = vmax.f32 %v2252, %v2357
    %2360 = vrot.lane.b32.xlu0 %v2357, 32
    %v2361 = vpop.permute.xlu0 %2360
    %v2362 = vsel %vm1724, %v2361, 0
    %2364 = vmatprep.subr.mxu0 0.0
    %2365 = vmatpush1.msra.mxu0 %v1411
    %2366 = vmatprep.subr.mxu0 0.0
    %2367 = vmatpush1.msra.mxu0 %v1412
    %2368 = vmatprep.subr.mxu0 0.0
    %2369 = vmatpush1.msra.mxu0 %v1413
    %2370 = vmatprep.subr.mxu0 0.0
    %2371 = vmatpush1.msra.mxu0 %v1414
    %2372 = vmatprep.subr.mxu0 0.0
    %2373 = vmatpush1.msra.mxu0 0.0
    %2374 = vmatprep.subr.mxu0 0.0
    %2375 = vmatpush1.msra.mxu0 0.0
    %2376 = vmatprep.subr.mxu0 0.0
    %2377 = vmatpush1.msra.mxu0 0.0
    %2378 = vmatprep.subr.mxu0 0.0
    %2379 = vmatpush1.msra.mxu0 0.0
    %2380 = vmatprep.subr.mxu0 0.0
    %2381 = vmatpush1.msra.mxu0 0.0
    %2382 = vmatprep.subr.mxu0 0.0
    %2383 = vmatpush1.msra.mxu0 0.0
    %2384 = vmatprep.subr.mxu0 0.0
    %2385 = vmatpush1.msra.mxu0 0.0
    %2386 = vmatprep.subr.mxu0 0.0
    %2387 = vmatpush1.msra.mxu0 0.0
    %2388 = vmatprep.subr.mxu0 0.0
    %2389 = vmatpush1.msra.mxu0 0.0
    %2390 = vmatprep.subr.mxu0 0.0
    %2391 = vmatpush1.msra.mxu0 0.0
    %2392 = vmatprep.subr.mxu0 0.0
    %2393 = vmatpush1.msra.mxu0 0.0
    %2394 = vmatprep.subr.mxu0 0.0
    %2395 = vmatpush1.msra.mxu0 0.0
    %2396 = vmatprep.subr.mxu0 0.0
    %2397 = vmatpush1.msra.mxu0 0.0
    %2398 = vmatprep.subr.mxu0 0.0
    %2399 = vmatpush1.msra.mxu0 0.0
    %2400 = vmatprep.subr.mxu0 0.0
    %2401 = vmatpush1.msra.mxu0 0.0
    %2402 = vmatprep.subr.mxu0 0.0
    %2403 = vmatpush1.msra.mxu0 0.0
    %2404 = vmatprep.subr.mxu0 0.0
    %2405 = vmatpush1.msra.mxu0 0.0
    %2406 = vmatprep.subr.mxu0 0.0
    %2407 = vmatpush1.msra.mxu0 0.0
    %2408 = vmatprep.subr.mxu0 0.0
    %2409 = vmatpush1.msra.mxu0 0.0
    %2410 = vmatprep.subr.mxu0 0.0
    %2411 = vmatpush1.msra.mxu0 0.0
    %2412 = vmatprep.subr.mxu0 0.0
    %2413 = vmatpush1.msra.mxu0 0.0
    %2414 = vmatprep.subr.mxu0 0.0
    %2415 = vmatpush1.msra.mxu0 0.0
    %2416 = vmatprep.subr.mxu0 0.0
    %2417 = vmatpush1.msra.mxu0 0.0
    %2418 = vmatprep.subr.mxu0 0.0
    %2419 = vmatpush1.msra.mxu0 0.0
    %2420 = vmatprep.subr.mxu0 0.0
    %2421 = vmatpush1.msra.mxu0 0.0
    %2422 = vmatprep.subr.mxu0 0.0
    %2423 = vmatpush1.msra.mxu0 0.0
    %2424 = vmatprep.subr.mxu0 0.0
    %2425 = vmatpush1.msra.mxu0 0.0
    %2426 = vmatprep.subr.mxu0 0.0
    %2427 = vmatpush1.msra.mxu0 0.0
    %2428 = vmatprep.mubr.f32.mxu0 0.0
    %2429 = vmatmul.mubr.f32.gmra.mrb[0].mxu0 %v2362
    %v2430 = vpop.f32.mrb[0].mxu0
    %v2431 = vadd.f32 0.0, %v2430
    %v2432 = vpop.f32.mrb[0].mxu0
    %2433 = vdwg.mxu0
    %v2435 = vrot.slane %v2431, 2
    %v2437 = vadd.f32 %v1691, %v2435
    %v2438 = vmul.f32 %v2437, %v1697
    %v2439 = vtanh.pop %v2438
    %v2440 = vmul.f32 %v2439, 0.5
    %v2441 = vadd.f32 %v2440, 0.5
    %v2442 = vsel %vm1696, %v2439, %v2441
    %v2444 = vrot.slane %v2349, 6
    %v2446 = vmul.f32 %v2442, %v2444
    %2448 = vrot.lane.b32.xlu0 %v2442, 64
    %v2449 = vpop.permute.xlu0 %2448
    %v2451 = vmul.f32 %v2442, %v2449
    %2453 = vrot.lane.b32.xlu0 %v2451, 32
    %v2454 = vpop.permute.xlu0 %2453
    %v2456 = vadd.f32 %v2446, %v2454
    %v2457 = vtanh.pop %v2456
    %2459 = vrot.lane.b32.xlu0 %v2457, 64
    %v2460 = vpop.permute.xlu0 %2459
    %v2462 = vmul.f32 %v2442, %v2460
    %v2464 = vrot.slane %v2462, 6
    %v2466 = vmax.f32 %v2359, %v2464
    %v2467 = vld [vmem:[#allocation5 + $0xa0] sm:$0xff]
    %v2468 = vld [vmem:[#allocation5 + $0xa8] sm:$0xff]
    %v2469 = vld [vmem:[#allocation5 + $0xb0] sm:$0xff]
    %v2470 = vld [vmem:[#allocation5 + $0xb8] sm:$0xff]
    %v2471 = vld [vmem:[#allocation5 + $0xc7] sm:$0x1]
    %v2472 = vlaneseq
    %v2473 = vshrl.u32 %v2472, 7
    %v2474 = vsub.s32 0, %v2473
    %v2475 = vrot.slane %v2471, %v2474
    %2477 = vrot.lane.b32.xlu0 %v2466, 32
    %v2478 = vpop.permute.xlu0 %2477
    %v2479 = vsel %vm1724, %v2478, 0
    %2481 = vmatprep.subr.mxu0 0.0
    %2482 = vmatpush1.msra.mxu0 %v2467
    %2483 = vmatprep.subr.mxu0 0.0
    %2484 = vmatpush1.msra.mxu0 %v2468
    %2485 = vmatprep.subr.mxu0 0.0
    %2486 = vmatpush1.msra.mxu0 %v2469
    %2487 = vmatprep.subr.mxu0 0.0
    %2488 = vmatpush1.msra.mxu0 %v2470
    %2489 = vmatprep.subr.mxu0 0.0
    %2490 = vmatpush1.msra.mxu0 0.0
    %2491 = vmatprep.subr.mxu0 0.0
    %2492 = vmatpush1.msra.mxu0 0.0
    %2493 = vmatprep.subr.mxu0 0.0
    %2494 = vmatpush1.msra.mxu0 0.0
    %2495 = vmatprep.subr.mxu0 0.0
    %2496 = vmatpush1.msra.mxu0 0.0
    %2497 = vmatprep.subr.mxu0 0.0
    %2498 = vmatpush1.msra.mxu0 0.0
    %2499 = vmatprep.subr.mxu0 0.0
    %2500 = vmatpush1.msra.mxu0 0.0
    %2501 = vmatprep.subr.mxu0 0.0
    %2502 = vmatpush1.msra.mxu0 0.0
    %2503 = vmatprep.subr.mxu0 0.0
    %2504 = vmatpush1.msra.mxu0 0.0
    %2505 = vmatprep.subr.mxu0 0.0
    %2506 = vmatpush1.msra.mxu0 0.0
    %2507 = vmatprep.subr.mxu0 0.0
    %2508 = vmatpush1.msra.mxu0 0.0
    %2509 = vmatprep.subr.mxu0 0.0
    %2510 = vmatpush1.msra.mxu0 0.0
    %2511 = vmatprep.subr.mxu0 0.0
    %2512 = vmatpush1.msra.mxu0 0.0
    %2513 = vmatprep.subr.mxu0 0.0
    %2514 = vmatpush1.msra.mxu0 0.0
    %2515 = vmatprep.subr.mxu0 0.0
    %2516 = vmatpush1.msra.mxu0 0.0
    %2517 = vmatprep.subr.mxu0 0.0
    %2518 = vmatpush1.msra.mxu0 0.0
    %2519 = vmatprep.subr.mxu0 0.0
    %2520 = vmatpush1.msra.mxu0 0.0
    %2521 = vmatprep.subr.mxu0 0.0
    %2522 = vmatpush1.msra.mxu0 0.0
    %2523 = vmatprep.subr.mxu0 0.0
    %2524 = vmatpush1.msra.mxu0 0.0
    %2525 = vmatprep.subr.mxu0 0.0
    %2526 = vmatpush1.msra.mxu0 0.0
    %2527 = vmatprep.subr.mxu0 0.0
    %2528 = vmatpush1.msra.mxu0 0.0
    %2529 = vmatprep.subr.mxu0 0.0
    %2530 = vmatpush1.msra.mxu0 0.0
    %2531 = vmatprep.subr.mxu0 0.0
    %2532 = vmatpush1.msra.mxu0 0.0
    %2533 = vmatprep.subr.mxu0 0.0
    %2534 = vmatpush1.msra.mxu0 0.0
    %2535 = vmatprep.subr.mxu0 0.0
    %2536 = vmatpush1.msra.mxu0 0.0
    %2537 = vmatprep.subr.mxu0 0.0
    %2538 = vmatpush1.msra.mxu0 0.0
    %2539 = vmatprep.subr.mxu0 0.0
    %2540 = vmatpush1.msra.mxu0 0.0
    %2541 = vmatprep.subr.mxu0 0.0
    %2542 = vmatpush1.msra.mxu0 0.0
    %2543 = vmatprep.subr.mxu0 0.0
    %2544 = vmatpush1.msra.mxu0 0.0
    %2545 = vmatprep.mubr.f32.mxu0 0.0
    %2546 = vmatmul.mubr.f32.gmra.mrb[0].mxu0 %v2479
    %v2547 = vpop.f32.mrb[0].mxu0
    %v2548 = vadd.f32 %v2475, %v2547
    %v2549 = vpop.f32.mrb[0].mxu0
    %2550 = vdwg.mxu0
    %v2551 = vmax.f32 %v2548, 0.0
    %v2552 = vld [vmem:[#allocation5 + $0x30] sm:$0xff]
    %v2553 = vld [vmem:[#allocation5 + $0x38] sm:$0xff]
    %v2554 = vld [vmem:[#allocation5 + $0x40] sm:$0xff]
    %v2555 = vld [vmem:[#allocation5 + $0x48] sm:$0xff]
    %v2556 = vld [vmem:[#allocation5 + $0xc1] sm:$0x1]
    %v2557 = vlaneseq
    %v2558 = vshrl.u32 %v2557, 7
    %v2559 = vsub.s32 0, %v2558
    %v2560 = vrot.slane %v2556, %v2559
    %v2562 = vsel %vm1724, %v2551, 0
    %2564 = vmatprep.subr.mxu0 0.0
    %2565 = vmatpush1.msra.mxu0 %v2552
    %2566 = vmatprep.subr.mxu0 0.0
    %2567 = vmatpush1.msra.mxu0 %v2553
    %2568 = vmatprep.subr.mxu0 0.0
    %2569 = vmatpush1.msra.mxu0 %v2554
    %2570 = vmatprep.subr.mxu0 0.0
    %2571 = vmatpush1.msra.mxu0 %v2555
    %2572 = vmatprep.subr.mxu0 0.0
    %2573 = vmatpush1.msra.mxu0 0.0
    %2574 = vmatprep.subr.mxu0 0.0
    %2575 = vmatpush1.msra.mxu0 0.0
    %2576 = vmatprep.subr.mxu0 0.0
    %2577 = vmatpush1.msra.mxu0 0.0
    %2578 = vmatprep.subr.mxu0 0.0
    %2579 = vmatpush1.msra.mxu0 0.0
    %2580 = vmatprep.subr.mxu0 0.0
    %2581 = vmatpush1.msra.mxu0 0.0
    %2582 = vmatprep.subr.mxu0 0.0
    %2583 = vmatpush1.msra.mxu0 0.0
    %2584 = vmatprep.subr.mxu0 0.0
    %2585 = vmatpush1.msra.mxu0 0.0
    %2586 = vmatprep.subr.mxu0 0.0
    %2587 = vmatpush1.msra.mxu0 0.0
    %2588 = vmatprep.subr.mxu0 0.0
    %2589 = vmatpush1.msra.mxu0 0.0
    %2590 = vmatprep.subr.mxu0 0.0
    %2591 = vmatpush1.msra.mxu0 0.0
    %2592 = vmatprep.subr.mxu0 0.0
    %2593 = vmatpush1.msra.mxu0 0.0
    %2594 = vmatprep.subr.mxu0 0.0
    %2595 = vmatpush1.msra.mxu0 0.0
    %2596 = vmatprep.subr.mxu0 0.0
    %2597 = vmatpush1.msra.mxu0 0.0
    %2598 = vmatprep.subr.mxu0 0.0
    %2599 = vmatpush1.msra.mxu0 0.0
    %2600 = vmatprep.subr.mxu0 0.0
    %2601 = vmatpush1.msra.mxu0 0.0
    %2602 = vmatprep.subr.mxu0 0.0
    %2603 = vmatpush1.msra.mxu0 0.0
    %2604 = vmatprep.subr.mxu0 0.0
    %2605 = vmatpush1.msra.mxu0 0.0
    %2606 = vmatprep.subr.mxu0 0.0
    %2607 = vmatpush1.msra.mxu0 0.0
    %2608 = vmatprep.subr.mxu0 0.0
    %2609 = vmatpush1.msra.mxu0 0.0
    %2610 = vmatprep.subr.mxu0 0.0
    %2611 = vmatpush1.msra.mxu0 0.0
    %2612 = vmatprep.subr.mxu0 0.0
    %2613 = vmatpush1.msra.mxu0 0.0
    %2614 = vmatprep.subr.mxu0 0.0
    %2615 = vmatpush1.msra.mxu0 0.0
    %2616 = vmatprep.subr.mxu0 0.0
    %2617 = vmatpush1.msra.mxu0 0.0
    %2618 = vmatprep.subr.mxu0 0.0
    %2619 = vmatpush1.msra.mxu0 0.0
    %2620 = vmatprep.subr.mxu0 0.0
    %2621 = vmatpush1.msra.mxu0 0.0
    %2622 = vmatprep.subr.mxu0 0.0
    %2623 = vmatpush1.msra.mxu0 0.0
    %2624 = vmatprep.subr.mxu0 0.0
    %2625 = vmatpush1.msra.mxu0 0.0
    %2626 = vmatprep.subr.mxu0 0.0
    %2627 = vmatpush1.msra.mxu0 0.0
    %2628 = vmatprep.mubr.f32.mxu0 0.0
    %2629 = vmatmul.mubr.f32.gmra.mrb[0].mxu0 %v2562
    %v2630 = vpop.f32.mrb[0].mxu0
    %v2631 = vadd.f32 %v2560, %v2630
    %v2632 = vpop.f32.mrb[0].mxu0
    %2633 = vdwg.mxu0
    %2634 = vst [vmem:[#allocation7] sm:$0x3] %v2631
    // Predicated region
    $region18: #{tpu_custom_call.1} parent=1 // pred_check
      _
    $region19: #{tpu_custom_call.1} parent=1 // pred_check_branch
      %2636 = sbr.rel (0) target = $region21
    $region20: #{tpu_custom_call.1} parent=1 // pred_region
      %s2638 = ssub.s32 32, 32
      %2639 = vsyncadd [#allocation4], %s2638
      %s2641 = sshll.u32 [#allocation7], 4
      %s2642 = int_to_ptr.vmem [resolvable:$true] %s2641
      %2644 = dma.vmem_to_hbm [thread:$0]  %s2642, 32, %s2, [#allocation4]
    $region21: #{tpu_custom_call.1} parent=1 // pred_fallthru
      _
    // Predicated region
    $region22: #{tpu_custom_call.1} parent=1 // pred_check
      _
    $region23: #{tpu_custom_call.1} parent=1 // pred_check_branch
      %2646 = sbr.rel (0) target = $region25
    $region24: #{tpu_custom_call.1} parent=1 // pred_region
      %2647 = dma.done [#allocation4], 32
    $region25: #{tpu_custom_call.1} parent=1 // pred_fallthru
      _
    %2648 = vsyncpa [#allocation3], 1
    %2649 = vsyncpa [#allocation6], 1
    %2650 = vsyncpa [#allocation4], 1

</llo_original>
